<compile_context>
chip_gen: v7x
topology: tpu7x:2x2x1
jax: 0.10.0
libtpu: 0.0.40
codegen_flags: <defaults>
</compile_context>

<pallas_src>
import jax
import jax.numpy as jnp
from jax.experimental import pallas as pl
from jax.experimental.pallas import tpu as pltpu


# ----------------------------------------------------------------------------
# Parallel "x @ W + b" kernel (hoisted input projection and the FC / vocab proj)
# ----------------------------------------------------------------------------
def linear_kernel(x_ref, w_ref, b_ref, o_ref):
    """o = x @ w + b on one (tm, tn) output tile; K is not tiled (full per block)."""
    o_ref[...] = (
        jnp.dot(x_ref[...], w_ref[...], preferred_element_type=jnp.float32)
        + b_ref[...]
    ).astype(o_ref.dtype)


def _pick_tile(dim, preferred, align):
    """Largest legal tile <= preferred: either the full dim, or a multiple of
    `align` that evenly divides `dim` (avoids ragged edge blocks)."""
    if dim <= preferred:
        return dim
    t = (preferred // align) * align
    while t >= align:
        if dim % t == 0:
            return t
        t -= align
    return dim


def pallas_linear(x, w, b, *, tm=256, tn=512):
    """y[M, N] = x[M, K] @ w[K, N] + b[1, N]; bf16 MXU inputs, f32 accumulate/output."""
    M, K = x.shape
    Kw, N = w.shape
    assert K == Kw and b.shape == (1, N)
    x = x.astype(jnp.bfloat16)   # no-op when the producer already emits bf16
    w = w.astype(jnp.bfloat16)
    b = b.astype(jnp.float32)
    tm = _pick_tile(M, tm, 8)     # sublane-aligned row tile
    tn = _pick_tile(N, tn, 128)   # lane-aligned output tile (bounds w_fc VMEM residency)
    cost = pl.CostEstimate(
        flops=2 * M * K * N,
        transcendentals=0,
        bytes_accessed=M * K * 2 + K * N * 2 + N * 4 + M * N * 4,
    )
    return pl.pallas_call(
        linear_kernel,
        out_shape=jax.ShapeDtypeStruct((M, N), jnp.float32),
        grid_spec=pltpu.PrefetchScalarGridSpec(
            num_scalar_prefetch=0,
            grid=(M // tm, N // tn),
            in_specs=[
                pl.BlockSpec((tm, K), lambda i, j: (i, 0)),   # x row tile
                pl.BlockSpec((K, tn), lambda i, j: (0, j)),   # weight column tile
                pl.BlockSpec((1, tn), lambda i, j: (0, j)),   # bias column tile
            ],
            out_specs=pl.BlockSpec((tm, tn), lambda i, j: (i, j)),
        ),
        compiler_params=pltpu.CompilerParams(
            dimension_semantics=("parallel", "parallel"),  # shards across v7x's 2 TCs
        ),
        cost_estimate=cost,
    )(x, w, b)


# ----------------------------------------------------------------------------
# Sequential recurrence kernel: only h @ W_hh + tanh sits on the serial chain
# ----------------------------------------------------------------------------
def rnn_recurrence_kernel(xp_ref, h0_ref, whh_ref, hs_ref, hN_ref):
    """xp_ref : (TB, B, H) f32  precomputed x @ W_ih + (b_ih + b_hh) for this time block
       h0_ref : (B, H)     f32  initial hidden state
       whh_ref: (H, H)     bf16 hidden->hidden weight (transposed vs. PyTorch)
       hs_ref : (TB, B, H) bf16 all hidden states for this time block (output)
       hN_ref : (B, H)     f32  final hidden state; constant block index => VMEM-resident
                                across the grid, so it also serves as the carry buffer.
    """
    @pl.when(pl.program_id(0) == 0)
    def _():
        hN_ref[...] = h0_ref[...]

    tb = xp_ref.shape[0]
    w_hh = whh_ref[...]          # hoist the weight load out of the unrolled loop

    def step(s, h_prev):
        h_new = jnp.tanh(
            xp_ref[s]
            + jnp.dot(h_prev.astype(w_hh.dtype), w_hh,
                      preferred_element_type=jnp.float32)
        )
        hs_ref[s] = h_new.astype(hs_ref.dtype)
        return h_new             # carried in vregs across the unrolled iterations

    hN_ref[...] = jax.lax.fori_loop(0, tb, step, hN_ref[...], unroll=True)


def _pick_time_block(T, B, H, preferred=32, vmem_budget=8 << 20):
    """Largest divisor of T that is <= preferred and keeps the double-buffered
    xp (f32) + hs (bf16) blocks within a conservative VMEM budget."""
    per_step_bytes = B * H * (4 + 2) * 2   # (xp f32 + hs bf16), x2 double buffering
    cap = max(1, vmem_budget // per_step_bytes)
    tb = min(preferred, T, cap)
    while T % tb != 0:
        tb -= 1
    return tb


def pallas_rnn_recurrence(xp, h0, w_hh, *, tb_target=32):
    """xp: [T, B, H] f32, h0: [B, H], w_hh: [H, H].
    Returns (hidden states [T, B, H] bf16, final hidden [B, H] f32)."""
    T, B, H = xp.shape
    tb = _pick_time_block(T, B, H, tb_target)
    cost = pl.CostEstimate(
        flops=2 * T * B * H * H,
        transcendentals=T * B * H,
        bytes_accessed=T * B * H * 4 + T * B * H * 2 + H * H * 2 + 2 * B * H * 4,
    )
    return pl.pallas_call(
        rnn_recurrence_kernel,
        out_shape=(
            jax.ShapeDtypeStruct((T, B, H), jnp.bfloat16),   # all hidden states
            jax.ShapeDtypeStruct((B, H), jnp.float32),       # final hidden state
        ),
        grid_spec=pltpu.PrefetchScalarGridSpec(
            num_scalar_prefetch=0,
            grid=(T // tb,),
            in_specs=[
                pl.BlockSpec((tb, B, H), lambda i: (i, 0, 0)),   # xp time block
                pl.BlockSpec((B, H), lambda i: (0, 0)),          # h0 (fetched once)
                pl.BlockSpec((H, H), lambda i: (0, 0)),          # w_hh (fetched once)
            ],
            out_specs=[
                pl.BlockSpec((tb, B, H), lambda i: (i, 0, 0)),   # hs time block
                pl.BlockSpec((B, H), lambda i: (0, 0)),          # final hidden (carry)
            ],
        ),
        compiler_params=pltpu.CompilerParams(
            dimension_semantics=("arbitrary",),   # true recurrence: sequential over time
        ),
        cost_estimate=cost,
    )(xp, h0.astype(jnp.float32), w_hh.astype(jnp.bfloat16))


# ----------------------------------------------------------------------------
# Model wrapper (Embedding -> RNN -> Linear), batch_first like the PyTorch module
# ----------------------------------------------------------------------------
def rnn_model_forward(tokens, params, hidden=None):
    """tokens: [B, T] int32. Returns (logits [B, T, V] f32, hidden [1, B, H] f32)."""
    emb = params["embedding"]        # [V, E] bf16
    w_ih = params["w_ih"]            # [E, H] bf16 (transpose of PyTorch weight_ih_l0)
    w_hh = params["w_hh"]            # [H, H] bf16 (transpose of weight_hh_l0)
    b = params["b"]                  # [1, H] f32  (b_ih + b_hh combined)
    w_fc = params["w_fc"]            # [H, V] bf16 (transpose of fc.weight)
    b_fc = params["b_fc"]            # [1, V] f32

    B, T = tokens.shape
    V, E = emb.shape
    H = w_hh.shape[0]

    # Embedding gather, directly time-major (XLA glue; data-dependent gather).
    # TODO(synk): a Pallas gather (scalar-prefetch + pl.Element) would be one row
    # per grid step here -- per-step overhead dwarfs the 256B copy, so keep jnp.take.
    x_tm = jnp.take(emb, tokens.T, axis=0)                                  # [T, B, E] bf16

    # Hoisted input projection + combined bias: one big parallel matmul.
    xp = pallas_linear(x_tm.reshape(T * B, E), w_ih, b).reshape(T, B, H)    # f32

    if hidden is None:
        h0 = jnp.zeros((B, H), dtype=jnp.float32)
    else:
        h0 = hidden.reshape(B, H).astype(jnp.float32)

    # Sequential recurrence: hs in bf16 (feeds the FC), final hidden in f32.
    hs_tm, h_final = pallas_rnn_recurrence(xp, h0, w_hh)                    # [T,B,H], [B,H]

    # Hoisted FC over the vocab; transpose the small H-wide bf16 hidden (not the
    # V-wide logits) so the output is batch-first directly.
    hs_bt = jnp.transpose(hs_tm, (1, 0, 2)).reshape(B * T, H)
    logits = pallas_linear(hs_bt, w_fc, b_fc).reshape(B, T, V)

    return logits, h_final[None, :, :]


def init_params(key, vocab_size, embedding_dim, hidden_dim):
    """Deterministic init mirroring PyTorch shapes (weights stored transposed, bf16)."""
    k = jax.random.split(key, 7)
    bound = 1.0 / jnp.sqrt(hidden_dim)
    u = lambda kk, shape: jax.random.uniform(kk, shape, jnp.float32, -bound, bound)
    return {
        "embedding": jax.random.normal(k[0], (vocab_size, embedding_dim),
                                       jnp.float32).astype(jnp.bfloat16),
        "w_ih": u(k[1], (embedding_dim, hidden_dim)).astype(jnp.bfloat16),
        "w_hh": u(k[2], (hidden_dim, hidden_dim)).astype(jnp.bfloat16),
        "b": (u(k[3], (1, hidden_dim)) + u(k[4], (1, hidden_dim))).astype(jnp.float32),
        "w_fc": u(k[5], (hidden_dim, vocab_size)).astype(jnp.bfloat16),
        "b_fc": u(k[6], (1, vocab_size)).astype(jnp.float32),
    }


# Pure-JAX reference with the same numeric recipe (bf16 MXU inputs, f32 accumulate).
def ref_forward(tokens, params, hidden=None):
    emb, w_ih, w_hh = params["embedding"], params["w_ih"], params["w_hh"]
    b, w_fc, b_fc = params["b"], params["w_fc"], params["b_fc"]
    B, T = tokens.shape
    V, E = emb.shape
    H = w_hh.shape[0]
    x_tm = jnp.take(emb, tokens.T, axis=0)                                   # [T, B, E]
    xp = (jnp.dot(x_tm.reshape(T * B, E), w_ih,
                  preferred_element_type=jnp.float32) + b).reshape(T, B, H)
    h0 = (jnp.zeros((B, H), jnp.float32) if hidden is None
          else hidden.reshape(B, H).astype(jnp.float32))

    def step(h, xp_t):
        h_new = jnp.tanh(xp_t + jnp.dot(h.astype(jnp.bfloat16), w_hh,
                                        preferred_element_type=jnp.float32))
        return h_new, h_new.astype(jnp.bfloat16)

    h_last, hs = jax.lax.scan(step, h0, xp)
    hs_bt = jnp.transpose(hs, (1, 0, 2)).reshape(B * T, H)
    logits = (jnp.dot(hs_bt, w_fc, preferred_element_type=jnp.float32)
              + b_fc).reshape(B, T, V)
    return logits, h_last[None, :, :]


if __name__ == "__main__":
    # Small but hardware-aligned shapes: B >= 8 sublanes, E/H/V multiples of 128.
    VOCAB, EMB, HIDDEN = 256, 128, 128
    B, T = 8, 32

    key = jax.random.PRNGKey(0)
    pkey, tkey = jax.random.split(key)
    params = init_params(pkey, VOCAB, EMB, HIDDEN)
    tokens = jax.random.randint(tkey, (B, T), 0, VOCAB, dtype=jnp.int32)

    logits, hidden = jax.jit(rnn_model_forward)(tokens, params)
    jax.block_until_ready((logits, hidden))

    assert logits.shape == (B, T, VOCAB), logits.shape
    assert hidden.shape == (1, B, HIDDEN), hidden.shape

    ref_logits, ref_hidden = jax.jit(ref_forward)(tokens, params)
    jax.block_until_ready((ref_logits, ref_hidden))
    assert jnp.allclose(logits, ref_logits, atol=5e-3, rtol=5e-3), (
        "logits mismatch, max abs diff="
        + str(float(jnp.max(jnp.abs(logits - ref_logits)))))
    assert jnp.allclose(hidden, ref_hidden, atol=5e-3, rtol=5e-3), (
        "hidden mismatch, max abs diff="
        + str(float(jnp.max(jnp.abs(hidden - ref_hidden)))))

    print("KERNEL_OK")
</pallas_src>

<mosaic_0001>
module attributes {stable_mosaic.version = 11 : i64} {
  func.func @linear_kernel(%arg0: i32, %arg1: i32, %arg2: memref<256x128xbf16, #tpu.memory_space<vmem>>, %arg3: memref<128x128xbf16, #tpu.memory_space<vmem>>, %arg4: memref<1x128xf32, #tpu.memory_space<vmem>>, %arg5: memref<256x128xf32, #tpu.memory_space<vmem>>) attributes {dimension_semantics = [#tpu.dimension_semantics<parallel>, #tpu.dimension_semantics<parallel>], iteration_bounds = array<i64: 1, 1>, scalar_prefetch = 0 : i64, scratch_operands = 0 : i64, tpu.core_type = #tpu.core_type<tc>, window_params = [{transform_indices = @transform_0, window_bounds = array<i64: 256, 128>}, {transform_indices = @transform_1, window_bounds = array<i64: 128, 128>}, {transform_indices = @transform_2, window_bounds = array<i64: 1, 128>}, {transform_indices = @transform_3, window_bounds = array<i64: 256, 128>}]} {
    %c0 = arith.constant 0 : index
    %c0_0 = arith.constant 0 : index
    %0 = vector.load %arg2[%c0, %c0_0] : memref<256x128xbf16, #tpu.memory_space<vmem>>, vector<256x128xbf16>
    %c0_1 = arith.constant 0 : index
    %c0_2 = arith.constant 0 : index
    %1 = vector.load %arg3[%c0_1, %c0_2] : memref<128x128xbf16, #tpu.memory_space<vmem>>, vector<128x128xbf16>
    %cst = arith.constant dense<0.000000e+00> : vector<256x128xf32>
    %2 = tpu.matmul %0, %1, %cst {dimension_numbers = #tpu.dot_dimension_numbers<[1], [0], [0], [1], [0, 0, 1, 1], [], []>} : vector<256x128xbf16>, vector<128x128xbf16>, vector<256x128xf32> -> vector<256x128xf32>
    %c0_3 = arith.constant 0 : index
    %c0_4 = arith.constant 0 : index
    %3 = vector.load %arg4[%c0_3, %c0_4] : memref<1x128xf32, #tpu.memory_space<vmem>>, vector<1x128xf32>
    %4 = vector.broadcast %3 : vector<1x128xf32> to vector<256x128xf32>
    %5 = arith.addf %2, %4 : vector<256x128xf32>
    %c0_5 = arith.constant 0 : index
    %c0_6 = arith.constant 0 : index
    %6 = vector.load %arg5[%c0_5, %c0_6] : memref<256x128xf32, #tpu.memory_space<vmem>>, vector<256x128xf32>
    tpu.vector_store %arg5[%c0_5, %c0_6], %5 {strides = array<i32>} : memref<256x128xf32, #tpu.memory_space<vmem>>, vector<256x128xf32>,
    return
  }
  func.func @transform_0(%arg0: i32, %arg1: i32) -> (i32, i32) {
    %c0_i32 = arith.constant 0 : i32
    %c0_i32_0 = arith.constant 0 : i32
    return %arg0, %c0_i32 : i32, i32
  }
  func.func @transform_1(%arg0: i32, %arg1: i32) -> (i32, i32) {
    %c0_i32 = arith.constant 0 : i32
    %c0_i32_0 = arith.constant 0 : i32
    return %c0_i32, %arg1 : i32, i32
  }
  func.func @transform_2(%arg0: i32, %arg1: i32) -> (i32, i32) {
    %c0_i32 = arith.constant 0 : i32
    %c0_i32_0 = arith.constant 0 : i32
    return %c0_i32, %arg1 : i32, i32
  }
  func.func @transform_3(%arg0: i32, %arg1: i32) -> (i32, i32) {
    %c0_i32 = arith.constant 0 : i32
    return %arg0, %arg1 : i32, i32
  }
}

module attributes {stable_mosaic.version = 11 : i64} {
  func.func @rnn_recurrence_kernel(%arg0: i32, %arg1: memref<32x8x128xf32, #tpu.memory_space<vmem>>, %arg2: memref<8x128xf32, #tpu.memory_space<vmem>>, %arg3: memref<128x128xbf16, #tpu.memory_space<vmem>>, %arg4: memref<32x8x128xbf16, #tpu.memory_space<vmem>>, %arg5: memref<8x128xf32, #tpu.memory_space<vmem>>) attributes {dimension_semantics = [#tpu.dimension_semantics<arbitrary>], iteration_bounds = array<i64: 1>, scalar_prefetch = 0 : i64, scratch_operands = 0 : i64, tpu.core_type = #tpu.core_type<tc>, window_params = [{transform_indices = @transform_0, window_bounds = array<i64: 32, 8, 128>}, {pipeline_mode = #tpu.pipeline_mode<synchronous>, transform_indices = @transform_1, window_bounds = array<i64: 8, 128>}, {pipeline_mode = #tpu.pipeline_mode<synchronous>, transform_indices = @transform_2, window_bounds = array<i64: 128, 128>}, {transform_indices = @transform_3, window_bounds = array<i64: 32, 8, 128>}, {pipeline_mode = #tpu.pipeline_mode<synchronous>, transform_indices = @transform_4, window_bounds = array<i64: 8, 128>}]} {
    %c0_i32 = arith.constant 0 : i32
    %0 = arith.cmpi eq, %arg0, %c0_i32 : i32
    %1 = arith.extui %0 : i1 to i32
    %c0_i32_0 = arith.constant 0 : i32
    %2 = arith.cmpi ne, %1, %c0_i32_0 : i32
    scf.if %2 {
      %c0_166 = arith.constant 0 : index
      %c0_167 = arith.constant 0 : index
      %390 = vector.load %arg2[%c0_166, %c0_167] : memref<8x128xf32, #tpu.memory_space<vmem>>, vector<8x128xf32>
      %c0_168 = arith.constant 0 : index
      %c0_169 = arith.constant 0 : index
      %391 = vector.load %arg5[%c0_168, %c0_169] : memref<8x128xf32, #tpu.memory_space<vmem>>, vector<8x128xf32>
      tpu.vector_store %arg5[%c0_168, %c0_169], %390 {strides = array<i32>} : memref<8x128xf32, #tpu.memory_space<vmem>>, vector<8x128xf32>,
    } else {
    }
    %c0 = arith.constant 0 : index
    %c0_1 = arith.constant 0 : index
    %3 = vector.load %arg3[%c0, %c0_1] : memref<128x128xbf16, #tpu.memory_space<vmem>>, vector<128x128xbf16>
    %c0_2 = arith.constant 0 : index
    %c0_3 = arith.constant 0 : index
    %4 = vector.load %arg5[%c0_2, %c0_3] : memref<8x128xf32, #tpu.memory_space<vmem>>, vector<8x128xf32>
    %c0_i32_4 = arith.constant 0 : i32
    %5 = arith.index_cast %c0_i32_4 : i32 to index
    %c0_5 = arith.constant 0 : index
    %c0_6 = arith.constant 0 : index
    %6 = vector.load %arg1[%5, %c0_5, %c0_6] : memref<32x8x128xf32, #tpu.memory_space<vmem>>, vector<1x8x128xf32>
    %7 = vector.shape_cast %6 : vector<1x8x128xf32> to vector<8x128xf32>
    %8 = arith.truncf %4 : vector<8x128xf32> to vector<8x128xbf16>
    %cst = arith.constant dense<0.000000e+00> : vector<8x128xf32>
    %9 = tpu.matmul %8, %3, %cst {dimension_numbers = #tpu.dot_dimension_numbers<[1], [0], [0], [1], [0, 0, 1, 1], [], []>} : vector<8x128xbf16>, vector<128x128xbf16>, vector<8x128xf32> -> vector<8x128xf32>
    %10 = arith.addf %7, %9 : vector<8x128xf32>
    %11 = math.tanh %10 : vector<8x128xf32>
    %12 = arith.truncf %11 : vector<8x128xf32> to vector<8x128xbf16>
    %13 = arith.index_cast %c0_i32_4 : i32 to index
    %c0_7 = arith.constant 0 : index
    %c0_8 = arith.constant 0 : index
    %14 = vector.load %arg4[%13, %c0_7, %c0_8] : memref<32x8x128xbf16, #tpu.memory_space<vmem>>, vector<1x8x128xbf16>
    %15 = vector.shape_cast %14 : vector<1x8x128xbf16> to vector<8x128xbf16>
    %16 = vector.shape_cast %12 : vector<8x128xbf16> to vector<1x8x128xbf16>
    tpu.vector_store %arg4[%13, %c0_7, %c0_8], %16 {strides = array<i32>} : memref<32x8x128xbf16, #tpu.memory_space<vmem>>, vector<1x8x128xbf16>,
    %c1_i32 = arith.constant 1 : i32
    %17 = arith.index_cast %c1_i32 : i32 to index
    %c0_9 = arith.constant 0 : index
    %c0_10 = arith.constant 0 : index
    %18 = vector.load %arg1[%17, %c0_9, %c0_10] : memref<32x8x128xf32, #tpu.memory_space<vmem>>, vector<1x8x128xf32>
    %19 = vector.shape_cast %18 : vector<1x8x128xf32> to vector<8x128xf32>
    %20 = arith.truncf %11 : vector<8x128xf32> to vector<8x128xbf16>
    %cst_11 = arith.constant dense<0.000000e+00> : vector<8x128xf32>
    %21 = tpu.matmul %20, %3, %cst_11 {dimension_numbers = #tpu.dot_dimension_numbers<[1], [0], [0], [1], [0, 0, 1, 1], [], []>} : vector<8x128xbf16>, vector<128x128xbf16>, vector<8x128xf32> -> vector<8x128xf32>
    %22 = arith.addf %19, %21 : vector<8x128xf32>
    %23 = math.tanh %22 : vector<8x128xf32>
    %24 = arith.truncf %23 : vector<8x128xf32> to vector<8x128xbf16>
    %25 = arith.index_cast %c1_i32 : i32 to index
    %c0_12 = arith.constant 0 : index
    %c0_13 = arith.constant 0 : index
    %26 = vector.load %arg4[%25, %c0_12, %c0_13] : memref<32x8x128xbf16, #tpu.memory_space<vmem>>, vector<1x8x128xbf16>
    %27 = vector.shape_cast %26 : vector<1x8x128xbf16> to vector<8x128xbf16>
    %28 = vector.shape_cast %24 : vector<8x128xbf16> to vector<1x8x128xbf16>
    tpu.vector_store %arg4[%25, %c0_12, %c0_13], %28 {strides = array<i32>} : memref<32x8x128xbf16, #tpu.memory_space<vmem>>, vector<1x8x128xbf16>,
    %c2_i32 = arith.constant 2 : i32
    %29 = arith.index_cast %c2_i32 : i32 to index
    %c0_14 = arith.constant 0 : index
    %c0_15 = arith.constant 0 : index
    %30 = vector.load %arg1[%29, %c0_14, %c0_15] : memref<32x8x128xf32, #tpu.memory_space<vmem>>, vector<1x8x128xf32>
    %31 = vector.shape_cast %30 : vector<1x8x128xf32> to vector<8x128xf32>
    %32 = arith.truncf %23 : vector<8x128xf32> to vector<8x128xbf16>
    %cst_16 = arith.constant dense<0.000000e+00> : vector<8x128xf32>
    %33 = tpu.matmul %32, %3, %cst_16 {dimension_numbers = #tpu.dot_dimension_numbers<[1], [0], [0], [1], [0, 0, 1, 1], [], []>} : vector<8x128xbf16>, vector<128x128xbf16>, vector<8x128xf32> -> vector<8x128xf32>
    %34 = arith.addf %31, %33 : vector<8x128xf32>
    %35 = math.tanh %34 : vector<8x128xf32>
    %36 = arith.truncf %35 : vector<8x128xf32> to vector<8x128xbf16>
    %37 = arith.index_cast %c2_i32 : i32 to index
    %c0_17 = arith.constant 0 : index
    %c0_18 = arith.constant 0 : index
    %38 = vector.load %arg4[%37, %c0_17, %c0_18] : memref<32x8x128xbf16, #tpu.memory_space<vmem>>, vector<1x8x128xbf16>
    %39 = vector.shape_cast %38 : vector<1x8x128xbf16> to vector<8x128xbf16>
    %40 = vector.shape_cast %36 : vector<8x128xbf16> to vector<1x8x128xbf16>
    tpu.vector_store %arg4[%37, %c0_17, %c0_18], %40 {strides = array<i32>} : memref<32x8x128xbf16, #tpu.memory_space<vmem>>, vector<1x8x128xbf16>,
    %c3_i32 = arith.constant 3 : i32
    %41 = arith.index_cast %c3_i32 : i32 to index
    %c0_19 = arith.constant 0 : index
    %c0_20 = arith.constant 0 : index
    %42 = vector.load %arg1[%41, %c0_19, %c0_20] : memref<32x8x128xf32, #tpu.memory_space<vmem>>, vector<1x8x128xf32>
    %43 = vector.shape_cast %42 : vector<1x8x128xf32> to vector<8x128xf32>
    %44 = arith.truncf %35 : vector<8x128xf32> to vector<8x128xbf16>
    %cst_21 = arith.constant dense<0.000000e+00> : vector<8x128xf32>
    %45 = tpu.matmul %44, %3, %cst_21 {dimension_numbers = #tpu.dot_dimension_numbers<[1], [0], [0], [1], [0, 0, 1, 1], [], []>} : vector<8x128xbf16>, vector<128x128xbf16>, vector<8x128xf32> -> vector<8x128xf32>
    %46 = arith.addf %43, %45 : vector<8x128xf32>
    %47 = math.tanh %46 : vector<8x128xf32>
    %48 = arith.truncf %47 : vector<8x128xf32> to vector<8x128xbf16>
    %49 = arith.index_cast %c3_i32 : i32 to index
    %c0_22 = arith.constant 0 : index
    %c0_23 = arith.constant 0 : index
    %50 = vector.load %arg4[%49, %c0_22, %c0_23] : memref<32x8x128xbf16, #tpu.memory_space<vmem>>, vector<1x8x128xbf16>
    %51 = vector.shape_cast %50 : vector<1x8x128xbf16> to vector<8x128xbf16>
    %52 = vector.shape_cast %48 : vector<8x128xbf16> to vector<1x8x128xbf16>
    tpu.vector_store %arg4[%49, %c0_22, %c0_23], %52 {strides = array<i32>} : memref<32x8x128xbf16, #tpu.memory_space<vmem>>, vector<1x8x128xbf16>,
    %c4_i32 = arith.constant 4 : i32
    %53 = arith.index_cast %c4_i32 : i32 to index
    %c0_24 = arith.constant 0 : index
    %c0_25 = arith.constant 0 : index
    %54 = vector.load %arg1[%53, %c0_24, %c0_25] : memref<32x8x128xf32, #tpu.memory_space<vmem>>, vector<1x8x128xf32>
    %55 = vector.shape_cast %54 : vector<1x8x128xf32> to vector<8x128xf32>
    %56 = arith.truncf %47 : vector<8x128xf32> to vector<8x128xbf16>
    %cst_26 = arith.constant dense<0.000000e+00> : vector<8x128xf32>
    %57 = tpu.matmul %56, %3, %cst_26 {dimension_numbers = #tpu.dot_dimension_numbers<[1], [0], [0], [1], [0, 0, 1, 1], [], []>} : vector<8x128xbf16>, vector<128x128xbf16>, vector<8x128xf32> -> vector<8x128xf32>
    %58 = arith.addf %55, %57 : vector<8x128xf32>
    %59 = math.tanh %58 : vector<8x128xf32>
    %60 = arith.truncf %59 : vector<8x128xf32> to vector<8x128xbf16>
    %61 = arith.index_cast %c4_i32 : i32 to index
    %c0_27 = arith.constant 0 : index
    %c0_28 = arith.constant 0 : index
    %62 = vector.load %arg4[%61, %c0_27, %c0_28] : memref<32x8x128xbf16, #tpu.memory_space<vmem>>, vector<1x8x128xbf16>
    %63 = vector.shape_cast %62 : vector<1x8x128xbf16> to vector<8x128xbf16>
    %64 = vector.shape_cast %60 : vector<8x128xbf16> to vector<1x8x128xbf16>
    tpu.vector_store %arg4[%61, %c0_27, %c0_28], %64 {strides = array<i32>} : memref<32x8x128xbf16, #tpu.memory_space<vmem>>, vector<1x8x128xbf16>,
    %c5_i32 = arith.constant 5 : i32
    %65 = arith.index_cast %c5_i32 : i32 to index
    %c0_29 = arith.constant 0 : index
    %c0_30 = arith.constant 0 : index
    %66 = vector.load %arg1[%65, %c0_29, %c0_30] : memref<32x8x128xf32, #tpu.memory_space<vmem>>, vector<1x8x128xf32>
    %67 = vector.shape_cast %66 : vector<1x8x128xf32> to vector<8x128xf32>
    %68 = arith.truncf %59 : vector<8x128xf32> to vector<8x128xbf16>
    %cst_31 = arith.constant dense<0.000000e+00> : vector<8x128xf32>
    %69 = tpu.matmul %68, %3, %cst_31 {dimension_numbers = #tpu.dot_dimension_numbers<[1], [0], [0], [1], [0, 0, 1, 1], [], []>} : vector<8x128xbf16>, vector<128x128xbf16>, vector<8x128xf32> -> vector<8x128xf32>
    %70 = arith.addf %67, %69 : vector<8x128xf32>
    %71 = math.tanh %70 : vector<8x128xf32>
    %72 = arith.truncf %71 : vector<8x128xf32> to vector<8x128xbf16>
    %73 = arith.index_cast %c5_i32 : i32 to index
    %c0_32 = arith.constant 0 : index
    %c0_33 = arith.constant 0 : index
    %74 = vector.load %arg4[%73, %c0_32, %c0_33] : memref<32x8x128xbf16, #tpu.memory_space<vmem>>, vector<1x8x128xbf16>
    %75 = vector.shape_cast %74 : vector<1x8x128xbf16> to vector<8x128xbf16>
    %76 = vector.shape_cast %72 : vector<8x128xbf16> to vector<1x8x128xbf16>
    tpu.vector_store %arg4[%73, %c0_32, %c0_33], %76 {strides = array<i32>} : memref<32x8x128xbf16, #tpu.memory_space<vmem>>, vector<1x8x128xbf16>,
    %c6_i32 = arith.constant 6 : i32
    %77 = arith.index_cast %c6_i32 : i32 to index
    %c0_34 = arith.constant 0 : index
    %c0_35 = arith.constant 0 : index
    %78 = vector.load %arg1[%77, %c0_34, %c0_35] : memref<32x8x128xf32, #tpu.memory_space<vmem>>, vector<1x8x128xf32>
    %79 = vector.shape_cast %78 : vector<1x8x128xf32> to vector<8x128xf32>
    %80 = arith.truncf %71 : vector<8x128xf32> to vector<8x128xbf16>
    %cst_36 = arith.constant dense<0.000000e+00> : vector<8x128xf32>
    %81 = tpu.matmul %80, %3, %cst_36 {dimension_numbers = #tpu.dot_dimension_numbers<[1], [0], [0], [1], [0, 0, 1, 1], [], []>} : vector<8x128xbf16>, vector<128x128xbf16>, vector<8x128xf32> -> vector<8x128xf32>
    %82 = arith.addf %79, %81 : vector<8x128xf32>
    %83 = math.tanh %82 : vector<8x128xf32>
    %84 = arith.truncf %83 : vector<8x128xf32> to vector<8x128xbf16>
    %85 = arith.index_cast %c6_i32 : i32 to index
    %c0_37 = arith.constant 0 : index
    %c0_38 = arith.constant 0 : index
    %86 = vector.load %arg4[%85, %c0_37, %c0_38] : memref<32x8x128xbf16, #tpu.memory_space<vmem>>, vector<1x8x128xbf16>
    %87 = vector.shape_cast %86 : vector<1x8x128xbf16> to vector<8x128xbf16>
    %88 = vector.shape_cast %84 : vector<8x128xbf16> to vector<1x8x128xbf16>
    tpu.vector_store %arg4[%85, %c0_37, %c0_38], %88 {strides = array<i32>} : memref<32x8x128xbf16, #tpu.memory_space<vmem>>, vector<1x8x128xbf16>,
    %c7_i32 = arith.constant 7 : i32
    %89 = arith.index_cast %c7_i32 : i32 to index
    %c0_39 = arith.constant 0 : index
    %c0_40 = arith.constant 0 : index
    %90 = vector.load %arg1[%89, %c0_39, %c0_40] : memref<32x8x128xf32, #tpu.memory_space<vmem>>, vector<1x8x128xf32>
    %91 = vector.shape_cast %90 : vector<1x8x128xf32> to vector<8x128xf32>
    %92 = arith.truncf %83 : vector<8x128xf32> to vector<8x128xbf16>
    %cst_41 = arith.constant dense<0.000000e+00> : vector<8x128xf32>
    %93 = tpu.matmul %92, %3, %cst_41 {dimension_numbers = #tpu.dot_dimension_numbers<[1], [0], [0], [1], [0, 0, 1, 1], [], []>} : vector<8x128xbf16>, vector<128x128xbf16>, vector<8x128xf32> -> vector<8x128xf32>
    %94 = arith.addf %91, %93 : vector<8x128xf32>
    %95 = math.tanh %94 : vector<8x128xf32>
    %96 = arith.truncf %95 : vector<8x128xf32> to vector<8x128xbf16>
    %97 = arith.index_cast %c7_i32 : i32 to index
    %c0_42 = arith.constant 0 : index
    %c0_43 = arith.constant 0 : index
    %98 = vector.load %arg4[%97, %c0_42, %c0_43] : memref<32x8x128xbf16, #tpu.memory_space<vmem>>, vector<1x8x128xbf16>
    %99 = vector.shape_cast %98 : vector<1x8x128xbf16> to vector<8x128xbf16>
    %100 = vector.shape_cast %96 : vector<8x128xbf16> to vector<1x8x128xbf16>
    tpu.vector_store %arg4[%97, %c0_42, %c0_43], %100 {strides = array<i32>} : memref<32x8x128xbf16, #tpu.memory_space<vmem>>, vector<1x8x128xbf16>,
    %c8_i32 = arith.constant 8 : i32
    %101 = arith.index_cast %c8_i32 : i32 to index
    %c0_44 = arith.constant 0 : index
    %c0_45 = arith.constant 0 : index
    %102 = vector.load %arg1[%101, %c0_44, %c0_45] : memref<32x8x128xf32, #tpu.memory_space<vmem>>, vector<1x8x128xf32>
    %103 = vector.shape_cast %102 : vector<1x8x128xf32> to vector<8x128xf32>
    %104 = arith.truncf %95 : vector<8x128xf32> to vector<8x128xbf16>
    %cst_46 = arith.constant dense<0.000000e+00> : vector<8x128xf32>
    %105 = tpu.matmul %104, %3, %cst_46 {dimension_numbers = #tpu.dot_dimension_numbers<[1], [0], [0], [1], [0, 0, 1, 1], [], []>} : vector<8x128xbf16>, vector<128x128xbf16>, vector<8x128xf32> -> vector<8x128xf32>
    %106 = arith.addf %103, %105 : vector<8x128xf32>
    %107 = math.tanh %106 : vector<8x128xf32>
    %108 = arith.truncf %107 : vector<8x128xf32> to vector<8x128xbf16>
    %109 = arith.index_cast %c8_i32 : i32 to index
    %c0_47 = arith.constant 0 : index
    %c0_48 = arith.constant 0 : index
    %110 = vector.load %arg4[%109, %c0_47, %c0_48] : memref<32x8x128xbf16, #tpu.memory_space<vmem>>, vector<1x8x128xbf16>
    %111 = vector.shape_cast %110 : vector<1x8x128xbf16> to vector<8x128xbf16>
    %112 = vector.shape_cast %108 : vector<8x128xbf16> to vector<1x8x128xbf16>
    tpu.vector_store %arg4[%109, %c0_47, %c0_48], %112 {strides = array<i32>} : memref<32x8x128xbf16, #tpu.memory_space<vmem>>, vector<1x8x128xbf16>,
    %c9_i32 = arith.constant 9 : i32
    %113 = arith.index_cast %c9_i32 : i32 to index
    %c0_49 = arith.constant 0 : index
    %c0_50 = arith.constant 0 : index
    %114 = vector.load %arg1[%113, %c0_49, %c0_50] : memref<32x8x128xf32, #tpu.memory_space<vmem>>, vector<1x8x128xf32>
    %115 = vector.shape_cast %114 : vector<1x8x128xf32> to vector<8x128xf32>
    %116 = arith.truncf %107 : vector<8x128xf32> to vector<8x128xbf16>
    %cst_51 = arith.constant dense<0.000000e+00> : vector<8x128xf32>
    %117 = tpu.matmul %116, %3, %cst_51 {dimension_numbers = #tpu.dot_dimension_numbers<[1], [0], [0], [1], [0, 0, 1, 1], [], []>} : vector<8x128xbf16>, vector<128x128xbf16>, vector<8x128xf32> -> vector<8x128xf32>
    %118 = arith.addf %115, %117 : vector<8x128xf32>
    %119 = math.tanh %118 : vector<8x128xf32>
    %120 = arith.truncf %119 : vector<8x128xf32> to vector<8x128xbf16>
    %121 = arith.index_cast %c9_i32 : i32 to index
    %c0_52 = arith.constant 0 : index
    %c0_53 = arith.constant 0 : index
    %122 = vector.load %arg4[%121, %c0_52, %c0_53] : memref<32x8x128xbf16, #tpu.memory_space<vmem>>, vector<1x8x128xbf16>
    %123 = vector.shape_cast %122 : vector<1x8x128xbf16> to vector<8x128xbf16>
    %124 = vector.shape_cast %120 : vector<8x128xbf16> to vector<1x8x128xbf16>
    tpu.vector_store %arg4[%121, %c0_52, %c0_53], %124 {strides = array<i32>} : memref<32x8x128xbf16, #tpu.memory_space<vmem>>, vector<1x8x128xbf16>,
    %c10_i32 = arith.constant 10 : i32
    %125 = arith.index_cast %c10_i32 : i32 to index
    %c0_54 = arith.constant 0 : index
    %c0_55 = arith.constant 0 : index
    %126 = vector.load %arg1[%125, %c0_54, %c0_55] : memref<32x8x128xf32, #tpu.memory_space<vmem>>, vector<1x8x128xf32>
    %127 = vector.shape_cast %126 : vector<1x8x128xf32> to vector<8x128xf32>
    %128 = arith.truncf %119 : vector<8x128xf32> to vector<8x128xbf16>
    %cst_56 = arith.constant dense<0.000000e+00> : vector<8x128xf32>
    %129 = tpu.matmul %128, %3, %cst_56 {dimension_numbers = #tpu.dot_dimension_numbers<[1], [0], [0], [1], [0, 0, 1, 1], [], []>} : vector<8x128xbf16>, vector<128x128xbf16>, vector<8x128xf32> -> vector<8x128xf32>
    %130 = arith.addf %127, %129 : vector<8x128xf32>
    %131 = math.tanh %130 : vector<8x128xf32>
    %132 = arith.truncf %131 : vector<8x128xf32> to vector<8x128xbf16>
    %133 = arith.index_cast %c10_i32 : i32 to index
    %c0_57 = arith.constant 0 : index
    %c0_58 = arith.constant 0 : index
    %134 = vector.load %arg4[%133, %c0_57, %c0_58] : memref<32x8x128xbf16, #tpu.memory_space<vmem>>, vector<1x8x128xbf16>
    %135 = vector.shape_cast %134 : vector<1x8x128xbf16> to vector<8x128xbf16>
    %136 = vector.shape_cast %132 : vector<8x128xbf16> to vector<1x8x128xbf16>
    tpu.vector_store %arg4[%133, %c0_57, %c0_58], %136 {strides = array<i32>} : memref<32x8x128xbf16, #tpu.memory_space<vmem>>, vector<1x8x128xbf16>,
    %c11_i32 = arith.constant 11 : i32
    %137 = arith.index_cast %c11_i32 : i32 to index
    %c0_59 = arith.constant 0 : index
    %c0_60 = arith.constant 0 : index
    %138 = vector.load %arg1[%137, %c0_59, %c0_60] : memref<32x8x128xf32, #tpu.memory_space<vmem>>, vector<1x8x128xf32>
    %139 = vector.shape_cast %138 : vector<1x8x128xf32> to vector<8x128xf32>
    %140 = arith.truncf %131 : vector<8x128xf32> to vector<8x128xbf16>
    %cst_61 = arith.constant dense<0.000000e+00> : vector<8x128xf32>
    %141 = tpu.matmul %140, %3, %cst_61 {dimension_numbers = #tpu.dot_dimension_numbers<[1], [0], [0], [1], [0, 0, 1, 1], [], []>} : vector<8x128xbf16>, vector<128x128xbf16>, vector<8x128xf32> -> vector<8x128xf32>
    %142 = arith.addf %139, %141 : vector<8x128xf32>
    %143 = math.tanh %142 : vector<8x128xf32>
    %144 = arith.truncf %143 : vector<8x128xf32> to vector<8x128xbf16>
    %145 = arith.index_cast %c11_i32 : i32 to index
    %c0_62 = arith.constant 0 : index
    %c0_63 = arith.constant 0 : index
    %146 = vector.load %arg4[%145, %c0_62, %c0_63] : memref<32x8x128xbf16, #tpu.memory_space<vmem>>, vector<1x8x128xbf16>
    %147 = vector.shape_cast %146 : vector<1x8x128xbf16> to vector<8x128xbf16>
    %148 = vector.shape_cast %144 : vector<8x128xbf16> to vector<1x8x128xbf16>
    tpu.vector_store %arg4[%145, %c0_62, %c0_63], %148 {strides = array<i32>} : memref<32x8x128xbf16, #tpu.memory_space<vmem>>, vector<1x8x128xbf16>,
    %c12_i32 = arith.constant 12 : i32
    %149 = arith.index_cast %c12_i32 : i32 to index
    %c0_64 = arith.constant 0 : index
    %c0_65 = arith.constant 0 : index
    %150 = vector.load %arg1[%149, %c0_64, %c0_65] : memref<32x8x128xf32, #tpu.memory_space<vmem>>, vector<1x8x128xf32>
    %151 = vector.shape_cast %150 : vector<1x8x128xf32> to vector<8x128xf32>
    %152 = arith.truncf %143 : vector<8x128xf32> to vector<8x128xbf16>
    %cst_66 = arith.constant dense<0.000000e+00> : vector<8x128xf32>
    %153 = tpu.matmul %152, %3, %cst_66 {dimension_numbers = #tpu.dot_dimension_numbers<[1], [0], [0], [1], [0, 0, 1, 1], [], []>} : vector<8x128xbf16>, vector<128x128xbf16>, vector<8x128xf32> -> vector<8x128xf32>
    %154 = arith.addf %151, %153 : vector<8x128xf32>
    %155 = math.tanh %154 : vector<8x128xf32>
    %156 = arith.truncf %155 : vector<8x128xf32> to vector<8x128xbf16>
    %157 = arith.index_cast %c12_i32 : i32 to index
    %c0_67 = arith.constant 0 : index
    %c0_68 = arith.constant 0 : index
    %158 = vector.load %arg4[%157, %c0_67, %c0_68] : memref<32x8x128xbf16, #tpu.memory_space<vmem>>, vector<1x8x128xbf16>
    %159 = vector.shape_cast %158 : vector<1x8x128xbf16> to vector<8x128xbf16>
    %160 = vector.shape_cast %156 : vector<8x128xbf16> to vector<1x8x128xbf16>
    tpu.vector_store %arg4[%157, %c0_67, %c0_68], %160 {strides = array<i32>} : memref<32x8x128xbf16, #tpu.memory_space<vmem>>, vector<1x8x128xbf16>,
    %c13_i32 = arith.constant 13 : i32
    %161 = arith.index_cast %c13_i32 : i32 to index
    %c0_69 = arith.constant 0 : index
    %c0_70 = arith.constant 0 : index
    %162 = vector.load %arg1[%161, %c0_69, %c0_70] : memref<32x8x128xf32, #tpu.memory_space<vmem>>, vector<1x8x128xf32>
    %163 = vector.shape_cast %162 : vector<1x8x128xf32> to vector<8x128xf32>
    %164 = arith.truncf %155 : vector<8x128xf32> to vector<8x128xbf16>
    %cst_71 = arith.constant dense<0.000000e+00> : vector<8x128xf32>
    %165 = tpu.matmul %164, %3, %cst_71 {dimension_numbers = #tpu.dot_dimension_numbers<[1], [0], [0], [1], [0, 0, 1, 1], [], []>} : vector<8x128xbf16>, vector<128x128xbf16>, vector<8x128xf32> -> vector<8x128xf32>
    %166 = arith.addf %163, %165 : vector<8x128xf32>
    %167 = math.tanh %166 : vector<8x128xf32>
    %168 = arith.truncf %167 : vector<8x128xf32> to vector<8x128xbf16>
    %169 = arith.index_cast %c13_i32 : i32 to index
    %c0_72 = arith.constant 0 : index
    %c0_73 = arith.constant 0 : index
    %170 = vector.load %arg4[%169, %c0_72, %c0_73] : memref<32x8x128xbf16, #tpu.memory_space<vmem>>, vector<1x8x128xbf16>
    %171 = vector.shape_cast %170 : vector<1x8x128xbf16> to vector<8x128xbf16>
    %172 = vector.shape_cast %168 : vector<8x128xbf16> to vector<1x8x128xbf16>
    tpu.vector_store %arg4[%169, %c0_72, %c0_73], %172 {strides = array<i32>} : memref<32x8x128xbf16, #tpu.memory_space<vmem>>, vector<1x8x128xbf16>,
    %c14_i32 = arith.constant 14 : i32
    %173 = arith.index_cast %c14_i32 : i32 to index
    %c0_74 = arith.constant 0 : index
    %c0_75 = arith.constant 0 : index
    %174 = vector.load %arg1[%173, %c0_74, %c0_75] : memref<32x8x128xf32, #tpu.memory_space<vmem>>, vector<1x8x128xf32>
    %175 = vector.shape_cast %174 : vector<1x8x128xf32> to vector<8x128xf32>
    %176 = arith.truncf %167 : vector<8x128xf32> to vector<8x128xbf16>
    %cst_76 = arith.constant dense<0.000000e+00> : vector<8x128xf32>
    %177 = tpu.matmul %176, %3, %cst_76 {dimension_numbers = #tpu.dot_dimension_numbers<[1], [0], [0], [1], [0, 0, 1, 1], [], []>} : vector<8x128xbf16>, vector<128x128xbf16>, vector<8x128xf32> -> vector<8x128xf32>
    %178 = arith.addf %175, %177 : vector<8x128xf32>
    %179 = math.tanh %178 : vector<8x128xf32>
    %180 = arith.truncf %179 : vector<8x128xf32> to vector<8x128xbf16>
    %181 = arith.index_cast %c14_i32 : i32 to index
    %c0_77 = arith.constant 0 : index
    %c0_78 = arith.constant 0 : index
    %182 = vector.load %arg4[%181, %c0_77, %c0_78] : memref<32x8x128xbf16, #tpu.memory_space<vmem>>, vector<1x8x128xbf16>
    %183 = vector.shape_cast %182 : vector<1x8x128xbf16> to vector<8x128xbf16>
    %184 = vector.shape_cast %180 : vector<8x128xbf16> to vector<1x8x128xbf16>
    tpu.vector_store %arg4[%181, %c0_77, %c0_78], %184 {strides = array<i32>} : memref<32x8x128xbf16, #tpu.memory_space<vmem>>, vector<1x8x128xbf16>,
    %c15_i32 = arith.constant 15 : i32
    %185 = arith.index_cast %c15_i32 : i32 to index
    %c0_79 = arith.constant 0 : index
    %c0_80 = arith.constant 0 : index
    %186 = vector.load %arg1[%185, %c0_79, %c0_80] : memref<32x8x128xf32, #tpu.memory_space<vmem>>, vector<1x8x128xf32>
    %187 = vector.shape_cast %186 : vector<1x8x128xf32> to vector<8x128xf32>
    %188 = arith.truncf %179 : vector<8x128xf32> to vector<8x128xbf16>
    %cst_81 = arith.constant dense<0.000000e+00> : vector<8x128xf32>
    %189 = tpu.matmul %188, %3, %cst_81 {dimension_numbers = #tpu.dot_dimension_numbers<[1], [0], [0], [1], [0, 0, 1, 1], [], []>} : vector<8x128xbf16>, vector<128x128xbf16>, vector<8x128xf32> -> vector<8x128xf32>
    %190 = arith.addf %187, %189 : vector<8x128xf32>
    %191 = math.tanh %190 : vector<8x128xf32>
    %192 = arith.truncf %191 : vector<8x128xf32> to vector<8x128xbf16>
    %193 = arith.index_cast %c15_i32 : i32 to index
    %c0_82 = arith.constant 0 : index
    %c0_83 = arith.constant 0 : index
    %194 = vector.load %arg4[%193, %c0_82, %c0_83] : memref<32x8x128xbf16, #tpu.memory_space<vmem>>, vector<1x8x128xbf16>
    %195 = vector.shape_cast %194 : vector<1x8x128xbf16> to vector<8x128xbf16>
    %196 = vector.shape_cast %192 : vector<8x128xbf16> to vector<1x8x128xbf16>
    tpu.vector_store %arg4[%193, %c0_82, %c0_83], %196 {strides = array<i32>} : memref<32x8x128xbf16, #tpu.memory_space<vmem>>, vector<1x8x128xbf16>,
    %c16_i32 = arith.constant 16 : i32
    %197 = arith.index_cast %c16_i32 : i32 to index
    %c0_84 = arith.constant 0 : index
    %c0_85 = arith.constant 0 : index
    %198 = vector.load %arg1[%197, %c0_84, %c0_85] : memref<32x8x128xf32, #tpu.memory_space<vmem>>, vector<1x8x128xf32>
    %199 = vector.shape_cast %198 : vector<1x8x128xf32> to vector<8x128xf32>
    %200 = arith.truncf %191 : vector<8x128xf32> to vector<8x128xbf16>
    %cst_86 = arith.constant dense<0.000000e+00> : vector<8x128xf32>
    %201 = tpu.matmul %200, %3, %cst_86 {dimension_numbers = #tpu.dot_dimension_numbers<[1], [0], [0], [1], [0, 0, 1, 1], [], []>} : vector<8x128xbf16>, vector<128x128xbf16>, vector<8x128xf32> -> vector<8x128xf32>
    %202 = arith.addf %199, %201 : vector<8x128xf32>
    %203 = math.tanh %202 : vector<8x128xf32>
    %204 = arith.truncf %203 : vector<8x128xf32> to vector<8x128xbf16>
    %205 = arith.index_cast %c16_i32 : i32 to index
    %c0_87 = arith.constant 0 : index
    %c0_88 = arith.constant 0 : index
    %206 = vector.load %arg4[%205, %c0_87, %c0_88] : memref<32x8x128xbf16, #tpu.memory_space<vmem>>, vector<1x8x128xbf16>
    %207 = vector.shape_cast %206 : vector<1x8x128xbf16> to vector<8x128xbf16>
    %208 = vector.shape_cast %204 : vector<8x128xbf16> to vector<1x8x128xbf16>
    tpu.vector_store %arg4[%205, %c0_87, %c0_88], %208 {strides = array<i32>} : memref<32x8x128xbf16, #tpu.memory_space<vmem>>, vector<1x8x128xbf16>,
    %c17_i32 = arith.constant 17 : i32
    %209 = arith.index_cast %c17_i32 : i32 to index
    %c0_89 = arith.constant 0 : index
    %c0_90 = arith.constant 0 : index
    %210 = vector.load %arg1[%209, %c0_89, %c0_90] : memref<32x8x128xf32, #tpu.memory_space<vmem>>, vector<1x8x128xf32>
    %211 = vector.shape_cast %210 : vector<1x8x128xf32> to vector<8x128xf32>
    %212 = arith.truncf %203 : vector<8x128xf32> to vector<8x128xbf16>
    %cst_91 = arith.constant dense<0.000000e+00> : vector<8x128xf32>
    %213 = tpu.matmul %212, %3, %cst_91 {dimension_numbers = #tpu.dot_dimension_numbers<[1], [0], [0], [1], [0, 0, 1, 1], [], []>} : vector<8x128xbf16>, vector<128x128xbf16>, vector<8x128xf32> -> vector<8x128xf32>
    %214 = arith.addf %211, %213 : vector<8x128xf32>
    %215 = math.tanh %214 : vector<8x128xf32>
    %216 = arith.truncf %215 : vector<8x128xf32> to vector<8x128xbf16>
    %217 = arith.index_cast %c17_i32 : i32 to index
    %c0_92 = arith.constant 0 : index
    %c0_93 = arith.constant 0 : index
    %218 = vector.load %arg4[%217, %c0_92, %c0_93] : memref<32x8x128xbf16, #tpu.memory_space<vmem>>, vector<1x8x128xbf16>
    %219 = vector.shape_cast %218 : vector<1x8x128xbf16> to vector<8x128xbf16>
    %220 = vector.shape_cast %216 : vector<8x128xbf16> to vector<1x8x128xbf16>
    tpu.vector_store %arg4[%217, %c0_92, %c0_93], %220 {strides = array<i32>} : memref<32x8x128xbf16, #tpu.memory_space<vmem>>, vector<1x8x128xbf16>,
    %c18_i32 = arith.constant 18 : i32
    %221 = arith.index_cast %c18_i32 : i32 to index
    %c0_94 = arith.constant 0 : index
    %c0_95 = arith.constant 0 : index
    %222 = vector.load %arg1[%221, %c0_94, %c0_95] : memref<32x8x128xf32, #tpu.memory_space<vmem>>, vector<1x8x128xf32>
    %223 = vector.shape_cast %222 : vector<1x8x128xf32> to vector<8x128xf32>
    %224 = arith.truncf %215 : vector<8x128xf32> to vector<8x128xbf16>
    %cst_96 = arith.constant dense<0.000000e+00> : vector<8x128xf32>
    %225 = tpu.matmul %224, %3, %cst_96 {dimension_numbers = #tpu.dot_dimension_numbers<[1], [0], [0], [1], [0, 0, 1, 1], [], []>} : vector<8x128xbf16>, vector<128x128xbf16>, vector<8x128xf32> -> vector<8x128xf32>
    %226 = arith.addf %223, %225 : vector<8x128xf32>
    %227 = math.tanh %226 : vector<8x128xf32>
    %228 = arith.truncf %227 : vector<8x128xf32> to vector<8x128xbf16>
    %229 = arith.index_cast %c18_i32 : i32 to index
    %c0_97 = arith.constant 0 : index
    %c0_98 = arith.constant 0 : index
    %230 = vector.load %arg4[%229, %c0_97, %c0_98] : memref<32x8x128xbf16, #tpu.memory_space<vmem>>, vector<1x8x128xbf16>
    %231 = vector.shape_cast %230 : vector<1x8x128xbf16> to vector<8x128xbf16>
    %232 = vector.shape_cast %228 : vector<8x128xbf16> to vector<1x8x128xbf16>
    tpu.vector_store %arg4[%229, %c0_97, %c0_98], %232 {strides = array<i32>} : memref<32x8x128xbf16, #tpu.memory_space<vmem>>, vector<1x8x128xbf16>,
    %c19_i32 = arith.constant 19 : i32
    %233 = arith.index_cast %c19_i32 : i32 to index
    %c0_99 = arith.constant 0 : index
    %c0_100 = arith.constant 0 : index
    %234 = vector.load %arg1[%233, %c0_99, %c0_100] : memref<32x8x128xf32, #tpu.memory_space<vmem>>, vector<1x8x128xf32>
    %235 = vector.shape_cast %234 : vector<1x8x128xf32> to vector<8x128xf32>
    %236 = arith.truncf %227 : vector<8x128xf32> to vector<8x128xbf16>
    %cst_101 = arith.constant dense<0.000000e+00> : vector<8x128xf32>
    %237 = tpu.matmul %236, %3, %cst_101 {dimension_numbers = #tpu.dot_dimension_numbers<[1], [0], [0], [1], [0, 0, 1, 1], [], []>} : vector<8x128xbf16>, vector<128x128xbf16>, vector<8x128xf32> -> vector<8x128xf32>
    %238 = arith.addf %235, %237 : vector<8x128xf32>
    %239 = math.tanh %238 : vector<8x128xf32>
    %240 = arith.truncf %239 : vector<8x128xf32> to vector<8x128xbf16>
    %241 = arith.index_cast %c19_i32 : i32 to index
    %c0_102 = arith.constant 0 : index
    %c0_103 = arith.constant 0 : index
    %242 = vector.load %arg4[%241, %c0_102, %c0_103] : memref<32x8x128xbf16, #tpu.memory_space<vmem>>, vector<1x8x128xbf16>
    %243 = vector.shape_cast %242 : vector<1x8x128xbf16> to vector<8x128xbf16>
    %244 = vector.shape_cast %240 : vector<8x128xbf16> to vector<1x8x128xbf16>
    tpu.vector_store %arg4[%241, %c0_102, %c0_103], %244 {strides = array<i32>} : memref<32x8x128xbf16, #tpu.memory_space<vmem>>, vector<1x8x128xbf16>,
    %c20_i32 = arith.constant 20 : i32
    %245 = arith.index_cast %c20_i32 : i32 to index
    %c0_104 = arith.constant 0 : index
    %c0_105 = arith.constant 0 : index
    %246 = vector.load %arg1[%245, %c0_104, %c0_105] : memref<32x8x128xf32, #tpu.memory_space<vmem>>, vector<1x8x128xf32>
    %247 = vector.shape_cast %246 : vector<1x8x128xf32> to vector<8x128xf32>
    %248 = arith.truncf %239 : vector<8x128xf32> to vector<8x128xbf16>
    %cst_106 = arith.constant dense<0.000000e+00> : vector<8x128xf32>
    %249 = tpu.matmul %248, %3, %cst_106 {dimension_numbers = #tpu.dot_dimension_numbers<[1], [0], [0], [1], [0, 0, 1, 1], [], []>} : vector<8x128xbf16>, vector<128x128xbf16>, vector<8x128xf32> -> vector<8x128xf32>
    %250 = arith.addf %247, %249 : vector<8x128xf32>
    %251 = math.tanh %250 : vector<8x128xf32>
    %252 = arith.truncf %251 : vector<8x128xf32> to vector<8x128xbf16>
    %253 = arith.index_cast %c20_i32 : i32 to index
    %c0_107 = arith.constant 0 : index
    %c0_108 = arith.constant 0 : index
    %254 = vector.load %arg4[%253, %c0_107, %c0_108] : memref<32x8x128xbf16, #tpu.memory_space<vmem>>, vector<1x8x128xbf16>
    %255 = vector.shape_cast %254 : vector<1x8x128xbf16> to vector<8x128xbf16>
    %256 = vector.shape_cast %252 : vector<8x128xbf16> to vector<1x8x128xbf16>
    tpu.vector_store %arg4[%253, %c0_107, %c0_108], %256 {strides = array<i32>} : memref<32x8x128xbf16, #tpu.memory_space<vmem>>, vector<1x8x128xbf16>,
    %c21_i32 = arith.constant 21 : i32
    %257 = arith.index_cast %c21_i32 : i32 to index
    %c0_109 = arith.constant 0 : index
    %c0_110 = arith.constant 0 : index
    %258 = vector.load %arg1[%257, %c0_109, %c0_110] : memref<32x8x128xf32, #tpu.memory_space<vmem>>, vector<1x8x128xf32>
    %259 = vector.shape_cast %258 : vector<1x8x128xf32> to vector<8x128xf32>
    %260 = arith.truncf %251 : vector<8x128xf32> to vector<8x128xbf16>
    %cst_111 = arith.constant dense<0.000000e+00> : vector<8x128xf32>
    %261 = tpu.matmul %260, %3, %cst_111 {dimension_numbers = #tpu.dot_dimension_numbers<[1], [0], [0], [1], [0, 0, 1, 1], [], []>} : vector<8x128xbf16>, vector<128x128xbf16>, vector<8x128xf32> -> vector<8x128xf32>
    %262 = arith.addf %259, %261 : vector<8x128xf32>
    %263 = math.tanh %262 : vector<8x128xf32>
    %264 = arith.truncf %263 : vector<8x128xf32> to vector<8x128xbf16>
    %265 = arith.index_cast %c21_i32 : i32 to index
    %c0_112 = arith.constant 0 : index
    %c0_113 = arith.constant 0 : index
    %266 = vector.load %arg4[%265, %c0_112, %c0_113] : memref<32x8x128xbf16, #tpu.memory_space<vmem>>, vector<1x8x128xbf16>
    %267 = vector.shape_cast %266 : vector<1x8x128xbf16> to vector<8x128xbf16>
    %268 = vector.shape_cast %264 : vector<8x128xbf16> to vector<1x8x128xbf16>
    tpu.vector_store %arg4[%265, %c0_112, %c0_113], %268 {strides = array<i32>} : memref<32x8x128xbf16, #tpu.memory_space<vmem>>, vector<1x8x128xbf16>,
    %c22_i32 = arith.constant 22 : i32
    %269 = arith.index_cast %c22_i32 : i32 to index
    %c0_114 = arith.constant 0 : index
    %c0_115 = arith.constant 0 : index
    %270 = vector.load %arg1[%269, %c0_114, %c0_115] : memref<32x8x128xf32, #tpu.memory_space<vmem>>, vector<1x8x128xf32>
    %271 = vector.shape_cast %270 : vector<1x8x128xf32> to vector<8x128xf32>
    %272 = arith.truncf %263 : vector<8x128xf32> to vector<8x128xbf16>
    %cst_116 = arith.constant dense<0.000000e+00> : vector<8x128xf32>
    %273 = tpu.matmul %272, %3, %cst_116 {dimension_numbers = #tpu.dot_dimension_numbers<[1], [0], [0], [1], [0, 0, 1, 1], [], []>} : vector<8x128xbf16>, vector<128x128xbf16>, vector<8x128xf32> -> vector<8x128xf32>
    %274 = arith.addf %271, %273 : vector<8x128xf32>
    %275 = math.tanh %274 : vector<8x128xf32>
    %276 = arith.truncf %275 : vector<8x128xf32> to vector<8x128xbf16>
    %277 = arith.index_cast %c22_i32 : i32 to index
    %c0_117 = arith.constant 0 : index
    %c0_118 = arith.constant 0 : index
    %278 = vector.load %arg4[%277, %c0_117, %c0_118] : memref<32x8x128xbf16, #tpu.memory_space<vmem>>, vector<1x8x128xbf16>
    %279 = vector.shape_cast %278 : vector<1x8x128xbf16> to vector<8x128xbf16>
    %280 = vector.shape_cast %276 : vector<8x128xbf16> to vector<1x8x128xbf16>
    tpu.vector_store %arg4[%277, %c0_117, %c0_118], %280 {strides = array<i32>} : memref<32x8x128xbf16, #tpu.memory_space<vmem>>, vector<1x8x128xbf16>,
    %c23_i32 = arith.constant 23 : i32
    %281 = arith.index_cast %c23_i32 : i32 to index
    %c0_119 = arith.constant 0 : index
    %c0_120 = arith.constant 0 : index
    %282 = vector.load %arg1[%281, %c0_119, %c0_120] : memref<32x8x128xf32, #tpu.memory_space<vmem>>, vector<1x8x128xf32>
    %283 = vector.shape_cast %282 : vector<1x8x128xf32> to vector<8x128xf32>
    %284 = arith.truncf %275 : vector<8x128xf32> to vector<8x128xbf16>
    %cst_121 = arith.constant dense<0.000000e+00> : vector<8x128xf32>
    %285 = tpu.matmul %284, %3, %cst_121 {dimension_numbers = #tpu.dot_dimension_numbers<[1], [0], [0], [1], [0, 0, 1, 1], [], []>} : vector<8x128xbf16>, vector<128x128xbf16>, vector<8x128xf32> -> vector<8x128xf32>
    %286 = arith.addf %283, %285 : vector<8x128xf32>
    %287 = math.tanh %286 : vector<8x128xf32>
    %288 = arith.truncf %287 : vector<8x128xf32> to vector<8x128xbf16>
    %289 = arith.index_cast %c23_i32 : i32 to index
    %c0_122 = arith.constant 0 : index
    %c0_123 = arith.constant 0 : index
    %290 = vector.load %arg4[%289, %c0_122, %c0_123] : memref<32x8x128xbf16, #tpu.memory_space<vmem>>, vector<1x8x128xbf16>
    %291 = vector.shape_cast %290 : vector<1x8x128xbf16> to vector<8x128xbf16>
    %292 = vector.shape_cast %288 : vector<8x128xbf16> to vector<1x8x128xbf16>
    tpu.vector_store %arg4[%289, %c0_122, %c0_123], %292 {strides = array<i32>} : memref<32x8x128xbf16, #tpu.memory_space<vmem>>, vector<1x8x128xbf16>,
    %c24_i32 = arith.constant 24 : i32
    %293 = arith.index_cast %c24_i32 : i32 to index
    %c0_124 = arith.constant 0 : index
    %c0_125 = arith.constant 0 : index
    %294 = vector.load %arg1[%293, %c0_124, %c0_125] : memref<32x8x128xf32, #tpu.memory_space<vmem>>, vector<1x8x128xf32>
    %295 = vector.shape_cast %294 : vector<1x8x128xf32> to vector<8x128xf32>
    %296 = arith.truncf %287 : vector<8x128xf32> to vector<8x128xbf16>
    %cst_126 = arith.constant dense<0.000000e+00> : vector<8x128xf32>
    %297 = tpu.matmul %296, %3, %cst_126 {dimension_numbers = #tpu.dot_dimension_numbers<[1], [0], [0], [1], [0, 0, 1, 1], [], []>} : vector<8x128xbf16>, vector<128x128xbf16>, vector<8x128xf32> -> vector<8x128xf32>
    %298 = arith.addf %295, %297 : vector<8x128xf32>
    %299 = math.tanh %298 : vector<8x128xf32>
    %300 = arith.truncf %299 : vector<8x128xf32> to vector<8x128xbf16>
    %301 = arith.index_cast %c24_i32 : i32 to index
    %c0_127 = arith.constant 0 : index
    %c0_128 = arith.constant 0 : index
    %302 = vector.load %arg4[%301, %c0_127, %c0_128] : memref<32x8x128xbf16, #tpu.memory_space<vmem>>, vector<1x8x128xbf16>
    %303 = vector.shape_cast %302 : vector<1x8x128xbf16> to vector<8x128xbf16>
    %304 = vector.shape_cast %300 : vector<8x128xbf16> to vector<1x8x128xbf16>
    tpu.vector_store %arg4[%301, %c0_127, %c0_128], %304 {strides = array<i32>} : memref<32x8x128xbf16, #tpu.memory_space<vmem>>, vector<1x8x128xbf16>,
    %c25_i32 = arith.constant 25 : i32
    %305 = arith.index_cast %c25_i32 : i32 to index
    %c0_129 = arith.constant 0 : index
    %c0_130 = arith.constant 0 : index
    %306 = vector.load %arg1[%305, %c0_129, %c0_130] : memref<32x8x128xf32, #tpu.memory_space<vmem>>, vector<1x8x128xf32>
    %307 = vector.shape_cast %306 : vector<1x8x128xf32> to vector<8x128xf32>
    %308 = arith.truncf %299 : vector<8x128xf32> to vector<8x128xbf16>
    %cst_131 = arith.constant dense<0.000000e+00> : vector<8x128xf32>
    %309 = tpu.matmul %308, %3, %cst_131 {dimension_numbers = #tpu.dot_dimension_numbers<[1], [0], [0], [1], [0, 0, 1, 1], [], []>} : vector<8x128xbf16>, vector<128x128xbf16>, vector<8x128xf32> -> vector<8x128xf32>
    %310 = arith.addf %307, %309 : vector<8x128xf32>
    %311 = math.tanh %310 : vector<8x128xf32>
    %312 = arith.truncf %311 : vector<8x128xf32> to vector<8x128xbf16>
    %313 = arith.index_cast %c25_i32 : i32 to index
    %c0_132 = arith.constant 0 : index
    %c0_133 = arith.constant 0 : index
    %314 = vector.load %arg4[%313, %c0_132, %c0_133] : memref<32x8x128xbf16, #tpu.memory_space<vmem>>, vector<1x8x128xbf16>
    %315 = vector.shape_cast %314 : vector<1x8x128xbf16> to vector<8x128xbf16>
    %316 = vector.shape_cast %312 : vector<8x128xbf16> to vector<1x8x128xbf16>
    tpu.vector_store %arg4[%313, %c0_132, %c0_133], %316 {strides = array<i32>} : memref<32x8x128xbf16, #tpu.memory_space<vmem>>, vector<1x8x128xbf16>,
    %c26_i32 = arith.constant 26 : i32
    %317 = arith.index_cast %c26_i32 : i32 to index
    %c0_134 = arith.constant 0 : index
    %c0_135 = arith.constant 0 : index
    %318 = vector.load %arg1[%317, %c0_134, %c0_135] : memref<32x8x128xf32, #tpu.memory_space<vmem>>, vector<1x8x128xf32>
    %319 = vector.shape_cast %318 : vector<1x8x128xf32> to vector<8x128xf32>
    %320 = arith.truncf %311 : vector<8x128xf32> to vector<8x128xbf16>
    %cst_136 = arith.constant dense<0.000000e+00> : vector<8x128xf32>
    %321 = tpu.matmul %320, %3, %cst_136 {dimension_numbers = #tpu.dot_dimension_numbers<[1], [0], [0], [1], [0, 0, 1, 1], [], []>} : vector<8x128xbf16>, vector<128x128xbf16>, vector<8x128xf32> -> vector<8x128xf32>
    %322 = arith.addf %319, %321 : vector<8x128xf32>
    %323 = math.tanh %322 : vector<8x128xf32>
    %324 = arith.truncf %323 : vector<8x128xf32> to vector<8x128xbf16>
    %325 = arith.index_cast %c26_i32 : i32 to index
    %c0_137 = arith.constant 0 : index
    %c0_138 = arith.constant 0 : index
    %326 = vector.load %arg4[%325, %c0_137, %c0_138] : memref<32x8x128xbf16, #tpu.memory_space<vmem>>, vector<1x8x128xbf16>
    %327 = vector.shape_cast %326 : vector<1x8x128xbf16> to vector<8x128xbf16>
    %328 = vector.shape_cast %324 : vector<8x128xbf16> to vector<1x8x128xbf16>
    tpu.vector_store %arg4[%325, %c0_137, %c0_138], %328 {strides = array<i32>} : memref<32x8x128xbf16, #tpu.memory_space<vmem>>, vector<1x8x128xbf16>,
    %c27_i32 = arith.constant 27 : i32
    %329 = arith.index_cast %c27_i32 : i32 to index
    %c0_139 = arith.constant 0 : index
    %c0_140 = arith.constant 0 : index
    %330 = vector.load %arg1[%329, %c0_139, %c0_140] : memref<32x8x128xf32, #tpu.memory_space<vmem>>, vector<1x8x128xf32>
    %331 = vector.shape_cast %330 : vector<1x8x128xf32> to vector<8x128xf32>
    %332 = arith.truncf %323 : vector<8x128xf32> to vector<8x128xbf16>
    %cst_141 = arith.constant dense<0.000000e+00> : vector<8x128xf32>
    %333 = tpu.matmul %332, %3, %cst_141 {dimension_numbers = #tpu.dot_dimension_numbers<[1], [0], [0], [1], [0, 0, 1, 1], [], []>} : vector<8x128xbf16>, vector<128x128xbf16>, vector<8x128xf32> -> vector<8x128xf32>
    %334 = arith.addf %331, %333 : vector<8x128xf32>
    %335 = math.tanh %334 : vector<8x128xf32>
    %336 = arith.truncf %335 : vector<8x128xf32> to vector<8x128xbf16>
    %337 = arith.index_cast %c27_i32 : i32 to index
    %c0_142 = arith.constant 0 : index
    %c0_143 = arith.constant 0 : index
    %338 = vector.load %arg4[%337, %c0_142, %c0_143] : memref<32x8x128xbf16, #tpu.memory_space<vmem>>, vector<1x8x128xbf16>
    %339 = vector.shape_cast %338 : vector<1x8x128xbf16> to vector<8x128xbf16>
    %340 = vector.shape_cast %336 : vector<8x128xbf16> to vector<1x8x128xbf16>
    tpu.vector_store %arg4[%337, %c0_142, %c0_143], %340 {strides = array<i32>} : memref<32x8x128xbf16, #tpu.memory_space<vmem>>, vector<1x8x128xbf16>,
    %c28_i32 = arith.constant 28 : i32
    %341 = arith.index_cast %c28_i32 : i32 to index
    %c0_144 = arith.constant 0 : index
    %c0_145 = arith.constant 0 : index
    %342 = vector.load %arg1[%341, %c0_144, %c0_145] : memref<32x8x128xf32, #tpu.memory_space<vmem>>, vector<1x8x128xf32>
    %343 = vector.shape_cast %342 : vector<1x8x128xf32> to vector<8x128xf32>
    %344 = arith.truncf %335 : vector<8x128xf32> to vector<8x128xbf16>
    %cst_146 = arith.constant dense<0.000000e+00> : vector<8x128xf32>
    %345 = tpu.matmul %344, %3, %cst_146 {dimension_numbers = #tpu.dot_dimension_numbers<[1], [0], [0], [1], [0, 0, 1, 1], [], []>} : vector<8x128xbf16>, vector<128x128xbf16>, vector<8x128xf32> -> vector<8x128xf32>
    %346 = arith.addf %343, %345 : vector<8x128xf32>
    %347 = math.tanh %346 : vector<8x128xf32>
    %348 = arith.truncf %347 : vector<8x128xf32> to vector<8x128xbf16>
    %349 = arith.index_cast %c28_i32 : i32 to index
    %c0_147 = arith.constant 0 : index
    %c0_148 = arith.constant 0 : index
    %350 = vector.load %arg4[%349, %c0_147, %c0_148] : memref<32x8x128xbf16, #tpu.memory_space<vmem>>, vector<1x8x128xbf16>
    %351 = vector.shape_cast %350 : vector<1x8x128xbf16> to vector<8x128xbf16>
    %352 = vector.shape_cast %348 : vector<8x128xbf16> to vector<1x8x128xbf16>
    tpu.vector_store %arg4[%349, %c0_147, %c0_148], %352 {strides = array<i32>} : memref<32x8x128xbf16, #tpu.memory_space<vmem>>, vector<1x8x128xbf16>,
    %c29_i32 = arith.constant 29 : i32
    %353 = arith.index_cast %c29_i32 : i32 to index
    %c0_149 = arith.constant 0 : index
    %c0_150 = arith.constant 0 : index
    %354 = vector.load %arg1[%353, %c0_149, %c0_150] : memref<32x8x128xf32, #tpu.memory_space<vmem>>, vector<1x8x128xf32>
    %355 = vector.shape_cast %354 : vector<1x8x128xf32> to vector<8x128xf32>
    %356 = arith.truncf %347 : vector<8x128xf32> to vector<8x128xbf16>
    %cst_151 = arith.constant dense<0.000000e+00> : vector<8x128xf32>
    %357 = tpu.matmul %356, %3, %cst_151 {dimension_numbers = #tpu.dot_dimension_numbers<[1], [0], [0], [1], [0, 0, 1, 1], [], []>} : vector<8x128xbf16>, vector<128x128xbf16>, vector<8x128xf32> -> vector<8x128xf32>
    %358 = arith.addf %355, %357 : vector<8x128xf32>
    %359 = math.tanh %358 : vector<8x128xf32>
    %360 = arith.truncf %359 : vector<8x128xf32> to vector<8x128xbf16>
    %361 = arith.index_cast %c29_i32 : i32 to index
    %c0_152 = arith.constant 0 : index
    %c0_153 = arith.constant 0 : index
    %362 = vector.load %arg4[%361, %c0_152, %c0_153] : memref<32x8x128xbf16, #tpu.memory_space<vmem>>, vector<1x8x128xbf16>
    %363 = vector.shape_cast %362 : vector<1x8x128xbf16> to vector<8x128xbf16>
    %364 = vector.shape_cast %360 : vector<8x128xbf16> to vector<1x8x128xbf16>
    tpu.vector_store %arg4[%361, %c0_152, %c0_153], %364 {strides = array<i32>} : memref<32x8x128xbf16, #tpu.memory_space<vmem>>, vector<1x8x128xbf16>,
    %c30_i32 = arith.constant 30 : i32
    %365 = arith.index_cast %c30_i32 : i32 to index
    %c0_154 = arith.constant 0 : index
    %c0_155 = arith.constant 0 : index
    %366 = vector.load %arg1[%365, %c0_154, %c0_155] : memref<32x8x128xf32, #tpu.memory_space<vmem>>, vector<1x8x128xf32>
    %367 = vector.shape_cast %366 : vector<1x8x128xf32> to vector<8x128xf32>
    %368 = arith.truncf %359 : vector<8x128xf32> to vector<8x128xbf16>
    %cst_156 = arith.constant dense<0.000000e+00> : vector<8x128xf32>
    %369 = tpu.matmul %368, %3, %cst_156 {dimension_numbers = #tpu.dot_dimension_numbers<[1], [0], [0], [1], [0, 0, 1, 1], [], []>} : vector<8x128xbf16>, vector<128x128xbf16>, vector<8x128xf32> -> vector<8x128xf32>
    %370 = arith.addf %367, %369 : vector<8x128xf32>
    %371 = math.tanh %370 : vector<8x128xf32>
    %372 = arith.truncf %371 : vector<8x128xf32> to vector<8x128xbf16>
    %373 = arith.index_cast %c30_i32 : i32 to index
    %c0_157 = arith.constant 0 : index
    %c0_158 = arith.constant 0 : index
    %374 = vector.load %arg4[%373, %c0_157, %c0_158] : memref<32x8x128xbf16, #tpu.memory_space<vmem>>, vector<1x8x128xbf16>
    %375 = vector.shape_cast %374 : vector<1x8x128xbf16> to vector<8x128xbf16>
    %376 = vector.shape_cast %372 : vector<8x128xbf16> to vector<1x8x128xbf16>
    tpu.vector_store %arg4[%373, %c0_157, %c0_158], %376 {strides = array<i32>} : memref<32x8x128xbf16, #tpu.memory_space<vmem>>, vector<1x8x128xbf16>,
    %c31_i32 = arith.constant 31 : i32
    %377 = arith.index_cast %c31_i32 : i32 to index
    %c0_159 = arith.constant 0 : index
    %c0_160 = arith.constant 0 : index
    %378 = vector.load %arg1[%377, %c0_159, %c0_160] : memref<32x8x128xf32, #tpu.memory_space<vmem>>, vector<1x8x128xf32>
    %379 = vector.shape_cast %378 : vector<1x8x128xf32> to vector<8x128xf32>
    %380 = arith.truncf %371 : vector<8x128xf32> to vector<8x128xbf16>
    %cst_161 = arith.constant dense<0.000000e+00> : vector<8x128xf32>
    %381 = tpu.matmul %380, %3, %cst_161 {dimension_numbers = #tpu.dot_dimension_numbers<[1], [0], [0], [1], [0, 0, 1, 1], [], []>} : vector<8x128xbf16>, vector<128x128xbf16>, vector<8x128xf32> -> vector<8x128xf32>
    %382 = arith.addf %379, %381 : vector<8x128xf32>
    %383 = math.tanh %382 : vector<8x128xf32>
    %384 = arith.truncf %383 : vector<8x128xf32> to vector<8x128xbf16>
    %385 = arith.index_cast %c31_i32 : i32 to index
    %c0_162 = arith.constant 0 : index
    %c0_163 = arith.constant 0 : index
    %386 = vector.load %arg4[%385, %c0_162, %c0_163] : memref<32x8x128xbf16, #tpu.memory_space<vmem>>, vector<1x8x128xbf16>
    %387 = vector.shape_cast %386 : vector<1x8x128xbf16> to vector<8x128xbf16>
    %388 = vector.shape_cast %384 : vector<8x128xbf16> to vector<1x8x128xbf16>
    tpu.vector_store %arg4[%385, %c0_162, %c0_163], %388 {strides = array<i32>} : memref<32x8x128xbf16, #tpu.memory_space<vmem>>, vector<1x8x128xbf16>,
    %c32_i32 = arith.constant 32 : i32
    %c0_164 = arith.constant 0 : index
    %c0_165 = arith.constant 0 : index
    %389 = vector.load %arg5[%c0_164, %c0_165] : memref<8x128xf32, #tpu.memory_space<vmem>>, vector<8x128xf32>
    tpu.vector_store %arg5[%c0_164, %c0_165], %383 {strides = array<i32>} : memref<8x128xf32, #tpu.memory_space<vmem>>, vector<8x128xf32>,
    return
  }
  func.func @transform_0(%arg0: i32) -> (i32, i32, i32) {
    %c0_i32 = arith.constant 0 : i32
    %c0_i32_0 = arith.constant 0 : i32
    %c0_i32_1 = arith.constant 0 : i32
    return %arg0, %c0_i32, %c0_i32_0 : i32, i32, i32
  }
  func.func @transform_1(%arg0: i32) -> (i32, i32) {
    %c0_i32 = arith.constant 0 : i32
    %c0_i32_0 = arith.constant 0 : i32
    %c0_i32_1 = arith.constant 0 : i32
    return %c0_i32, %c0_i32_0 : i32, i32
  }
  func.func @transform_2(%arg0: i32) -> (i32, i32) {
    %c0_i32 = arith.constant 0 : i32
    %c0_i32_0 = arith.constant 0 : i32
    %c0_i32_1 = arith.constant 0 : i32
    return %c0_i32, %c0_i32_0 : i32, i32
  }
  func.func @transform_3(%arg0: i32) -> (i32, i32, i32) {
    %c0_i32 = arith.constant 0 : i32
    %c0_i32_0 = arith.constant 0 : i32
    %c0_i32_1 = arith.constant 0 : i32
    return %arg0, %c0_i32, %c0_i32_0 : i32, i32, i32
  }
  func.func @transform_4(%arg0: i32) -> (i32, i32) {
    %c0_i32 = arith.constant 0 : i32
    %c0_i32_0 = arith.constant 0 : i32
    %c0_i32_1 = arith.constant 0 : i32
    return %c0_i32, %c0_i32_0 : i32, i32
  }
}

module attributes {stable_mosaic.version = 11 : i64} {
  func.func @linear_kernel(%arg0: i32, %arg1: i32, %arg2: memref<256x128xbf16, #tpu.memory_space<vmem>>, %arg3: memref<128x256xbf16, #tpu.memory_space<vmem>>, %arg4: memref<1x256xf32, #tpu.memory_space<vmem>>, %arg5: memref<256x256xf32, #tpu.memory_space<vmem>>) attributes {dimension_semantics = [#tpu.dimension_semantics<parallel>, #tpu.dimension_semantics<parallel>], iteration_bounds = array<i64: 1, 1>, scalar_prefetch = 0 : i64, scratch_operands = 0 : i64, tpu.core_type = #tpu.core_type<tc>, window_params = [{transform_indices = @transform_0, window_bounds = array<i64: 256, 128>}, {transform_indices = @transform_1, window_bounds = array<i64: 128, 256>}, {transform_indices = @transform_2, window_bounds = array<i64: 1, 256>}, {transform_indices = @transform_3, window_bounds = array<i64: 256, 256>}]} {
    %c0 = arith.constant 0 : index
    %c0_0 = arith.constant 0 : index
    %0 = vector.load %arg2[%c0, %c0_0] : memref<256x128xbf16, #tpu.memory_space<vmem>>, vector<256x128xbf16>
    %c0_1 = arith.constant 0 : index
    %c0_2 = arith.constant 0 : index
    %1 = vector.load %arg3[%c0_1, %c0_2] : memref<128x256xbf16, #tpu.memory_space<vmem>>, vector<128x256xbf16>
    %cst = arith.constant dense<0.000000e+00> : vector<256x256xf32>
    %2 = tpu.matmul %0, %1, %cst {dimension_numbers = #tpu.dot_dimension_numbers<[1], [0], [0], [1], [0, 0, 1, 1], [], []>} : vector<256x128xbf16>, vector<128x256xbf16>, vector<256x256xf32> -> vector<256x256xf32>
    %c0_3 = arith.constant 0 : index
    %c0_4 = arith.constant 0 : index
    %3 = vector.load %arg4[%c0_3, %c0_4] : memref<1x256xf32, #tpu.memory_space<vmem>>, vector<1x256xf32>
    %4 = vector.broadcast %3 : vector<1x256xf32> to vector<256x256xf32>
    %5 = arith.addf %2, %4 : vector<256x256xf32>
    %c0_5 = arith.constant 0 : index
    %c0_6 = arith.constant 0 : index
    %6 = vector.load %arg5[%c0_5, %c0_6] : memref<256x256xf32, #tpu.memory_space<vmem>>, vector<256x256xf32>
    tpu.vector_store %arg5[%c0_5, %c0_6], %5 {strides = array<i32>} : memref<256x256xf32, #tpu.memory_space<vmem>>, vector<256x256xf32>,
    return
  }
  func.func @transform_0(%arg0: i32, %arg1: i32) -> (i32, i32) {
    %c0_i32 = arith.constant 0 : i32
    %c0_i32_0 = arith.constant 0 : i32
    return %arg0, %c0_i32 : i32, i32
  }
  func.func @transform_1(%arg0: i32, %arg1: i32) -> (i32, i32) {
    %c0_i32 = arith.constant 0 : i32
    %c0_i32_0 = arith.constant 0 : i32
    return %c0_i32, %arg1 : i32, i32
  }
  func.func @transform_2(%arg0: i32, %arg1: i32) -> (i32, i32) {
    %c0_i32 = arith.constant 0 : i32
    %c0_i32_0 = arith.constant 0 : i32
    return %c0_i32, %arg1 : i32, i32
  }
  func.func @transform_3(%arg0: i32, %arg1: i32) -> (i32, i32) {
    %c0_i32 = arith.constant 0 : i32
    return %arg0, %arg1 : i32, i32
  }
}

</mosaic_0001>

<llo_original>
// kernel: rnn_model_forward.3
$region0: #{rnn_model_forward.3}
  #allocation0 [shape = 'u32[]', space=smem, size = 0x4, offset = 0x4, fixed_abs, tag = 'smem constant byte address 0x4 - core index']
  #allocation1 [shape = 'u32[144,128]{1,0:T(1,128)}', space=vmem, size = 0x12000, scoped, tag = 'internal scratch']
  %s0 = inlined_call_operand.vmem [shape: bf16[256,128], index: 0, kind: input, shape index: {}]
  %s1 = inlined_call_operand.vmem [shape: bf16[128,128], index: 1, kind: input, shape index: {}]
  %s2 = inlined_call_operand.vmem [shape: f32[1,128], index: 2, kind: input, shape index: {}]
  %s3 = inlined_call_operand.vmem [shape: f32[256,128], index: 3, kind: output, shape index: {}]
  %s4 = sld [smem:[#allocation0]]
  $region22: #{rnn_model_forward.3} parent=0
    _
  %s6 = ssub.s32 1, %s4
  %s7 = scalar_select 0, %s6, %s4
  // Predicated region
  $region2: #{rnn_model_forward.3} parent=0 // pred_check
    _
  $region3: #{rnn_model_forward.3} parent=0 // pred_check_branch
    %9 = sbr.rel (0) target = $region5
  $region4: #{rnn_model_forward.3} parent=0 // pred_region
    _
  $region5: #{rnn_model_forward.3} parent=0 // pred_fallthru
    _
  // Predicated region
  $region6: #{rnn_model_forward.3} parent=0 // pred_check
    _
  $region7: #{rnn_model_forward.3} parent=0 // pred_check_branch
    %11 = sbr.rel (0) target = $region9
  $region8: #{rnn_model_forward.3} parent=0 // pred_region
    _
  $region9: #{rnn_model_forward.3} parent=0 // pred_fallthru
    _
  // Predicated region
  $region10: #{rnn_model_forward.3} parent=0 // pred_check
    _
  $region11: #{rnn_model_forward.3} parent=0 // pred_check_branch
    %13 = sbr.rel (0) target = $region13
  $region12: #{rnn_model_forward.3} parent=0 // pred_region
    _
  $region13: #{rnn_model_forward.3} parent=0 // pred_fallthru
    _
  %v15 = vld [vmem:[%s0] sm:$0xf]
  %v16 = vld [vmem:[%s0 + $0x4] sm:$0xf]
  %v17 = vld [vmem:[%s0 + $0x8] sm:$0xf]
  %v18 = vld [vmem:[%s0 + $0xc] sm:$0xf]
  %v19 = vld [vmem:[%s0 + $0x10] sm:$0xf]
  %v20 = vld [vmem:[%s0 + $0x14] sm:$0xf]
  %v21 = vld [vmem:[%s0 + $0x18] sm:$0xf]
  %v22 = vld [vmem:[%s0 + $0x1c] sm:$0xf]
  %v23 = vld [vmem:[%s0 + $0x20] sm:$0xf]
  %v24 = vld [vmem:[%s0 + $0x24] sm:$0xf]
  %v25 = vld [vmem:[%s0 + $0x28] sm:$0xf]
  %v26 = vld [vmem:[%s0 + $0x2c] sm:$0xf]
  %v27 = vld [vmem:[%s0 + $0x30] sm:$0xf]
  %v28 = vld [vmem:[%s0 + $0x34] sm:$0xf]
  %v29 = vld [vmem:[%s0 + $0x38] sm:$0xf]
  %v30 = vld [vmem:[%s0 + $0x3c] sm:$0xf]
  %v31 = vld [vmem:[%s0 + $0x40] sm:$0xf]
  %v32 = vld [vmem:[%s0 + $0x44] sm:$0xf]
  %v33 = vld [vmem:[%s0 + $0x48] sm:$0xf]
  %v34 = vld [vmem:[%s0 + $0x4c] sm:$0xf]
  %v35 = vld [vmem:[%s0 + $0x50] sm:$0xf]
  %v36 = vld [vmem:[%s0 + $0x54] sm:$0xf]
  %v37 = vld [vmem:[%s0 + $0x58] sm:$0xf]
  %v38 = vld [vmem:[%s0 + $0x5c] sm:$0xf]
  %v39 = vld [vmem:[%s0 + $0x60] sm:$0xf]
  %v40 = vld [vmem:[%s0 + $0x64] sm:$0xf]
  %v41 = vld [vmem:[%s0 + $0x68] sm:$0xf]
  %v42 = vld [vmem:[%s0 + $0x6c] sm:$0xf]
  %v43 = vld [vmem:[%s0 + $0x70] sm:$0xf]
  %v44 = vld [vmem:[%s0 + $0x74] sm:$0xf]
  %v45 = vld [vmem:[%s0 + $0x78] sm:$0xf]
  %v46 = vld [vmem:[%s0 + $0x7c] sm:$0xf]
  %v47 = vld [vmem:[%s1] sm:$0xf]
  %v48 = vld [vmem:[%s1 + $0x4] sm:$0xf]
  %v49 = vld [vmem:[%s1 + $0x8] sm:$0xf]
  %v50 = vld [vmem:[%s1 + $0xc] sm:$0xf]
  %v51 = vld [vmem:[%s1 + $0x10] sm:$0xf]
  %v52 = vld [vmem:[%s1 + $0x14] sm:$0xf]
  %v53 = vld [vmem:[%s1 + $0x18] sm:$0xf]
  %v54 = vld [vmem:[%s1 + $0x1c] sm:$0xf]
  %v55 = vld [vmem:[%s1 + $0x20] sm:$0xf]
  %v56 = vld [vmem:[%s1 + $0x24] sm:$0xf]
  %v57 = vld [vmem:[%s1 + $0x28] sm:$0xf]
  %v58 = vld [vmem:[%s1 + $0x2c] sm:$0xf]
  %v59 = vld [vmem:[%s1 + $0x30] sm:$0xf]
  %v60 = vld [vmem:[%s1 + $0x34] sm:$0xf]
  %v61 = vld [vmem:[%s1 + $0x38] sm:$0xf]
  %v62 = vld [vmem:[%s1 + $0x3c] sm:$0xf]
  %v63 = vld [vmem:[%s2] sm:$0x1]
  %v65 = vlaneseq
  %v66 = vshrl.u32 %v65, 7
  %v67 = vsub.s32 0, %v66
  %v68 = vrot.slane %v63, %v67
  %v102 = vunpack.c.l.b16 %v15
  %v103 = vunpack.c.l.b16 %v16
  %v104 = vunpack.c.l.b16 %v17
  %v105 = vunpack.c.l.b16 %v18
  %v106 = vunpack.c.l.b16 %v19
  %v107 = vunpack.c.l.b16 %v20
  %v108 = vunpack.c.l.b16 %v21
  %v109 = vunpack.c.l.b16 %v22
  %v110 = vunpack.c.l.b16 %v23
  %v111 = vunpack.c.l.b16 %v24
  %v112 = vunpack.c.l.b16 %v25
  %v113 = vunpack.c.l.b16 %v26
  %v114 = vunpack.c.l.b16 %v27
  %v115 = vunpack.c.l.b16 %v28
  %v116 = vunpack.c.l.b16 %v29
  %v117 = vunpack.c.l.b16 %v30
  %v118 = vunpack.c.l.b16 %v31
  %v119 = vunpack.c.l.b16 %v32
  %v120 = vunpack.c.l.b16 %v33
  %v121 = vunpack.c.l.b16 %v34
  %v122 = vunpack.c.l.b16 %v35
  %v123 = vunpack.c.l.b16 %v36
  %v124 = vunpack.c.l.b16 %v37
  %v125 = vunpack.c.l.b16 %v38
  %v126 = vunpack.c.l.b16 %v39
  %v127 = vunpack.c.l.b16 %v40
  %v128 = vunpack.c.l.b16 %v41
  %v129 = vunpack.c.l.b16 %v42
  %v130 = vunpack.c.l.b16 %v43
  %v131 = vunpack.c.l.b16 %v44
  %v132 = vunpack.c.l.b16 %v45
  %v133 = vunpack.c.l.b16 %v46
  %v134 = vpack.c.b16 %v103, %v102
  %v135 = vpack.c.b16 %v105, %v104
  %v136 = vpack.c.b16 %v107, %v106
  %v137 = vpack.c.b16 %v109, %v108
  %v138 = vpack.c.b16 %v111, %v110
  %v139 = vpack.c.b16 %v113, %v112
  %v140 = vpack.c.b16 %v115, %v114
  %v141 = vpack.c.b16 %v117, %v116
  %v142 = vpack.c.b16 %v119, %v118
  %v143 = vpack.c.b16 %v121, %v120
  %v144 = vpack.c.b16 %v123, %v122
  %v145 = vpack.c.b16 %v125, %v124
  %v146 = vpack.c.b16 %v127, %v126
  %v147 = vpack.c.b16 %v129, %v128
  %v148 = vpack.c.b16 %v131, %v130
  %v149 = vpack.c.b16 %v133, %v132
  %v182 = vunpack.c.l.b16 %v47
  %v183 = vunpack.c.l.b16 %v48
  %v184 = vunpack.c.l.b16 %v49
  %v185 = vunpack.c.l.b16 %v50
  %v186 = vunpack.c.l.b16 %v51
  %v187 = vunpack.c.l.b16 %v52
  %v188 = vunpack.c.l.b16 %v53
  %v189 = vunpack.c.l.b16 %v54
  %v190 = vunpack.c.l.b16 %v55
  %v191 = vunpack.c.l.b16 %v56
  %v192 = vunpack.c.l.b16 %v57
  %v193 = vunpack.c.l.b16 %v58
  %v194 = vunpack.c.l.b16 %v59
  %v195 = vunpack.c.l.b16 %v60
  %v196 = vunpack.c.l.b16 %v61
  %v197 = vunpack.c.l.b16 %v62
  %v198 = vpack.c.b16 %v183, %v182
  %v199 = vpack.c.b16 %v185, %v184
  %v200 = vpack.c.b16 %v187, %v186
  %v201 = vpack.c.b16 %v189, %v188
  %v202 = vpack.c.b16 %v191, %v190
  %v203 = vpack.c.b16 %v193, %v192
  %v204 = vpack.c.b16 %v195, %v194
  %v205 = vpack.c.b16 %v197, %v196
  %214 = vmatprep.subr.bf16.mxu0 0
  %215 = vmatpush1.bf16.msra.mxu0 %v198
  %216 = vmatprep.subr.bf16.mxu0 0
  %217 = vmatpush1.bf16.msra.mxu0 %v199
  %218 = vmatprep.subr.bf16.mxu0 0
  %219 = vmatpush1.bf16.msra.mxu0 %v200
  %220 = vmatprep.subr.bf16.mxu0 0
  %221 = vmatpush1.bf16.msra.mxu0 %v201
  %222 = vmatprep.subr.bf16.mxu0 0
  %223 = vmatpush1.bf16.msra.mxu0 %v202
  %224 = vmatprep.subr.bf16.mxu0 0
  %225 = vmatpush1.bf16.msra.mxu0 %v203
  %226 = vmatprep.subr.bf16.mxu0 0
  %227 = vmatpush1.bf16.msra.mxu0 %v204
  %228 = vmatprep.subr.bf16.mxu0 0
  %229 = vmatpush1.bf16.msra.mxu0 %v205
  %230 = vmatprep.subr.bf16.mxu0 0
  %231 = vmatpush1.bf16.msra.mxu0 0
  %232 = vmatprep.subr.bf16.mxu0 0
  %233 = vmatpush1.bf16.msra.mxu0 0
  %234 = vmatprep.subr.bf16.mxu0 0
  %235 = vmatpush1.bf16.msra.mxu0 0
  %236 = vmatprep.subr.bf16.mxu0 0
  %237 = vmatpush1.bf16.msra.mxu0 0
  %238 = vmatprep.subr.bf16.mxu0 0
  %239 = vmatpush1.bf16.msra.mxu0 0
  %240 = vmatprep.subr.bf16.mxu0 0
  %241 = vmatpush1.bf16.msra.mxu0 0
  %242 = vmatprep.subr.bf16.mxu0 0
  %243 = vmatpush1.bf16.msra.mxu0 0
  %244 = vmatprep.subr.bf16.mxu0 0
  %245 = vmatpush1.bf16.msra.mxu0 0
  %246 = vmatprep.mubr.bf16.mxu0 0
  %247 = vmatmul.mubr.bf16.gmra.mrb[0].mxu0 %v134
  %v248 = vpop.f32.mrb[0].mxu0
  %v249 = vadd.f32 %v68, %v248
  %v250 = vpop.f32.mrb[0].mxu0
  %v251 = vpop.f32.mrb[0].mxu0
  %v252 = vadd.f32 %v68, %v251
  %v253 = vpop.f32.mrb[0].mxu0
  %254 = vmatprep.mubr.bf16.mxu0 0
  %255 = vmatmul.mubr.bf16.gmra.mrb[0].mxu0 %v135
  %v256 = vpop.f32.mrb[0].mxu0
  %v257 = vadd.f32 %v68, %v256
  %v258 = vpop.f32.mrb[0].mxu0
  %v259 = vpop.f32.mrb[0].mxu0
  %v260 = vadd.f32 %v68, %v259
  %v261 = vpop.f32.mrb[0].mxu0
  %262 = vmatprep.mubr.bf16.mxu0 0
  %263 = vmatmul.mubr.bf16.gmra.mrb[0].mxu0 %v136
  %v264 = vpop.f32.mrb[0].mxu0
  %v265 = vadd.f32 %v68, %v264
  %v266 = vpop.f32.mrb[0].mxu0
  %v267 = vpop.f32.mrb[0].mxu0
  %v268 = vadd.f32 %v68, %v267
  %v269 = vpop.f32.mrb[0].mxu0
  %270 = vmatprep.mubr.bf16.mxu0 0
  %271 = vmatmul.mubr.bf16.gmra.mrb[0].mxu0 %v137
  %v272 = vpop.f32.mrb[0].mxu0
  %v273 = vadd.f32 %v68, %v272
  %v274 = vpop.f32.mrb[0].mxu0
  %v275 = vpop.f32.mrb[0].mxu0
  %v276 = vadd.f32 %v68, %v275
  %v277 = vpop.f32.mrb[0].mxu0
  %278 = vmatprep.mubr.bf16.mxu0 0
  %279 = vmatmul.mubr.bf16.gmra.mrb[0].mxu0 %v138
  %v280 = vpop.f32.mrb[0].mxu0
  %v281 = vadd.f32 %v68, %v280
  %v282 = vpop.f32.mrb[0].mxu0
  %v283 = vpop.f32.mrb[0].mxu0
  %v284 = vadd.f32 %v68, %v283
  %v285 = vpop.f32.mrb[0].mxu0
  %286 = vmatprep.mubr.bf16.mxu0 0
  %287 = vmatmul.mubr.bf16.gmra.mrb[0].mxu0 %v139
  %v288 = vpop.f32.mrb[0].mxu0
  %v289 = vadd.f32 %v68, %v288
  %v290 = vpop.f32.mrb[0].mxu0
  %v291 = vpop.f32.mrb[0].mxu0
  %v292 = vadd.f32 %v68, %v291
  %v293 = vpop.f32.mrb[0].mxu0
  %294 = vmatprep.mubr.bf16.mxu0 0
  %295 = vmatmul.mubr.bf16.gmra.mrb[0].mxu0 %v140
  %v296 = vpop.f32.mrb[0].mxu0
  %v297 = vadd.f32 %v68, %v296
  %v298 = vpop.f32.mrb[0].mxu0
  %v299 = vpop.f32.mrb[0].mxu0
  %v300 = vadd.f32 %v68, %v299
  %v301 = vpop.f32.mrb[0].mxu0
  %302 = vmatprep.mubr.bf16.mxu0 0
  %303 = vmatmul.mubr.bf16.gmra.mrb[0].mxu0 %v141
  %v304 = vpop.f32.mrb[0].mxu0
  %v305 = vadd.f32 %v68, %v304
  %v306 = vpop.f32.mrb[0].mxu0
  %v307 = vpop.f32.mrb[0].mxu0
  %v308 = vadd.f32 %v68, %v307
  %v309 = vpop.f32.mrb[0].mxu0
  %310 = vmatprep.mubr.bf16.mxu0 0
  %311 = vmatmul.mubr.bf16.gmra.mrb[0].mxu0 %v142
  %v312 = vpop.f32.mrb[0].mxu0
  %v313 = vadd.f32 %v68, %v312
  %v314 = vpop.f32.mrb[0].mxu0
  %v315 = vpop.f32.mrb[0].mxu0
  %v316 = vadd.f32 %v68, %v315
  %v317 = vpop.f32.mrb[0].mxu0
  %318 = vmatprep.mubr.bf16.mxu0 0
  %319 = vmatmul.mubr.bf16.gmra.mrb[0].mxu0 %v143
  %v320 = vpop.f32.mrb[0].mxu0
  %v321 = vadd.f32 %v68, %v320
  %v322 = vpop.f32.mrb[0].mxu0
  %v323 = vpop.f32.mrb[0].mxu0
  %v324 = vadd.f32 %v68, %v323
  %v325 = vpop.f32.mrb[0].mxu0
  %326 = vmatprep.mubr.bf16.mxu0 0
  %327 = vmatmul.mubr.bf16.gmra.mrb[0].mxu0 %v144
  %v328 = vpop.f32.mrb[0].mxu0
  %v329 = vadd.f32 %v68, %v328
  %v330 = vpop.f32.mrb[0].mxu0
  %v331 = vpop.f32.mrb[0].mxu0
  %v332 = vadd.f32 %v68, %v331
  %v333 = vpop.f32.mrb[0].mxu0
  %334 = vmatprep.mubr.bf16.mxu0 0
  %335 = vmatmul.mubr.bf16.gmra.mrb[0].mxu0 %v145
  %v336 = vpop.f32.mrb[0].mxu0
  %v337 = vadd.f32 %v68, %v336
  %v338 = vpop.f32.mrb[0].mxu0
  %v339 = vpop.f32.mrb[0].mxu0
  %v340 = vadd.f32 %v68, %v339
  %v341 = vpop.f32.mrb[0].mxu0
  %342 = vmatprep.mubr.bf16.mxu0 0
  %343 = vmatmul.mubr.bf16.gmra.mrb[0].mxu0 %v146
  %v344 = vpop.f32.mrb[0].mxu0
  %v345 = vadd.f32 %v68, %v344
  %v346 = vpop.f32.mrb[0].mxu0
  %v347 = vpop.f32.mrb[0].mxu0
  %v348 = vadd.f32 %v68, %v347
  %v349 = vpop.f32.mrb[0].mxu0
  %350 = vmatprep.mubr.bf16.mxu0 0
  %351 = vmatmul.mubr.bf16.gmra.mrb[0].mxu0 %v147
  %v352 = vpop.f32.mrb[0].mxu0
  %v353 = vadd.f32 %v68, %v352
  %v354 = vpop.f32.mrb[0].mxu0
  %v355 = vpop.f32.mrb[0].mxu0
  %v356 = vadd.f32 %v68, %v355
  %v357 = vpop.f32.mrb[0].mxu0
  %358 = vmatprep.mubr.bf16.mxu0 0
  %359 = vmatmul.mubr.bf16.gmra.mrb[0].mxu0 %v148
  %v360 = vpop.f32.mrb[0].mxu0
  %v361 = vadd.f32 %v68, %v360
  %v362 = vpop.f32.mrb[0].mxu0
  %v363 = vpop.f32.mrb[0].mxu0
  %v364 = vadd.f32 %v68, %v363
  %v365 = vpop.f32.mrb[0].mxu0
  %366 = vmatprep.mubr.bf16.mxu0 0
  %367 = vmatmul.mubr.bf16.gmra.mrb[0].mxu0 %v149
  %v368 = vpop.f32.mrb[0].mxu0
  %v369 = vadd.f32 %v68, %v368
  %v370 = vpop.f32.mrb[0].mxu0
  %v371 = vpop.f32.mrb[0].mxu0
  %v372 = vadd.f32 %v68, %v371
  %v373 = vpop.f32.mrb[0].mxu0
  %374 = vdwg.mxu0
  %375 = vst [vmem:[%s3] sm:$0xff] %v249
  %376 = vst [vmem:[%s3 + $0x8] sm:$0xff] %v252
  %377 = vst [vmem:[%s3 + $0x10] sm:$0xff] %v257
  %378 = vst [vmem:[%s3 + $0x18] sm:$0xff] %v260
  %379 = vst [vmem:[%s3 + $0x20] sm:$0xff] %v265
  %380 = vst [vmem:[%s3 + $0x28] sm:$0xff] %v268
  %381 = vst [vmem:[%s3 + $0x30] sm:$0xff] %v273
  %382 = vst [vmem:[%s3 + $0x38] sm:$0xff] %v276
  %383 = vst [vmem:[%s3 + $0x40] sm:$0xff] %v281
  %384 = vst [vmem:[%s3 + $0x48] sm:$0xff] %v284
  %385 = vst [vmem:[%s3 + $0x50] sm:$0xff] %v289
  %386 = vst [vmem:[%s3 + $0x58] sm:$0xff] %v292
  %387 = vst [vmem:[%s3 + $0x60] sm:$0xff] %v297
  %388 = vst [vmem:[%s3 + $0x68] sm:$0xff] %v300
  %389 = vst [vmem:[%s3 + $0x70] sm:$0xff] %v305
  %390 = vst [vmem:[%s3 + $0x78] sm:$0xff] %v308
  %391 = vst [vmem:[%s3 + $0x80] sm:$0xff] %v313
  %392 = vst [vmem:[%s3 + $0x88] sm:$0xff] %v316
  %393 = vst [vmem:[%s3 + $0x90] sm:$0xff] %v321
  %394 = vst [vmem:[%s3 + $0x98] sm:$0xff] %v324
  %395 = vst [vmem:[%s3 + $0xa0] sm:$0xff] %v329
  %396 = vst [vmem:[%s3 + $0xa8] sm:$0xff] %v332
  %397 = vst [vmem:[%s3 + $0xb0] sm:$0xff] %v337
  %398 = vst [vmem:[%s3 + $0xb8] sm:$0xff] %v340
  %399 = vst [vmem:[%s3 + $0xc0] sm:$0xff] %v345
  %400 = vst [vmem:[%s3 + $0xc8] sm:$0xff] %v348
  %401 = vst [vmem:[%s3 + $0xd0] sm:$0xff] %v353
  %402 = vst [vmem:[%s3 + $0xd8] sm:$0xff] %v356
  %403 = vst [vmem:[%s3 + $0xe0] sm:$0xff] %v361
  %404 = vst [vmem:[%s3 + $0xe8] sm:$0xff] %v364
  %405 = vst [vmem:[%s3 + $0xf0] sm:$0xff] %v369
  %406 = vst [vmem:[%s3 + $0xf8] sm:$0xff] %v372
  // Predicated region
  $region14: #{rnn_model_forward.3} parent=0 // pred_check
    _
  $region15: #{rnn_model_forward.3} parent=0 // pred_check_branch
    %408 = sbr.rel (0) target = $region17
  $region16: #{rnn_model_forward.3} parent=0 // pred_region
    _
  $region17: #{rnn_model_forward.3} parent=0 // pred_fallthru
    _
  // Predicated region
  $region18: #{rnn_model_forward.3} parent=0 // pred_check
    _
  $region19: #{rnn_model_forward.3} parent=0 // pred_check_branch
    %410 = sbr.rel (0) target = $region21
  $region20: #{rnn_model_forward.3} parent=0 // pred_region
    _
  $region21: #{rnn_model_forward.3} parent=0 // pred_fallthru
    _

// kernel: rnn_model_forward.5
$region0: #{rnn_model_forward.5}
  #allocation0 [shape = 'u32[]', space=smem, size = 0x4, offset = 0x4, fixed_abs, tag = 'smem constant byte address 0x4 - core index']
  #allocation1 [shape = 'u32[144,128]{1,0:T(1,128)}', space=vmem, size = 0x12000, scoped, tag = 'internal scratch']
  %s0 = inlined_call_operand.vmem [shape: bf16[256,128], index: 0, kind: input, shape index: {}]
  %s1 = inlined_call_operand.vmem [shape: bf16[128,256], index: 1, kind: input, shape index: {}]
  %s2 = inlined_call_operand.vmem [shape: f32[1,256], index: 2, kind: input, shape index: {}]
  %s3 = inlined_call_operand.hbm [shape: f32[256,256], index: 3, kind: output, shape index: {}]
  %s4 = sld [smem:[#allocation0]]
  $region22: #{rnn_model_forward.5} parent=0
    _
  %s6 = ssub.s32 1, %s4
  %s7 = scalar_select 0, %s6, %s4
  $region1: #{rnn_model_forward.5} parent=0
    #allocation2 [shape = 'u8[262144]{0}', space=vmem, size = 0x40000, scoped, tag = 'output window, operand 0, single buffered']
    #allocation3 [shape = 's32[1]{0}', space=sflag, size = 0x4, scoped, tag = 'scoped memory for rnn_model_forward.5']
    %8 = vsyncpa [#allocation3], 0
    // Predicated region
    $region2: #{rnn_model_forward.5} parent=1 // pred_check
      _
    $region3: #{rnn_model_forward.5} parent=1 // pred_check_branch
      %10 = sbr.rel (0) target = $region5
    $region4: #{rnn_model_forward.5} parent=1 // pred_region
      _
    $region5: #{rnn_model_forward.5} parent=1 // pred_fallthru
      _
    // Predicated region
    $region6: #{rnn_model_forward.5} parent=1 // pred_check
      _
    $region7: #{rnn_model_forward.5} parent=1 // pred_check_branch
      %12 = sbr.rel (0) target = $region9
    $region8: #{rnn_model_forward.5} parent=1 // pred_region
      _
    $region9: #{rnn_model_forward.5} parent=1 // pred_fallthru
      _
    // Predicated region
    $region10: #{rnn_model_forward.5} parent=1 // pred_check
      _
    $region11: #{rnn_model_forward.5} parent=1 // pred_check_branch
      %14 = sbr.rel (0) target = $region13
    $region12: #{rnn_model_forward.5} parent=1 // pred_region
      _
    $region13: #{rnn_model_forward.5} parent=1 // pred_fallthru
      _
    %v16 = vld [vmem:[%s0] sm:$0xf]
    %v17 = vld [vmem:[%s0 + $0x4] sm:$0xf]
    %v18 = vld [vmem:[%s0 + $0x8] sm:$0xf]
    %v19 = vld [vmem:[%s0 + $0xc] sm:$0xf]
    %v20 = vld [vmem:[%s0 + $0x10] sm:$0xf]
    %v21 = vld [vmem:[%s0 + $0x14] sm:$0xf]
    %v22 = vld [vmem:[%s0 + $0x18] sm:$0xf]
    %v23 = vld [vmem:[%s0 + $0x1c] sm:$0xf]
    %v24 = vld [vmem:[%s0 + $0x20] sm:$0xf]
    %v25 = vld [vmem:[%s0 + $0x24] sm:$0xf]
    %v26 = vld [vmem:[%s0 + $0x28] sm:$0xf]
    %v27 = vld [vmem:[%s0 + $0x2c] sm:$0xf]
    %v28 = vld [vmem:[%s0 + $0x30] sm:$0xf]
    %v29 = vld [vmem:[%s0 + $0x34] sm:$0xf]
    %v30 = vld [vmem:[%s0 + $0x38] sm:$0xf]
    %v31 = vld [vmem:[%s0 + $0x3c] sm:$0xf]
    %v32 = vld [vmem:[%s0 + $0x40] sm:$0xf]
    %v33 = vld [vmem:[%s0 + $0x44] sm:$0xf]
    %v34 = vld [vmem:[%s0 + $0x48] sm:$0xf]
    %v35 = vld [vmem:[%s0 + $0x4c] sm:$0xf]
    %v36 = vld [vmem:[%s0 + $0x50] sm:$0xf]
    %v37 = vld [vmem:[%s0 + $0x54] sm:$0xf]
    %v38 = vld [vmem:[%s0 + $0x58] sm:$0xf]
    %v39 = vld [vmem:[%s0 + $0x5c] sm:$0xf]
    %v40 = vld [vmem:[%s0 + $0x60] sm:$0xf]
    %v41 = vld [vmem:[%s0 + $0x64] sm:$0xf]
    %v42 = vld [vmem:[%s0 + $0x68] sm:$0xf]
    %v43 = vld [vmem:[%s0 + $0x6c] sm:$0xf]
    %v44 = vld [vmem:[%s0 + $0x70] sm:$0xf]
    %v45 = vld [vmem:[%s0 + $0x74] sm:$0xf]
    %v46 = vld [vmem:[%s0 + $0x78] sm:$0xf]
    %v47 = vld [vmem:[%s0 + $0x7c] sm:$0xf]
    %v48 = vld [vmem:[%s1] sm:$0xff]
    %v49 = vld [vmem:[%s1 + $0x8] sm:$0xff]
    %v50 = vld [vmem:[%s1 + $0x10] sm:$0xff]
    %v51 = vld [vmem:[%s1 + $0x18] sm:$0xff]
    %v52 = vld [vmem:[%s1 + $0x20] sm:$0xff]
    %v53 = vld [vmem:[%s1 + $0x28] sm:$0xff]
    %v54 = vld [vmem:[%s1 + $0x30] sm:$0xff]
    %v55 = vld [vmem:[%s1 + $0x38] sm:$0xff]
    %v56 = vld [vmem:[%s1 + $0x40] sm:$0xff]
    %v57 = vld [vmem:[%s1 + $0x48] sm:$0xff]
    %v58 = vld [vmem:[%s1 + $0x50] sm:$0xff]
    %v59 = vld [vmem:[%s1 + $0x58] sm:$0xff]
    %v60 = vld [vmem:[%s1 + $0x60] sm:$0xff]
    %v61 = vld [vmem:[%s1 + $0x68] sm:$0xff]
    %v62 = vld [vmem:[%s1 + $0x70] sm:$0xff]
    %v63 = vld [vmem:[%s1 + $0x78] sm:$0xff]
    %v64 = vld [vmem:[%s2] sm:$0x3]
    %v66 = vlaneseq
    %v67 = vshrl.u32 %v66, 7
    %v68 = vsub.s32 0, %v67
    %v69 = vrot.slane %v64, %v68
    %v70 = vlaneseq
    %v71 = vshrl.u32 %v70, 7
    %v72 = vsub.s32 1, %v71
    %v73 = vrot.slane %v64, %v72
    %v108 = vunpack.c.l.b16 %v16
    %v109 = vunpack.c.l.b16 %v17
    %v110 = vunpack.c.l.b16 %v18
    %v111 = vunpack.c.l.b16 %v19
    %v112 = vunpack.c.l.b16 %v20
    %v113 = vunpack.c.l.b16 %v21
    %v114 = vunpack.c.l.b16 %v22
    %v115 = vunpack.c.l.b16 %v23
    %v116 = vunpack.c.l.b16 %v24
    %v117 = vunpack.c.l.b16 %v25
    %v118 = vunpack.c.l.b16 %v26
    %v119 = vunpack.c.l.b16 %v27
    %v120 = vunpack.c.l.b16 %v28
    %v121 = vunpack.c.l.b16 %v29
    %v122 = vunpack.c.l.b16 %v30
    %v123 = vunpack.c.l.b16 %v31
    %v124 = vunpack.c.l.b16 %v32
    %v125 = vunpack.c.l.b16 %v33
    %v126 = vunpack.c.l.b16 %v34
    %v127 = vunpack.c.l.b16 %v35
    %v128 = vunpack.c.l.b16 %v36
    %v129 = vunpack.c.l.b16 %v37
    %v130 = vunpack.c.l.b16 %v38
    %v131 = vunpack.c.l.b16 %v39
    %v132 = vunpack.c.l.b16 %v40
    %v133 = vunpack.c.l.b16 %v41
    %v134 = vunpack.c.l.b16 %v42
    %v135 = vunpack.c.l.b16 %v43
    %v136 = vunpack.c.l.b16 %v44
    %v137 = vunpack.c.l.b16 %v45
    %v138 = vunpack.c.l.b16 %v46
    %v139 = vunpack.c.l.b16 %v47
    %v140 = vpack.c.b16 %v109, %v108
    %v141 = vpack.c.b16 %v111, %v110
    %v142 = vpack.c.b16 %v113, %v112
    %v143 = vpack.c.b16 %v115, %v114
    %v144 = vpack.c.b16 %v117, %v116
    %v145 = vpack.c.b16 %v119, %v118
    %v146 = vpack.c.b16 %v121, %v120
    %v147 = vpack.c.b16 %v123, %v122
    %v148 = vpack.c.b16 %v125, %v124
    %v149 = vpack.c.b16 %v127, %v126
    %v150 = vpack.c.b16 %v129, %v128
    %v151 = vpack.c.b16 %v131, %v130
    %v152 = vpack.c.b16 %v133, %v132
    %v153 = vpack.c.b16 %v135, %v134
    %v154 = vpack.c.b16 %v137, %v136
    %v155 = vpack.c.b16 %v139, %v138
    %v188 = vunpack.c.l.b16 %v48
    %v189 = vunpack.c.h.b16 %v48
    %v190 = vunpack.c.l.b16 %v49
    %v191 = vunpack.c.h.b16 %v49
    %v192 = vunpack.c.l.b16 %v50
    %v193 = vunpack.c.h.b16 %v50
    %v194 = vunpack.c.l.b16 %v51
    %v195 = vunpack.c.h.b16 %v51
    %v196 = vunpack.c.l.b16 %v52
    %v197 = vunpack.c.h.b16 %v52
    %v198 = vunpack.c.l.b16 %v53
    %v199 = vunpack.c.h.b16 %v53
    %v200 = vunpack.c.l.b16 %v54
    %v201 = vunpack.c.h.b16 %v54
    %v202 = vunpack.c.l.b16 %v55
    %v203 = vunpack.c.h.b16 %v55
    %v204 = vunpack.c.l.b16 %v56
    %v205 = vunpack.c.h.b16 %v56
    %v206 = vunpack.c.l.b16 %v57
    %v207 = vunpack.c.h.b16 %v57
    %v208 = vunpack.c.l.b16 %v58
    %v209 = vunpack.c.h.b16 %v58
    %v210 = vunpack.c.l.b16 %v59
    %v211 = vunpack.c.h.b16 %v59
    %v212 = vunpack.c.l.b16 %v60
    %v213 = vunpack.c.h.b16 %v60
    %v214 = vunpack.c.l.b16 %v61
    %v215 = vunpack.c.h.b16 %v61
    %v216 = vunpack.c.l.b16 %v62
    %v217 = vunpack.c.h.b16 %v62
    %v218 = vunpack.c.l.b16 %v63
    %v219 = vunpack.c.h.b16 %v63
    %v220 = vpack.c.b16 %v190, %v188
    %v221 = vpack.c.b16 %v191, %v189
    %v222 = vpack.c.b16 %v194, %v192
    %v223 = vpack.c.b16 %v195, %v193
    %v224 = vpack.c.b16 %v198, %v196
    %v225 = vpack.c.b16 %v199, %v197
    %v226 = vpack.c.b16 %v202, %v200
    %v227 = vpack.c.b16 %v203, %v201
    %v228 = vpack.c.b16 %v206, %v204
    %v229 = vpack.c.b16 %v207, %v205
    %v230 = vpack.c.b16 %v210, %v208
    %v231 = vpack.c.b16 %v211, %v209
    %v232 = vpack.c.b16 %v214, %v212
    %v233 = vpack.c.b16 %v215, %v213
    %v234 = vpack.c.b16 %v218, %v216
    %v235 = vpack.c.b16 %v219, %v217
    %252 = vmatprep.subr.bf16.mxu0 %v221
    %253 = vmatpush1.bf16.msra.mxu0 %v220
    %254 = vmatprep.subr.bf16.mxu0 %v223
    %255 = vmatpush1.bf16.msra.mxu0 %v222
    %256 = vmatprep.subr.bf16.mxu0 %v225
    %257 = vmatpush1.bf16.msra.mxu0 %v224
    %258 = vmatprep.subr.bf16.mxu0 %v227
    %259 = vmatpush1.bf16.msra.mxu0 %v226
    %260 = vmatprep.subr.bf16.mxu0 %v229
    %261 = vmatpush1.bf16.msra.mxu0 %v228
    %262 = vmatprep.subr.bf16.mxu0 %v231
    %263 = vmatpush1.bf16.msra.mxu0 %v230
    %264 = vmatprep.subr.bf16.mxu0 %v233
    %265 = vmatpush1.bf16.msra.mxu0 %v232
    %266 = vmatprep.subr.bf16.mxu0 %v235
    %267 = vmatpush1.bf16.msra.mxu0 %v234
    %268 = vmatprep.subr.bf16.mxu0 0
    %269 = vmatpush1.bf16.msra.mxu0 0
    %270 = vmatprep.subr.bf16.mxu0 0
    %271 = vmatpush1.bf16.msra.mxu0 0
    %272 = vmatprep.subr.bf16.mxu0 0
    %273 = vmatpush1.bf16.msra.mxu0 0
    %274 = vmatprep.subr.bf16.mxu0 0
    %275 = vmatpush1.bf16.msra.mxu0 0
    %276 = vmatprep.subr.bf16.mxu0 0
    %277 = vmatpush1.bf16.msra.mxu0 0
    %278 = vmatprep.subr.bf16.mxu0 0
    %279 = vmatpush1.bf16.msra.mxu0 0
    %280 = vmatprep.subr.bf16.mxu0 0
    %281 = vmatpush1.bf16.msra.mxu0 0
    %282 = vmatprep.subr.bf16.mxu0 0
    %283 = vmatpush1.bf16.msra.mxu0 0
    %284 = vmatprep.mubr.bf16.mxu0 0
    %285 = vmatmul.mubr.bf16.gmra.mrb[0].mxu0 %v140
    %v286 = vpop.f32.mrb[0].mxu0
    %v287 = vadd.f32 %v69, %v286
    %v288 = vpop.f32.mrb[0].mxu0
    %v289 = vadd.f32 %v73, %v288
    %v290 = vpop.f32.mrb[0].mxu0
    %v291 = vadd.f32 %v69, %v290
    %v292 = vpop.f32.mrb[0].mxu0
    %v293 = vadd.f32 %v73, %v292
    %294 = vmatprep.mubr.bf16.mxu0 0
    %295 = vmatmul.mubr.bf16.gmra.mrb[0].mxu0 %v141
    %v296 = vpop.f32.mrb[0].mxu0
    %v297 = vadd.f32 %v69, %v296
    %v298 = vpop.f32.mrb[0].mxu0
    %v299 = vadd.f32 %v73, %v298
    %v300 = vpop.f32.mrb[0].mxu0
    %v301 = vadd.f32 %v69, %v300
    %v302 = vpop.f32.mrb[0].mxu0
    %v303 = vadd.f32 %v73, %v302
    %304 = vmatprep.mubr.bf16.mxu0 0
    %305 = vmatmul.mubr.bf16.gmra.mrb[0].mxu0 %v142
    %v306 = vpop.f32.mrb[0].mxu0
    %v307 = vadd.f32 %v69, %v306
    %v308 = vpop.f32.mrb[0].mxu0
    %v309 = vadd.f32 %v73, %v308
    %v310 = vpop.f32.mrb[0].mxu0
    %v311 = vadd.f32 %v69, %v310
    %v312 = vpop.f32.mrb[0].mxu0
    %v313 = vadd.f32 %v73, %v312
    %314 = vmatprep.mubr.bf16.mxu0 0
    %315 = vmatmul.mubr.bf16.gmra.mrb[0].mxu0 %v143
    %v316 = vpop.f32.mrb[0].mxu0
    %v317 = vadd.f32 %v69, %v316
    %v318 = vpop.f32.mrb[0].mxu0
    %v319 = vadd.f32 %v73, %v318
    %v320 = vpop.f32.mrb[0].mxu0
    %v321 = vadd.f32 %v69, %v320
    %v322 = vpop.f32.mrb[0].mxu0
    %v323 = vadd.f32 %v73, %v322
    %324 = vmatprep.mubr.bf16.mxu0 0
    %325 = vmatmul.mubr.bf16.gmra.mrb[0].mxu0 %v144
    %v326 = vpop.f32.mrb[0].mxu0
    %v327 = vadd.f32 %v69, %v326
    %v328 = vpop.f32.mrb[0].mxu0
    %v329 = vadd.f32 %v73, %v328
    %v330 = vpop.f32.mrb[0].mxu0
    %v331 = vadd.f32 %v69, %v330
    %v332 = vpop.f32.mrb[0].mxu0
    %v333 = vadd.f32 %v73, %v332
    %334 = vmatprep.mubr.bf16.mxu0 0
    %335 = vmatmul.mubr.bf16.gmra.mrb[0].mxu0 %v145
    %v336 = vpop.f32.mrb[0].mxu0
    %v337 = vadd.f32 %v69, %v336
    %v338 = vpop.f32.mrb[0].mxu0
    %v339 = vadd.f32 %v73, %v338
    %v340 = vpop.f32.mrb[0].mxu0
    %v341 = vadd.f32 %v69, %v340
    %v342 = vpop.f32.mrb[0].mxu0
    %v343 = vadd.f32 %v73, %v342
    %344 = vmatprep.mubr.bf16.mxu0 0
    %345 = vmatmul.mubr.bf16.gmra.mrb[0].mxu0 %v146
    %v346 = vpop.f32.mrb[0].mxu0
    %v347 = vadd.f32 %v69, %v346
    %v348 = vpop.f32.mrb[0].mxu0
    %v349 = vadd.f32 %v73, %v348
    %v350 = vpop.f32.mrb[0].mxu0
    %v351 = vadd.f32 %v69, %v350
    %v352 = vpop.f32.mrb[0].mxu0
    %v353 = vadd.f32 %v73, %v352
    %354 = vmatprep.mubr.bf16.mxu0 0
    %355 = vmatmul.mubr.bf16.gmra.mrb[0].mxu0 %v147
    %v356 = vpop.f32.mrb[0].mxu0
    %v357 = vadd.f32 %v69, %v356
    %v358 = vpop.f32.mrb[0].mxu0
    %v359 = vadd.f32 %v73, %v358
    %v360 = vpop.f32.mrb[0].mxu0
    %v361 = vadd.f32 %v69, %v360
    %v362 = vpop.f32.mrb[0].mxu0
    %v363 = vadd.f32 %v73, %v362
    %364 = vmatprep.mubr.bf16.mxu0 0
    %365 = vmatmul.mubr.bf16.gmra.mrb[0].mxu0 %v148
    %v366 = vpop.f32.mrb[0].mxu0
    %v367 = vadd.f32 %v69, %v366
    %v368 = vpop.f32.mrb[0].mxu0
    %v369 = vadd.f32 %v73, %v368
    %v370 = vpop.f32.mrb[0].mxu0
    %v371 = vadd.f32 %v69, %v370
    %v372 = vpop.f32.mrb[0].mxu0
    %v373 = vadd.f32 %v73, %v372
    %374 = vmatprep.mubr.bf16.mxu0 0
    %375 = vmatmul.mubr.bf16.gmra.mrb[0].mxu0 %v149
    %v376 = vpop.f32.mrb[0].mxu0
    %v377 = vadd.f32 %v69, %v376
    %v378 = vpop.f32.mrb[0].mxu0
    %v379 = vadd.f32 %v73, %v378
    %v380 = vpop.f32.mrb[0].mxu0
    %v381 = vadd.f32 %v69, %v380
    %v382 = vpop.f32.mrb[0].mxu0
    %v383 = vadd.f32 %v73, %v382
    %384 = vmatprep.mubr.bf16.mxu0 0
    %385 = vmatmul.mubr.bf16.gmra.mrb[0].mxu0 %v150
    %v386 = vpop.f32.mrb[0].mxu0
    %v387 = vadd.f32 %v69, %v386
    %v388 = vpop.f32.mrb[0].mxu0
    %v389 = vadd.f32 %v73, %v388
    %v390 = vpop.f32.mrb[0].mxu0
    %v391 = vadd.f32 %v69, %v390
    %v392 = vpop.f32.mrb[0].mxu0
    %v393 = vadd.f32 %v73, %v392
    %394 = vmatprep.mubr.bf16.mxu0 0
    %395 = vmatmul.mubr.bf16.gmra.mrb[0].mxu0 %v151
    %v396 = vpop.f32.mrb[0].mxu0
    %v397 = vadd.f32 %v69, %v396
    %v398 = vpop.f32.mrb[0].mxu0
    %v399 = vadd.f32 %v73, %v398
    %v400 = vpop.f32.mrb[0].mxu0
    %v401 = vadd.f32 %v69, %v400
    %v402 = vpop.f32.mrb[0].mxu0
    %v403 = vadd.f32 %v73, %v402
    %404 = vmatprep.mubr.bf16.mxu0 0
    %405 = vmatmul.mubr.bf16.gmra.mrb[0].mxu0 %v152
    %v406 = vpop.f32.mrb[0].mxu0
    %v407 = vadd.f32 %v69, %v406
    %v408 = vpop.f32.mrb[0].mxu0
    %v409 = vadd.f32 %v73, %v408
    %v410 = vpop.f32.mrb[0].mxu0
    %v411 = vadd.f32 %v69, %v410
    %v412 = vpop.f32.mrb[0].mxu0
    %v413 = vadd.f32 %v73, %v412
    %414 = vmatprep.mubr.bf16.mxu0 0
    %415 = vmatmul.mubr.bf16.gmra.mrb[0].mxu0 %v153
    %v416 = vpop.f32.mrb[0].mxu0
    %v417 = vadd.f32 %v69, %v416
    %v418 = vpop.f32.mrb[0].mxu0
    %v419 = vadd.f32 %v73, %v418
    %v420 = vpop.f32.mrb[0].mxu0
    %v421 = vadd.f32 %v69, %v420
    %v422 = vpop.f32.mrb[0].mxu0
    %v423 = vadd.f32 %v73, %v422
    %424 = vmatprep.mubr.bf16.mxu0 0
    %425 = vmatmul.mubr.bf16.gmra.mrb[0].mxu0 %v154
    %v426 = vpop.f32.mrb[0].mxu0
    %v427 = vadd.f32 %v69, %v426
    %v428 = vpop.f32.mrb[0].mxu0
    %v429 = vadd.f32 %v73, %v428
    %v430 = vpop.f32.mrb[0].mxu0
    %v431 = vadd.f32 %v69, %v430
    %v432 = vpop.f32.mrb[0].mxu0
    %v433 = vadd.f32 %v73, %v432
    %434 = vmatprep.mubr.bf16.mxu0 0
    %435 = vmatmul.mubr.bf16.gmra.mrb[0].mxu0 %v155
    %v436 = vpop.f32.mrb[0].mxu0
    %v437 = vadd.f32 %v69, %v436
    %v438 = vpop.f32.mrb[0].mxu0
    %v439 = vadd.f32 %v73, %v438
    %v440 = vpop.f32.mrb[0].mxu0
    %v441 = vadd.f32 %v69, %v440
    %v442 = vpop.f32.mrb[0].mxu0
    %v443 = vadd.f32 %v73, %v442
    %444 = vdwg.mxu0
    %445 = vst [vmem:[#allocation2] sm:$0xff] %v287
    %446 = vst [vmem:[#allocation2 + $0x8] sm:$0xff] %v289
    %447 = vst [vmem:[#allocation2 + $0x10] sm:$0xff] %v291
    %448 = vst [vmem:[#allocation2 + $0x18] sm:$0xff] %v293
    %449 = vst [vmem:[#allocation2 + $0x20] sm:$0xff] %v297
    %450 = vst [vmem:[#allocation2 + $0x28] sm:$0xff] %v299
    %451 = vst [vmem:[#allocation2 + $0x30] sm:$0xff] %v301
    %452 = vst [vmem:[#allocation2 + $0x38] sm:$0xff] %v303
    %453 = vst [vmem:[#allocation2 + $0x40] sm:$0xff] %v307
    %454 = vst [vmem:[#allocation2 + $0x48] sm:$0xff] %v309
    %455 = vst [vmem:[#allocation2 + $0x50] sm:$0xff] %v311
    %456 = vst [vmem:[#allocation2 + $0x58] sm:$0xff] %v313
    %457 = vst [vmem:[#allocation2 + $0x60] sm:$0xff] %v317
    %458 = vst [vmem:[#allocation2 + $0x68] sm:$0xff] %v319
    %459 = vst [vmem:[#allocation2 + $0x70] sm:$0xff] %v321
    %460 = vst [vmem:[#allocation2 + $0x78] sm:$0xff] %v323
    %461 = vst [vmem:[#allocation2 + $0x80] sm:$0xff] %v327
    %462 = vst [vmem:[#allocation2 + $0x88] sm:$0xff] %v329
    %463 = vst [vmem:[#allocation2 + $0x90] sm:$0xff] %v331
    %464 = vst [vmem:[#allocation2 + $0x98] sm:$0xff] %v333
    %465 = vst [vmem:[#allocation2 + $0xa0] sm:$0xff] %v337
    %466 = vst [vmem:[#allocation2 + $0xa8] sm:$0xff] %v339
    %467 = vst [vmem:[#allocation2 + $0xb0] sm:$0xff] %v341
    %468 = vst [vmem:[#allocation2 + $0xb8] sm:$0xff] %v343
    %469 = vst [vmem:[#allocation2 + $0xc0] sm:$0xff] %v347
    %470 = vst [vmem:[#allocation2 + $0xc8] sm:$0xff] %v349
    %471 = vst [vmem:[#allocation2 + $0xd0] sm:$0xff] %v351
    %472 = vst [vmem:[#allocation2 + $0xd8] sm:$0xff] %v353
    %473 = vst [vmem:[#allocation2 + $0xe0] sm:$0xff] %v357
    %474 = vst [vmem:[#allocation2 + $0xe8] sm:$0xff] %v359
    %475 = vst [vmem:[#allocation2 + $0xf0] sm:$0xff] %v361
    %476 = vst [vmem:[#allocation2 + $0xf8] sm:$0xff] %v363
    %477 = vst [vmem:[#allocation2 + $0x100] sm:$0xff] %v367
    %478 = vst [vmem:[#allocation2 + $0x108] sm:$0xff] %v369
    %479 = vst [vmem:[#allocation2 + $0x110] sm:$0xff] %v371
    %480 = vst [vmem:[#allocation2 + $0x118] sm:$0xff] %v373
    %481 = vst [vmem:[#allocation2 + $0x120] sm:$0xff] %v377
    %482 = vst [vmem:[#allocation2 + $0x128] sm:$0xff] %v379
    %483 = vst [vmem:[#allocation2 + $0x130] sm:$0xff] %v381
    %484 = vst [vmem:[#allocation2 + $0x138] sm:$0xff] %v383
    %485 = vst [vmem:[#allocation2 + $0x140] sm:$0xff] %v387
    %486 = vst [vmem:[#allocation2 + $0x148] sm:$0xff] %v389
    %487 = vst [vmem:[#allocation2 + $0x150] sm:$0xff] %v391
    %488 = vst [vmem:[#allocation2 + $0x158] sm:$0xff] %v393
    %489 = vst [vmem:[#allocation2 + $0x160] sm:$0xff] %v397
    %490 = vst [vmem:[#allocation2 + $0x168] sm:$0xff] %v399
    %491 = vst [vmem:[#allocation2 + $0x170] sm:$0xff] %v401
    %492 = vst [vmem:[#allocation2 + $0x178] sm:$0xff] %v403
    %493 = vst [vmem:[#allocation2 + $0x180] sm:$0xff] %v407
    %494 = vst [vmem:[#allocation2 + $0x188] sm:$0xff] %v409
    %495 = vst [vmem:[#allocation2 + $0x190] sm:$0xff] %v411
    %496 = vst [vmem:[#allocation2 + $0x198] sm:$0xff] %v413
    %497 = vst [vmem:[#allocation2 + $0x1a0] sm:$0xff] %v417
    %498 = vst [vmem:[#allocation2 + $0x1a8] sm:$0xff] %v419
    %499 = vst [vmem:[#allocation2 + $0x1b0] sm:$0xff] %v421
    %500 = vst [vmem:[#allocation2 + $0x1b8] sm:$0xff] %v423
    %501 = vst [vmem:[#allocation2 + $0x1c0] sm:$0xff] %v427
    %502 = vst [vmem:[#allocation2 + $0x1c8] sm:$0xff] %v429
    %503 = vst [vmem:[#allocation2 + $0x1d0] sm:$0xff] %v431
    %504 = vst [vmem:[#allocation2 + $0x1d8] sm:$0xff] %v433
    %505 = vst [vmem:[#allocation2 + $0x1e0] sm:$0xff] %v437
    %506 = vst [vmem:[#allocation2 + $0x1e8] sm:$0xff] %v439
    %507 = vst [vmem:[#allocation2 + $0x1f0] sm:$0xff] %v441
    %508 = vst [vmem:[#allocation2 + $0x1f8] sm:$0xff] %v443
    // Predicated region
    $region14: #{rnn_model_forward.5} parent=1 // pred_check
      _
    $region15: #{rnn_model_forward.5} parent=1 // pred_check_branch
      %510 = sbr.rel (0) target = $region17
    $region16: #{rnn_model_forward.5} parent=1 // pred_region
      %s512 = ssub.s32 8192, 8192
      %513 = vsyncadd [#allocation3], %s512
      %s514 = sshll.u32 [#allocation2], 4
      %s515 = int_to_ptr.vmem [resolvable:$true] %s514
      %520 = dma.vmem_to_hbm [thread:$0]  %s515, 8192, %s3, [#allocation3], 256, 256, 16
    $region17: #{rnn_model_forward.5} parent=1 // pred_fallthru
      _
    // Predicated region
    $region18: #{rnn_model_forward.5} parent=1 // pred_check
      _
    $region19: #{rnn_model_forward.5} parent=1 // pred_check_branch
      %522 = sbr.rel (0) target = $region21
    $region20: #{rnn_model_forward.5} parent=1 // pred_region
      %523 = dma.done [#allocation3], 8192
    $region21: #{rnn_model_forward.5} parent=1 // pred_fallthru
      _
    %524 = vsyncpa [#allocation3], 1

// kernel: rnn_model_forward.4
$region0: #{rnn_model_forward.4}
  #allocation0 [shape = 'u32[]', space=smem, size = 0x4, offset = 0x4, fixed_abs, tag = 'smem constant byte address 0x4 - core index']
  #allocation1 [shape = 'u32[144,128]{1,0:T(1,128)}', space=vmem, size = 0x12000, scoped, tag = 'internal scratch']
  %s0 = inlined_call_operand.vmem [shape: f32[32,8,128], index: 0, kind: input, shape index: {}]
  %s1 = inlined_call_operand.vmem [shape: f32[8,128], index: 1, kind: input, shape index: {}]
  %s2 = inlined_call_operand.vmem [shape: bf16[128,128], index: 2, kind: input, shape index: {}]
  %s3 = inlined_call_operand.vmem [shape: bf16[32,8,128], index: 3, kind: output, shape index: {0}]
  %s4 = inlined_call_operand.hbm [shape: f32[8,128], index: 4, kind: output, shape index: {1}]
  %5 = xla_tuple %s3, %s4
  %s6 = sld [smem:[#allocation0]]
  $region34: #{rnn_model_forward.4} parent=0
    _
  %s8 = ssub.s32 1, %s6
  %s9 = scalar_select 0, %s8, %s6
  $region1: #{rnn_model_forward.4} parent=0
    #allocation2 [shape = 'u8[4096]{0}', space=vmem, size = 0x1000, scoped, tag = 'output window, operand 1, single buffered']
    #allocation3 [shape = 's32[1]{0}', space=sflag, size = 0x4, scoped, tag = 'scoped memory for rnn_model_forward.4']
    %10 = vsyncpa [#allocation3], 0
    // Predicated region
    $region2: #{rnn_model_forward.4} parent=1 // pred_check
      _
    $region3: #{rnn_model_forward.4} parent=1 // pred_check_branch
      %12 = sbr.rel (0) target = $region5
    $region4: #{rnn_model_forward.4} parent=1 // pred_region
      _
    $region5: #{rnn_model_forward.4} parent=1 // pred_fallthru
      _
    // Predicated region
    $region6: #{rnn_model_forward.4} parent=1 // pred_check
      _
    $region7: #{rnn_model_forward.4} parent=1 // pred_check_branch
      %14 = sbr.rel (0) target = $region9
    $region8: #{rnn_model_forward.4} parent=1 // pred_region
      _
    $region9: #{rnn_model_forward.4} parent=1 // pred_fallthru
      _
    // Predicated region
    $region10: #{rnn_model_forward.4} parent=1 // pred_check
      _
    $region11: #{rnn_model_forward.4} parent=1 // pred_check_branch
      %16 = sbr.rel (0) target = $region13
    $region12: #{rnn_model_forward.4} parent=1 // pred_region
      _
    $region13: #{rnn_model_forward.4} parent=1 // pred_fallthru
      _
    %p18 = scmp.eq.s32.totalorder 0, 0
    // Predicated region
    $region14: #{rnn_model_forward.4} parent=1 // pred_check
      %p19 = pneg %p18
    $region15: #{rnn_model_forward.4} parent=1 // pred_check_branch
      %21 = sbr.rel (%p19) target = $region17
    $region16: #{rnn_model_forward.4} parent=1 // pred_region
      %v22 = vld [vmem:[%s1] sm:$0xff]
      %23 = vst [vmem:[#allocation2] sm:$0xff] %v22
    $region17: #{rnn_model_forward.4} parent=1 // pred_fallthru
      _
    %v24 = vld [vmem:[%s2] sm:$0xf]
    %v25 = vld [vmem:[%s2 + $0x4] sm:$0xf]
    %v26 = vld [vmem:[%s2 + $0x8] sm:$0xf]
    %v27 = vld [vmem:[%s2 + $0xc] sm:$0xf]
    %v28 = vld [vmem:[%s2 + $0x10] sm:$0xf]
    %v29 = vld [vmem:[%s2 + $0x14] sm:$0xf]
    %v30 = vld [vmem:[%s2 + $0x18] sm:$0xf]
    %v31 = vld [vmem:[%s2 + $0x1c] sm:$0xf]
    %v32 = vld [vmem:[%s2 + $0x20] sm:$0xf]
    %v33 = vld [vmem:[%s2 + $0x24] sm:$0xf]
    %v34 = vld [vmem:[%s2 + $0x28] sm:$0xf]
    %v35 = vld [vmem:[%s2 + $0x2c] sm:$0xf]
    %v36 = vld [vmem:[%s2 + $0x30] sm:$0xf]
    %v37 = vld [vmem:[%s2 + $0x34] sm:$0xf]
    %v38 = vld [vmem:[%s2 + $0x38] sm:$0xf]
    %v39 = vld [vmem:[%s2 + $0x3c] sm:$0xf]
    %v40 = vld [vmem:[#allocation2] sm:$0xff]
    %v41 = vld [vmem:[%s0] sm:$0xff]
    %v42 = vpack.c.bf16 %v40, %v40
    %v59 = vunpack.c.l.b16 %v24
    %v60 = vunpack.c.l.b16 %v25
    %v61 = vunpack.c.l.b16 %v26
    %v62 = vunpack.c.l.b16 %v27
    %v63 = vunpack.c.l.b16 %v28
    %v64 = vunpack.c.l.b16 %v29
    %v65 = vunpack.c.l.b16 %v30
    %v66 = vunpack.c.l.b16 %v31
    %v67 = vunpack.c.l.b16 %v32
    %v68 = vunpack.c.l.b16 %v33
    %v69 = vunpack.c.l.b16 %v34
    %v70 = vunpack.c.l.b16 %v35
    %v71 = vunpack.c.l.b16 %v36
    %v72 = vunpack.c.l.b16 %v37
    %v73 = vunpack.c.l.b16 %v38
    %v74 = vunpack.c.l.b16 %v39
    %v75 = vpack.c.b16 %v60, %v59
    %v76 = vpack.c.b16 %v62, %v61
    %v77 = vpack.c.b16 %v64, %v63
    %v78 = vpack.c.b16 %v66, %v65
    %v79 = vpack.c.b16 %v68, %v67
    %v80 = vpack.c.b16 %v70, %v69
    %v81 = vpack.c.b16 %v72, %v71
    %v82 = vpack.c.b16 %v74, %v73
    %91 = vmatprep.subr.bf16.mxu0 0
    %92 = vmatpush1.bf16.msra.mxu0 %v75
    %93 = vmatprep.subr.bf16.mxu0 0
    %94 = vmatpush1.bf16.msra.mxu0 %v76
    %95 = vmatprep.subr.bf16.mxu0 0
    %96 = vmatpush1.bf16.msra.mxu0 %v77
    %97 = vmatprep.subr.bf16.mxu0 0
    %98 = vmatpush1.bf16.msra.mxu0 %v78
    %99 = vmatprep.subr.bf16.mxu0 0
    %100 = vmatpush1.bf16.msra.mxu0 %v79
    %101 = vmatprep.subr.bf16.mxu0 0
    %102 = vmatpush1.bf16.msra.mxu0 %v80
    %103 = vmatprep.subr.bf16.mxu0 0
    %104 = vmatpush1.bf16.msra.mxu0 %v81
    %105 = vmatprep.subr.bf16.mxu0 0
    %106 = vmatpush1.bf16.msra.mxu0 %v82
    %107 = vmatprep.subr.bf16.mxu0 0
    %108 = vmatpush1.bf16.msra.mxu0 0
    %109 = vmatprep.subr.bf16.mxu0 0
    %110 = vmatpush1.bf16.msra.mxu0 0
    %111 = vmatprep.subr.bf16.mxu0 0
    %112 = vmatpush1.bf16.msra.mxu0 0
    %113 = vmatprep.subr.bf16.mxu0 0
    %114 = vmatpush1.bf16.msra.mxu0 0
    %115 = vmatprep.subr.bf16.mxu0 0
    %116 = vmatpush1.bf16.msra.mxu0 0
    %117 = vmatprep.subr.bf16.mxu0 0
    %118 = vmatpush1.bf16.msra.mxu0 0
    %119 = vmatprep.subr.bf16.mxu0 0
    %120 = vmatpush1.bf16.msra.mxu0 0
    %121 = vmatprep.subr.bf16.mxu0 0
    %122 = vmatpush1.bf16.msra.mxu0 0
    %123 = vmatprep.mubr.bf16.mxu0 0
    %124 = vmatmul.mubr.bf16.gmra.mrb[0].mxu0 %v42
    %v125 = vpop.f32.mrb[0].mxu0
    %v126 = vadd.f32 0.0, %v125
    %v127 = vpop.f32.mrb[0].mxu0
    %v128 = vpop.f32.mrb[0].mxu0
    %v129 = vpop.f32.mrb[0].mxu0
    %130 = vdwg.mxu0
    %v131 = vadd.f32 %v41, %v126
    %v132 = vtanh.pop %v131
    %v133 = vpack.c.bf16 %v132, %v132
    %134 = vst [vmem:[%s3] sm:$0xf] %v133
    %s135 = scalar_lea.vmem %s0, 8
    %v136 = vld [vmem:[%s135] sm:$0xff]
    %137 = vmatprep.subr.bf16.mxu0 0
    %138 = vmatpush1.bf16.msra.mxu0 %v75
    %139 = vmatprep.subr.bf16.mxu0 0
    %140 = vmatpush1.bf16.msra.mxu0 %v76
    %141 = vmatprep.subr.bf16.mxu0 0
    %142 = vmatpush1.bf16.msra.mxu0 %v77
    %143 = vmatprep.subr.bf16.mxu0 0
    %144 = vmatpush1.bf16.msra.mxu0 %v78
    %145 = vmatprep.subr.bf16.mxu0 0
    %146 = vmatpush1.bf16.msra.mxu0 %v79
    %147 = vmatprep.subr.bf16.mxu0 0
    %148 = vmatpush1.bf16.msra.mxu0 %v80
    %149 = vmatprep.subr.bf16.mxu0 0
    %150 = vmatpush1.bf16.msra.mxu0 %v81
    %151 = vmatprep.subr.bf16.mxu0 0
    %152 = vmatpush1.bf16.msra.mxu0 %v82
    %153 = vmatprep.subr.bf16.mxu0 0
    %154 = vmatpush1.bf16.msra.mxu0 0
    %155 = vmatprep.subr.bf16.mxu0 0
    %156 = vmatpush1.bf16.msra.mxu0 0
    %157 = vmatprep.subr.bf16.mxu0 0
    %158 = vmatpush1.bf16.msra.mxu0 0
    %159 = vmatprep.subr.bf16.mxu0 0
    %160 = vmatpush1.bf16.msra.mxu0 0
    %161 = vmatprep.subr.bf16.mxu0 0
    %162 = vmatpush1.bf16.msra.mxu0 0
    %163 = vmatprep.subr.bf16.mxu0 0
    %164 = vmatpush1.bf16.msra.mxu0 0
    %165 = vmatprep.subr.bf16.mxu0 0
    %166 = vmatpush1.bf16.msra.mxu0 0
    %167 = vmatprep.subr.bf16.mxu0 0
    %168 = vmatpush1.bf16.msra.mxu0 0
    %169 = vmatprep.mubr.bf16.mxu0 0
    %170 = vmatmul.mubr.bf16.gmra.mrb[0].mxu0 %v133
    %v171 = vpop.f32.mrb[0].mxu0
    %v172 = vadd.f32 0.0, %v171
    %v173 = vpop.f32.mrb[0].mxu0
    %v174 = vpop.f32.mrb[0].mxu0
    %v175 = vpop.f32.mrb[0].mxu0
    %176 = vdwg.mxu0
    %v177 = vadd.f32 %v136, %v172
    %v178 = vtanh.pop %v177
    %v179 = vpack.c.bf16 %v178, %v178
    %s180 = scalar_lea.vmem %s3, 4
    %181 = vst [vmem:[%s180] sm:$0xf] %v179
    %s182 = scalar_lea.vmem %s0, 16
    %v183 = vld [vmem:[%s182] sm:$0xff]
    %184 = vmatprep.subr.bf16.mxu0 0
    %185 = vmatpush1.bf16.msra.mxu0 %v75
    %186 = vmatprep.subr.bf16.mxu0 0
    %187 = vmatpush1.bf16.msra.mxu0 %v76
    %188 = vmatprep.subr.bf16.mxu0 0
    %189 = vmatpush1.bf16.msra.mxu0 %v77
    %190 = vmatprep.subr.bf16.mxu0 0
    %191 = vmatpush1.bf16.msra.mxu0 %v78
    %192 = vmatprep.subr.bf16.mxu0 0
    %193 = vmatpush1.bf16.msra.mxu0 %v79
    %194 = vmatprep.subr.bf16.mxu0 0
    %195 = vmatpush1.bf16.msra.mxu0 %v80
    %196 = vmatprep.subr.bf16.mxu0 0
    %197 = vmatpush1.bf16.msra.mxu0 %v81
    %198 = vmatprep.subr.bf16.mxu0 0
    %199 = vmatpush1.bf16.msra.mxu0 %v82
    %200 = vmatprep.subr.bf16.mxu0 0
    %201 = vmatpush1.bf16.msra.mxu0 0
    %202 = vmatprep.subr.bf16.mxu0 0
    %203 = vmatpush1.bf16.msra.mxu0 0
    %204 = vmatprep.subr.bf16.mxu0 0
    %205 = vmatpush1.bf16.msra.mxu0 0
    %206 = vmatprep.subr.bf16.mxu0 0
    %207 = vmatpush1.bf16.msra.mxu0 0
    %208 = vmatprep.subr.bf16.mxu0 0
    %209 = vmatpush1.bf16.msra.mxu0 0
    %210 = vmatprep.subr.bf16.mxu0 0
    %211 = vmatpush1.bf16.msra.mxu0 0
    %212 = vmatprep.subr.bf16.mxu0 0
    %213 = vmatpush1.bf16.msra.mxu0 0
    %214 = vmatprep.subr.bf16.mxu0 0
    %215 = vmatpush1.bf16.msra.mxu0 0
    %216 = vmatprep.mubr.bf16.mxu0 0
    %217 = vmatmul.mubr.bf16.gmra.mrb[0].mxu0 %v179
    %v218 = vpop.f32.mrb[0].mxu0
    %v219 = vadd.f32 0.0, %v218
    %v220 = vpop.f32.mrb[0].mxu0
    %v221 = vpop.f32.mrb[0].mxu0
    %v222 = vpop.f32.mrb[0].mxu0
    %223 = vdwg.mxu0
    %v224 = vadd.f32 %v183, %v219
    %v225 = vtanh.pop %v224
    %v226 = vpack.c.bf16 %v225, %v225
    %s227 = scalar_lea.vmem %s3, 8
    %228 = vst [vmem:[%s227] sm:$0xf] %v226
    %s229 = scalar_lea.vmem %s0, 24
    %v230 = vld [vmem:[%s229] sm:$0xff]
    %231 = vmatprep.subr.bf16.mxu0 0
    %232 = vmatpush1.bf16.msra.mxu0 %v75
    %233 = vmatprep.subr.bf16.mxu0 0
    %234 = vmatpush1.bf16.msra.mxu0 %v76
    %235 = vmatprep.subr.bf16.mxu0 0
    %236 = vmatpush1.bf16.msra.mxu0 %v77
    %237 = vmatprep.subr.bf16.mxu0 0
    %238 = vmatpush1.bf16.msra.mxu0 %v78
    %239 = vmatprep.subr.bf16.mxu0 0
    %240 = vmatpush1.bf16.msra.mxu0 %v79
    %241 = vmatprep.subr.bf16.mxu0 0
    %242 = vmatpush1.bf16.msra.mxu0 %v80
    %243 = vmatprep.subr.bf16.mxu0 0
    %244 = vmatpush1.bf16.msra.mxu0 %v81
    %245 = vmatprep.subr.bf16.mxu0 0
    %246 = vmatpush1.bf16.msra.mxu0 %v82
    %247 = vmatprep.subr.bf16.mxu0 0
    %248 = vmatpush1.bf16.msra.mxu0 0
    %249 = vmatprep.subr.bf16.mxu0 0
    %250 = vmatpush1.bf16.msra.mxu0 0
    %251 = vmatprep.subr.bf16.mxu0 0
    %252 = vmatpush1.bf16.msra.mxu0 0
    %253 = vmatprep.subr.bf16.mxu0 0
    %254 = vmatpush1.bf16.msra.mxu0 0
    %255 = vmatprep.subr.bf16.mxu0 0
    %256 = vmatpush1.bf16.msra.mxu0 0
    %257 = vmatprep.subr.bf16.mxu0 0
    %258 = vmatpush1.bf16.msra.mxu0 0
    %259 = vmatprep.subr.bf16.mxu0 0
    %260 = vmatpush1.bf16.msra.mxu0 0
    %261 = vmatprep.subr.bf16.mxu0 0
    %262 = vmatpush1.bf16.msra.mxu0 0
    %263 = vmatprep.mubr.bf16.mxu0 0
    %264 = vmatmul.mubr.bf16.gmra.mrb[0].mxu0 %v226
    %v265 = vpop.f32.mrb[0].mxu0
    %v266 = vadd.f32 0.0, %v265
    %v267 = vpop.f32.mrb[0].mxu0
    %v268 = vpop.f32.mrb[0].mxu0
    %v269 = vpop.f32.mrb[0].mxu0
    %270 = vdwg.mxu0
    %v271 = vadd.f32 %v230, %v266
    %v272 = vtanh.pop %v271
    %v273 = vpack.c.bf16 %v272, %v272
    %s274 = scalar_lea.vmem %s3, 12
    %275 = vst [vmem:[%s274] sm:$0xf] %v273
    %s276 = scalar_lea.vmem %s0, 32
    %v277 = vld [vmem:[%s276] sm:$0xff]
    %278 = vmatprep.subr.bf16.mxu0 0
    %279 = vmatpush1.bf16.msra.mxu0 %v75
    %280 = vmatprep.subr.bf16.mxu0 0
    %281 = vmatpush1.bf16.msra.mxu0 %v76
    %282 = vmatprep.subr.bf16.mxu0 0
    %283 = vmatpush1.bf16.msra.mxu0 %v77
    %284 = vmatprep.subr.bf16.mxu0 0
    %285 = vmatpush1.bf16.msra.mxu0 %v78
    %286 = vmatprep.subr.bf16.mxu0 0
    %287 = vmatpush1.bf16.msra.mxu0 %v79
    %288 = vmatprep.subr.bf16.mxu0 0
    %289 = vmatpush1.bf16.msra.mxu0 %v80
    %290 = vmatprep.subr.bf16.mxu0 0
    %291 = vmatpush1.bf16.msra.mxu0 %v81
    %292 = vmatprep.subr.bf16.mxu0 0
    %293 = vmatpush1.bf16.msra.mxu0 %v82
    %294 = vmatprep.subr.bf16.mxu0 0
    %295 = vmatpush1.bf16.msra.mxu0 0
    %296 = vmatprep.subr.bf16.mxu0 0
    %297 = vmatpush1.bf16.msra.mxu0 0
    %298 = vmatprep.subr.bf16.mxu0 0
    %299 = vmatpush1.bf16.msra.mxu0 0
    %300 = vmatprep.subr.bf16.mxu0 0
    %301 = vmatpush1.bf16.msra.mxu0 0
    %302 = vmatprep.subr.bf16.mxu0 0
    %303 = vmatpush1.bf16.msra.mxu0 0
    %304 = vmatprep.subr.bf16.mxu0 0
    %305 = vmatpush1.bf16.msra.mxu0 0
    %306 = vmatprep.subr.bf16.mxu0 0
    %307 = vmatpush1.bf16.msra.mxu0 0
    %308 = vmatprep.subr.bf16.mxu0 0
    %309 = vmatpush1.bf16.msra.mxu0 0
    %310 = vmatprep.mubr.bf16.mxu0 0
    %311 = vmatmul.mubr.bf16.gmra.mrb[0].mxu0 %v273
    %v312 = vpop.f32.mrb[0].mxu0
    %v313 = vadd.f32 0.0, %v312
    %v314 = vpop.f32.mrb[0].mxu0
    %v315 = vpop.f32.mrb[0].mxu0
    %v316 = vpop.f32.mrb[0].mxu0
    %317 = vdwg.mxu0
    %v318 = vadd.f32 %v277, %v313
    %v319 = vtanh.pop %v318
    %v320 = vpack.c.bf16 %v319, %v319
    %s321 = scalar_lea.vmem %s3, 16
    %322 = vst [vmem:[%s321] sm:$0xf] %v320
    %s323 = scalar_lea.vmem %s0, 40
    %v324 = vld [vmem:[%s323] sm:$0xff]
    %325 = vmatprep.subr.bf16.mxu0 0
    %326 = vmatpush1.bf16.msra.mxu0 %v75
    %327 = vmatprep.subr.bf16.mxu0 0
    %328 = vmatpush1.bf16.msra.mxu0 %v76
    %329 = vmatprep.subr.bf16.mxu0 0
    %330 = vmatpush1.bf16.msra.mxu0 %v77
    %331 = vmatprep.subr.bf16.mxu0 0
    %332 = vmatpush1.bf16.msra.mxu0 %v78
    %333 = vmatprep.subr.bf16.mxu0 0
    %334 = vmatpush1.bf16.msra.mxu0 %v79
    %335 = vmatprep.subr.bf16.mxu0 0
    %336 = vmatpush1.bf16.msra.mxu0 %v80
    %337 = vmatprep.subr.bf16.mxu0 0
    %338 = vmatpush1.bf16.msra.mxu0 %v81
    %339 = vmatprep.subr.bf16.mxu0 0
    %340 = vmatpush1.bf16.msra.mxu0 %v82
    %341 = vmatprep.subr.bf16.mxu0 0
    %342 = vmatpush1.bf16.msra.mxu0 0
    %343 = vmatprep.subr.bf16.mxu0 0
    %344 = vmatpush1.bf16.msra.mxu0 0
    %345 = vmatprep.subr.bf16.mxu0 0
    %346 = vmatpush1.bf16.msra.mxu0 0
    %347 = vmatprep.subr.bf16.mxu0 0
    %348 = vmatpush1.bf16.msra.mxu0 0
    %349 = vmatprep.subr.bf16.mxu0 0
    %350 = vmatpush1.bf16.msra.mxu0 0
    %351 = vmatprep.subr.bf16.mxu0 0
    %352 = vmatpush1.bf16.msra.mxu0 0
    %353 = vmatprep.subr.bf16.mxu0 0
    %354 = vmatpush1.bf16.msra.mxu0 0
    %355 = vmatprep.subr.bf16.mxu0 0
    %356 = vmatpush1.bf16.msra.mxu0 0
    %357 = vmatprep.mubr.bf16.mxu0 0
    %358 = vmatmul.mubr.bf16.gmra.mrb[0].mxu0 %v320
    %v359 = vpop.f32.mrb[0].mxu0
    %v360 = vadd.f32 0.0, %v359
    %v361 = vpop.f32.mrb[0].mxu0
    %v362 = vpop.f32.mrb[0].mxu0
    %v363 = vpop.f32.mrb[0].mxu0
    %364 = vdwg.mxu0
    %v365 = vadd.f32 %v324, %v360
    %v366 = vtanh.pop %v365
    %v367 = vpack.c.bf16 %v366, %v366
    %s368 = scalar_lea.vmem %s3, 20
    %369 = vst [vmem:[%s368] sm:$0xf] %v367
    %s370 = scalar_lea.vmem %s0, 48
    %v371 = vld [vmem:[%s370] sm:$0xff]
    %372 = vmatprep.subr.bf16.mxu0 0
    %373 = vmatpush1.bf16.msra.mxu0 %v75
    %374 = vmatprep.subr.bf16.mxu0 0
    %375 = vmatpush1.bf16.msra.mxu0 %v76
    %376 = vmatprep.subr.bf16.mxu0 0
    %377 = vmatpush1.bf16.msra.mxu0 %v77
    %378 = vmatprep.subr.bf16.mxu0 0
    %379 = vmatpush1.bf16.msra.mxu0 %v78
    %380 = vmatprep.subr.bf16.mxu0 0
    %381 = vmatpush1.bf16.msra.mxu0 %v79
    %382 = vmatprep.subr.bf16.mxu0 0
    %383 = vmatpush1.bf16.msra.mxu0 %v80
    %384 = vmatprep.subr.bf16.mxu0 0
    %385 = vmatpush1.bf16.msra.mxu0 %v81
    %386 = vmatprep.subr.bf16.mxu0 0
    %387 = vmatpush1.bf16.msra.mxu0 %v82
    %388 = vmatprep.subr.bf16.mxu0 0
    %389 = vmatpush1.bf16.msra.mxu0 0
    %390 = vmatprep.subr.bf16.mxu0 0
    %391 = vmatpush1.bf16.msra.mxu0 0
    %392 = vmatprep.subr.bf16.mxu0 0
    %393 = vmatpush1.bf16.msra.mxu0 0
    %394 = vmatprep.subr.bf16.mxu0 0
    %395 = vmatpush1.bf16.msra.mxu0 0
    %396 = vmatprep.subr.bf16.mxu0 0
    %397 = vmatpush1.bf16.msra.mxu0 0
    %398 = vmatprep.subr.bf16.mxu0 0
    %399 = vmatpush1.bf16.msra.mxu0 0
    %400 = vmatprep.subr.bf16.mxu0 0
    %401 = vmatpush1.bf16.msra.mxu0 0
    %402 = vmatprep.subr.bf16.mxu0 0
    %403 = vmatpush1.bf16.msra.mxu0 0
    %404 = vmatprep.mubr.bf16.mxu0 0
    %405 = vmatmul.mubr.bf16.gmra.mrb[0].mxu0 %v367
    %v406 = vpop.f32.mrb[0].mxu0
    %v407 = vadd.f32 0.0, %v406
    %v408 = vpop.f32.mrb[0].mxu0
    %v409 = vpop.f32.mrb[0].mxu0
    %v410 = vpop.f32.mrb[0].mxu0
    %411 = vdwg.mxu0
    %v412 = vadd.f32 %v371, %v407
    %v413 = vtanh.pop %v412
    %v414 = vpack.c.bf16 %v413, %v413
    %s415 = scalar_lea.vmem %s3, 24
    %416 = vst [vmem:[%s415] sm:$0xf] %v414
    %s417 = scalar_lea.vmem %s0, 56
    %v418 = vld [vmem:[%s417] sm:$0xff]
    %419 = vmatprep.subr.bf16.mxu0 0
    %420 = vmatpush1.bf16.msra.mxu0 %v75
    %421 = vmatprep.subr.bf16.mxu0 0
    %422 = vmatpush1.bf16.msra.mxu0 %v76
    %423 = vmatprep.subr.bf16.mxu0 0
    %424 = vmatpush1.bf16.msra.mxu0 %v77
    %425 = vmatprep.subr.bf16.mxu0 0
    %426 = vmatpush1.bf16.msra.mxu0 %v78
    %427 = vmatprep.subr.bf16.mxu0 0
    %428 = vmatpush1.bf16.msra.mxu0 %v79
    %429 = vmatprep.subr.bf16.mxu0 0
    %430 = vmatpush1.bf16.msra.mxu0 %v80
    %431 = vmatprep.subr.bf16.mxu0 0
    %432 = vmatpush1.bf16.msra.mxu0 %v81
    %433 = vmatprep.subr.bf16.mxu0 0
    %434 = vmatpush1.bf16.msra.mxu0 %v82
    %435 = vmatprep.subr.bf16.mxu0 0
    %436 = vmatpush1.bf16.msra.mxu0 0
    %437 = vmatprep.subr.bf16.mxu0 0
    %438 = vmatpush1.bf16.msra.mxu0 0
    %439 = vmatprep.subr.bf16.mxu0 0
    %440 = vmatpush1.bf16.msra.mxu0 0
    %441 = vmatprep.subr.bf16.mxu0 0
    %442 = vmatpush1.bf16.msra.mxu0 0
    %443 = vmatprep.subr.bf16.mxu0 0
    %444 = vmatpush1.bf16.msra.mxu0 0
    %445 = vmatprep.subr.bf16.mxu0 0
    %446 = vmatpush1.bf16.msra.mxu0 0
    %447 = vmatprep.subr.bf16.mxu0 0
    %448 = vmatpush1.bf16.msra.mxu0 0
    %449 = vmatprep.subr.bf16.mxu0 0
    %450 = vmatpush1.bf16.msra.mxu0 0
    %451 = vmatprep.mubr.bf16.mxu0 0
    %452 = vmatmul.mubr.bf16.gmra.mrb[0].mxu0 %v414
    %v453 = vpop.f32.mrb[0].mxu0
    %v454 = vadd.f32 0.0, %v453
    %v455 = vpop.f32.mrb[0].mxu0
    %v456 = vpop.f32.mrb[0].mxu0
    %v457 = vpop.f32.mrb[0].mxu0
    %458 = vdwg.mxu0
    %v459 = vadd.f32 %v418, %v454
    %v460 = vtanh.pop %v459
    %v461 = vpack.c.bf16 %v460, %v460
    %s462 = scalar_lea.vmem %s3, 28
    %463 = vst [vmem:[%s462] sm:$0xf] %v461
    %s464 = scalar_lea.vmem %s0, 64
    %v465 = vld [vmem:[%s464] sm:$0xff]
    %466 = vmatprep.subr.bf16.mxu0 0
    %467 = vmatpush1.bf16.msra.mxu0 %v75
    %468 = vmatprep.subr.bf16.mxu0 0
    %469 = vmatpush1.bf16.msra.mxu0 %v76
    %470 = vmatprep.subr.bf16.mxu0 0
    %471 = vmatpush1.bf16.msra.mxu0 %v77
    %472 = vmatprep.subr.bf16.mxu0 0
    %473 = vmatpush1.bf16.msra.mxu0 %v78
    %474 = vmatprep.subr.bf16.mxu0 0
    %475 = vmatpush1.bf16.msra.mxu0 %v79
    %476 = vmatprep.subr.bf16.mxu0 0
    %477 = vmatpush1.bf16.msra.mxu0 %v80
    %478 = vmatprep.subr.bf16.mxu0 0
    %479 = vmatpush1.bf16.msra.mxu0 %v81
    %480 = vmatprep.subr.bf16.mxu0 0
    %481 = vmatpush1.bf16.msra.mxu0 %v82
    %482 = vmatprep.subr.bf16.mxu0 0
    %483 = vmatpush1.bf16.msra.mxu0 0
    %484 = vmatprep.subr.bf16.mxu0 0
    %485 = vmatpush1.bf16.msra.mxu0 0
    %486 = vmatprep.subr.bf16.mxu0 0
    %487 = vmatpush1.bf16.msra.mxu0 0
    %488 = vmatprep.subr.bf16.mxu0 0
    %489 = vmatpush1.bf16.msra.mxu0 0
    %490 = vmatprep.subr.bf16.mxu0 0
    %491 = vmatpush1.bf16.msra.mxu0 0
    %492 = vmatprep.subr.bf16.mxu0 0
    %493 = vmatpush1.bf16.msra.mxu0 0
    %494 = vmatprep.subr.bf16.mxu0 0
    %495 = vmatpush1.bf16.msra.mxu0 0
    %496 = vmatprep.subr.bf16.mxu0 0
    %497 = vmatpush1.bf16.msra.mxu0 0
    %498 = vmatprep.mubr.bf16.mxu0 0
    %499 = vmatmul.mubr.bf16.gmra.mrb[0].mxu0 %v461
    %v500 = vpop.f32.mrb[0].mxu0
    %v501 = vadd.f32 0.0, %v500
    %v502 = vpop.f32.mrb[0].mxu0
    %v503 = vpop.f32.mrb[0].mxu0
    %v504 = vpop.f32.mrb[0].mxu0
    %505 = vdwg.mxu0
    %v506 = vadd.f32 %v465, %v501
    %v507 = vtanh.pop %v506
    %v508 = vpack.c.bf16 %v507, %v507
    %s509 = scalar_lea.vmem %s3, 32
    %510 = vst [vmem:[%s509] sm:$0xf] %v508
    %s511 = scalar_lea.vmem %s0, 72
    %v512 = vld [vmem:[%s511] sm:$0xff]
    %513 = vmatprep.subr.bf16.mxu0 0
    %514 = vmatpush1.bf16.msra.mxu0 %v75
    %515 = vmatprep.subr.bf16.mxu0 0
    %516 = vmatpush1.bf16.msra.mxu0 %v76
    %517 = vmatprep.subr.bf16.mxu0 0
    %518 = vmatpush1.bf16.msra.mxu0 %v77
    %519 = vmatprep.subr.bf16.mxu0 0
    %520 = vmatpush1.bf16.msra.mxu0 %v78
    %521 = vmatprep.subr.bf16.mxu0 0
    %522 = vmatpush1.bf16.msra.mxu0 %v79
    %523 = vmatprep.subr.bf16.mxu0 0
    %524 = vmatpush1.bf16.msra.mxu0 %v80
    %525 = vmatprep.subr.bf16.mxu0 0
    %526 = vmatpush1.bf16.msra.mxu0 %v81
    %527 = vmatprep.subr.bf16.mxu0 0
    %528 = vmatpush1.bf16.msra.mxu0 %v82
    %529 = vmatprep.subr.bf16.mxu0 0
    %530 = vmatpush1.bf16.msra.mxu0 0
    %531 = vmatprep.subr.bf16.mxu0 0
    %532 = vmatpush1.bf16.msra.mxu0 0
    %533 = vmatprep.subr.bf16.mxu0 0
    %534 = vmatpush1.bf16.msra.mxu0 0
    %535 = vmatprep.subr.bf16.mxu0 0
    %536 = vmatpush1.bf16.msra.mxu0 0
    %537 = vmatprep.subr.bf16.mxu0 0
    %538 = vmatpush1.bf16.msra.mxu0 0
    %539 = vmatprep.subr.bf16.mxu0 0
    %540 = vmatpush1.bf16.msra.mxu0 0
    %541 = vmatprep.subr.bf16.mxu0 0
    %542 = vmatpush1.bf16.msra.mxu0 0
    %543 = vmatprep.subr.bf16.mxu0 0
    %544 = vmatpush1.bf16.msra.mxu0 0
    %545 = vmatprep.mubr.bf16.mxu0 0
    %546 = vmatmul.mubr.bf16.gmra.mrb[0].mxu0 %v508
    %v547 = vpop.f32.mrb[0].mxu0
    %v548 = vadd.f32 0.0, %v547
    %v549 = vpop.f32.mrb[0].mxu0
    %v550 = vpop.f32.mrb[0].mxu0
    %v551 = vpop.f32.mrb[0].mxu0
    %552 = vdwg.mxu0
    %v553 = vadd.f32 %v512, %v548
    %v554 = vtanh.pop %v553
    %v555 = vpack.c.bf16 %v554, %v554
    %s556 = scalar_lea.vmem %s3, 36
    %557 = vst [vmem:[%s556] sm:$0xf] %v555
    %s558 = scalar_lea.vmem %s0, 80
    %v559 = vld [vmem:[%s558] sm:$0xff]
    %560 = vmatprep.subr.bf16.mxu0 0
    %561 = vmatpush1.bf16.msra.mxu0 %v75
    %562 = vmatprep.subr.bf16.mxu0 0
    %563 = vmatpush1.bf16.msra.mxu0 %v76
    %564 = vmatprep.subr.bf16.mxu0 0
    %565 = vmatpush1.bf16.msra.mxu0 %v77
    %566 = vmatprep.subr.bf16.mxu0 0
    %567 = vmatpush1.bf16.msra.mxu0 %v78
    %568 = vmatprep.subr.bf16.mxu0 0
    %569 = vmatpush1.bf16.msra.mxu0 %v79
    %570 = vmatprep.subr.bf16.mxu0 0
    %571 = vmatpush1.bf16.msra.mxu0 %v80
    %572 = vmatprep.subr.bf16.mxu0 0
    %573 = vmatpush1.bf16.msra.mxu0 %v81
    %574 = vmatprep.subr.bf16.mxu0 0
    %575 = vmatpush1.bf16.msra.mxu0 %v82
    %576 = vmatprep.subr.bf16.mxu0 0
    %577 = vmatpush1.bf16.msra.mxu0 0
    %578 = vmatprep.subr.bf16.mxu0 0
    %579 = vmatpush1.bf16.msra.mxu0 0
    %580 = vmatprep.subr.bf16.mxu0 0
    %581 = vmatpush1.bf16.msra.mxu0 0
    %582 = vmatprep.subr.bf16.mxu0 0
    %583 = vmatpush1.bf16.msra.mxu0 0
    %584 = vmatprep.subr.bf16.mxu0 0
    %585 = vmatpush1.bf16.msra.mxu0 0
    %586 = vmatprep.subr.bf16.mxu0 0
    %587 = vmatpush1.bf16.msra.mxu0 0
    %588 = vmatprep.subr.bf16.mxu0 0
    %589 = vmatpush1.bf16.msra.mxu0 0
    %590 = vmatprep.subr.bf16.mxu0 0
    %591 = vmatpush1.bf16.msra.mxu0 0
    %592 = vmatprep.mubr.bf16.mxu0 0
    %593 = vmatmul.mubr.bf16.gmra.mrb[0].mxu0 %v555
    %v594 = vpop.f32.mrb[0].mxu0
    %v595 = vadd.f32 0.0, %v594
    %v596 = vpop.f32.mrb[0].mxu0
    %v597 = vpop.f32.mrb[0].mxu0
    %v598 = vpop.f32.mrb[0].mxu0
    %599 = vdwg.mxu0
    %v600 = vadd.f32 %v559, %v595
    %v601 = vtanh.pop %v600
    %v602 = vpack.c.bf16 %v601, %v601
    %s603 = scalar_lea.vmem %s3, 40
    %604 = vst [vmem:[%s603] sm:$0xf] %v602
    %s605 = scalar_lea.vmem %s0, 88
    %v606 = vld [vmem:[%s605] sm:$0xff]
    %607 = vmatprep.subr.bf16.mxu0 0
    %608 = vmatpush1.bf16.msra.mxu0 %v75
    %609 = vmatprep.subr.bf16.mxu0 0
    %610 = vmatpush1.bf16.msra.mxu0 %v76
    %611 = vmatprep.subr.bf16.mxu0 0
    %612 = vmatpush1.bf16.msra.mxu0 %v77
    %613 = vmatprep.subr.bf16.mxu0 0
    %614 = vmatpush1.bf16.msra.mxu0 %v78
    %615 = vmatprep.subr.bf16.mxu0 0
    %616 = vmatpush1.bf16.msra.mxu0 %v79
    %617 = vmatprep.subr.bf16.mxu0 0
    %618 = vmatpush1.bf16.msra.mxu0 %v80
    %619 = vmatprep.subr.bf16.mxu0 0
    %620 = vmatpush1.bf16.msra.mxu0 %v81
    %621 = vmatprep.subr.bf16.mxu0 0
    %622 = vmatpush1.bf16.msra.mxu0 %v82
    %623 = vmatprep.subr.bf16.mxu0 0
    %624 = vmatpush1.bf16.msra.mxu0 0
    %625 = vmatprep.subr.bf16.mxu0 0
    %626 = vmatpush1.bf16.msra.mxu0 0
    %627 = vmatprep.subr.bf16.mxu0 0
    %628 = vmatpush1.bf16.msra.mxu0 0
    %629 = vmatprep.subr.bf16.mxu0 0
    %630 = vmatpush1.bf16.msra.mxu0 0
    %631 = vmatprep.subr.bf16.mxu0 0
    %632 = vmatpush1.bf16.msra.mxu0 0
    %633 = vmatprep.subr.bf16.mxu0 0
    %634 = vmatpush1.bf16.msra.mxu0 0
    %635 = vmatprep.subr.bf16.mxu0 0
    %636 = vmatpush1.bf16.msra.mxu0 0
    %637 = vmatprep.subr.bf16.mxu0 0
    %638 = vmatpush1.bf16.msra.mxu0 0
    %639 = vmatprep.mubr.bf16.mxu0 0
    %640 = vmatmul.mubr.bf16.gmra.mrb[0].mxu0 %v602
    %v641 = vpop.f32.mrb[0].mxu0
    %v642 = vadd.f32 0.0, %v641
    %v643 = vpop.f32.mrb[0].mxu0
    %v644 = vpop.f32.mrb[0].mxu0
    %v645 = vpop.f32.mrb[0].mxu0
    %646 = vdwg.mxu0
    %v647 = vadd.f32 %v606, %v642
    %v648 = vtanh.pop %v647
    %v649 = vpack.c.bf16 %v648, %v648
    %s650 = scalar_lea.vmem %s3, 44
    %651 = vst [vmem:[%s650] sm:$0xf] %v649
    %s652 = scalar_lea.vmem %s0, 96
    %v653 = vld [vmem:[%s652] sm:$0xff]
    %654 = vmatprep.subr.bf16.mxu0 0
    %655 = vmatpush1.bf16.msra.mxu0 %v75
    %656 = vmatprep.subr.bf16.mxu0 0
    %657 = vmatpush1.bf16.msra.mxu0 %v76
    %658 = vmatprep.subr.bf16.mxu0 0
    %659 = vmatpush1.bf16.msra.mxu0 %v77
    %660 = vmatprep.subr.bf16.mxu0 0
    %661 = vmatpush1.bf16.msra.mxu0 %v78
    %662 = vmatprep.subr.bf16.mxu0 0
    %663 = vmatpush1.bf16.msra.mxu0 %v79
    %664 = vmatprep.subr.bf16.mxu0 0
    %665 = vmatpush1.bf16.msra.mxu0 %v80
    %666 = vmatprep.subr.bf16.mxu0 0
    %667 = vmatpush1.bf16.msra.mxu0 %v81
    %668 = vmatprep.subr.bf16.mxu0 0
    %669 = vmatpush1.bf16.msra.mxu0 %v82
    %670 = vmatprep.subr.bf16.mxu0 0
    %671 = vmatpush1.bf16.msra.mxu0 0
    %672 = vmatprep.subr.bf16.mxu0 0
    %673 = vmatpush1.bf16.msra.mxu0 0
    %674 = vmatprep.subr.bf16.mxu0 0
    %675 = vmatpush1.bf16.msra.mxu0 0
    %676 = vmatprep.subr.bf16.mxu0 0
    %677 = vmatpush1.bf16.msra.mxu0 0
    %678 = vmatprep.subr.bf16.mxu0 0
    %679 = vmatpush1.bf16.msra.mxu0 0
    %680 = vmatprep.subr.bf16.mxu0 0
    %681 = vmatpush1.bf16.msra.mxu0 0
    %682 = vmatprep.subr.bf16.mxu0 0
    %683 = vmatpush1.bf16.msra.mxu0 0
    %684 = vmatprep.subr.bf16.mxu0 0
    %685 = vmatpush1.bf16.msra.mxu0 0
    %686 = vmatprep.mubr.bf16.mxu0 0
    %687 = vmatmul.mubr.bf16.gmra.mrb[0].mxu0 %v649
    %v688 = vpop.f32.mrb[0].mxu0
    %v689 = vadd.f32 0.0, %v688
    %v690 = vpop.f32.mrb[0].mxu0
    %v691 = vpop.f32.mrb[0].mxu0
    %v692 = vpop.f32.mrb[0].mxu0
    %693 = vdwg.mxu0
    %v694 = vadd.f32 %v653, %v689
    %v695 = vtanh.pop %v694
    %v696 = vpack.c.bf16 %v695, %v695
    %s697 = scalar_lea.vmem %s3, 48
    %698 = vst [vmem:[%s697] sm:$0xf] %v696
    %s699 = scalar_lea.vmem %s0, 104
    %v700 = vld [vmem:[%s699] sm:$0xff]
    %701 = vmatprep.subr.bf16.mxu0 0
    %702 = vmatpush1.bf16.msra.mxu0 %v75
    %703 = vmatprep.subr.bf16.mxu0 0
    %704 = vmatpush1.bf16.msra.mxu0 %v76
    %705 = vmatprep.subr.bf16.mxu0 0
    %706 = vmatpush1.bf16.msra.mxu0 %v77
    %707 = vmatprep.subr.bf16.mxu0 0
    %708 = vmatpush1.bf16.msra.mxu0 %v78
    %709 = vmatprep.subr.bf16.mxu0 0
    %710 = vmatpush1.bf16.msra.mxu0 %v79
    %711 = vmatprep.subr.bf16.mxu0 0
    %712 = vmatpush1.bf16.msra.mxu0 %v80
    %713 = vmatprep.subr.bf16.mxu0 0
    %714 = vmatpush1.bf16.msra.mxu0 %v81
    %715 = vmatprep.subr.bf16.mxu0 0
    %716 = vmatpush1.bf16.msra.mxu0 %v82
    %717 = vmatprep.subr.bf16.mxu0 0
    %718 = vmatpush1.bf16.msra.mxu0 0
    %719 = vmatprep.subr.bf16.mxu0 0
    %720 = vmatpush1.bf16.msra.mxu0 0
    %721 = vmatprep.subr.bf16.mxu0 0
    %722 = vmatpush1.bf16.msra.mxu0 0
    %723 = vmatprep.subr.bf16.mxu0 0
    %724 = vmatpush1.bf16.msra.mxu0 0
    %725 = vmatprep.subr.bf16.mxu0 0
    %726 = vmatpush1.bf16.msra.mxu0 0
    %727 = vmatprep.subr.bf16.mxu0 0
    %728 = vmatpush1.bf16.msra.mxu0 0
    %729 = vmatprep.subr.bf16.mxu0 0
    %730 = vmatpush1.bf16.msra.mxu0 0
    %731 = vmatprep.subr.bf16.mxu0 0
    %732 = vmatpush1.bf16.msra.mxu0 0
    %733 = vmatprep.mubr.bf16.mxu0 0
    %734 = vmatmul.mubr.bf16.gmra.mrb[0].mxu0 %v696
    %v735 = vpop.f32.mrb[0].mxu0
    %v736 = vadd.f32 0.0, %v735
    %v737 = vpop.f32.mrb[0].mxu0
    %v738 = vpop.f32.mrb[0].mxu0
    %v739 = vpop.f32.mrb[0].mxu0
    %740 = vdwg.mxu0
    %v741 = vadd.f32 %v700, %v736
    %v742 = vtanh.pop %v741
    %v743 = vpack.c.bf16 %v742, %v742
    %s744 = scalar_lea.vmem %s3, 52
    %745 = vst [vmem:[%s744] sm:$0xf] %v743
    %s746 = scalar_lea.vmem %s0, 112
    %v747 = vld [vmem:[%s746] sm:$0xff]
    %748 = vmatprep.subr.bf16.mxu0 0
    %749 = vmatpush1.bf16.msra.mxu0 %v75
    %750 = vmatprep.subr.bf16.mxu0 0
    %751 = vmatpush1.bf16.msra.mxu0 %v76
    %752 = vmatprep.subr.bf16.mxu0 0
    %753 = vmatpush1.bf16.msra.mxu0 %v77
    %754 = vmatprep.subr.bf16.mxu0 0
    %755 = vmatpush1.bf16.msra.mxu0 %v78
    %756 = vmatprep.subr.bf16.mxu0 0
    %757 = vmatpush1.bf16.msra.mxu0 %v79
    %758 = vmatprep.subr.bf16.mxu0 0
    %759 = vmatpush1.bf16.msra.mxu0 %v80
    %760 = vmatprep.subr.bf16.mxu0 0
    %761 = vmatpush1.bf16.msra.mxu0 %v81
    %762 = vmatprep.subr.bf16.mxu0 0
    %763 = vmatpush1.bf16.msra.mxu0 %v82
    %764 = vmatprep.subr.bf16.mxu0 0
    %765 = vmatpush1.bf16.msra.mxu0 0
    %766 = vmatprep.subr.bf16.mxu0 0
    %767 = vmatpush1.bf16.msra.mxu0 0
    %768 = vmatprep.subr.bf16.mxu0 0
    %769 = vmatpush1.bf16.msra.mxu0 0
    %770 = vmatprep.subr.bf16.mxu0 0
    %771 = vmatpush1.bf16.msra.mxu0 0
    %772 = vmatprep.subr.bf16.mxu0 0
    %773 = vmatpush1.bf16.msra.mxu0 0
    %774 = vmatprep.subr.bf16.mxu0 0
    %775 = vmatpush1.bf16.msra.mxu0 0
    %776 = vmatprep.subr.bf16.mxu0 0
    %777 = vmatpush1.bf16.msra.mxu0 0
    %778 = vmatprep.subr.bf16.mxu0 0
    %779 = vmatpush1.bf16.msra.mxu0 0
    %780 = vmatprep.mubr.bf16.mxu0 0
    %781 = vmatmul.mubr.bf16.gmra.mrb[0].mxu0 %v743
    %v782 = vpop.f32.mrb[0].mxu0
    %v783 = vadd.f32 0.0, %v782
    %v784 = vpop.f32.mrb[0].mxu0
    %v785 = vpop.f32.mrb[0].mxu0
    %v786 = vpop.f32.mrb[0].mxu0
    %787 = vdwg.mxu0
    %v788 = vadd.f32 %v747, %v783
    %v789 = vtanh.pop %v788
    %v790 = vpack.c.bf16 %v789, %v789
    %s791 = scalar_lea.vmem %s3, 56
    %792 = vst [vmem:[%s791] sm:$0xf] %v790
    %s793 = scalar_lea.vmem %s0, 120
    %v794 = vld [vmem:[%s793] sm:$0xff]
    %795 = vmatprep.subr.bf16.mxu0 0
    %796 = vmatpush1.bf16.msra.mxu0 %v75
    %797 = vmatprep.subr.bf16.mxu0 0
    %798 = vmatpush1.bf16.msra.mxu0 %v76
    %799 = vmatprep.subr.bf16.mxu0 0
    %800 = vmatpush1.bf16.msra.mxu0 %v77
    %801 = vmatprep.subr.bf16.mxu0 0
    %802 = vmatpush1.bf16.msra.mxu0 %v78
    %803 = vmatprep.subr.bf16.mxu0 0
    %804 = vmatpush1.bf16.msra.mxu0 %v79
    %805 = vmatprep.subr.bf16.mxu0 0
    %806 = vmatpush1.bf16.msra.mxu0 %v80
    %807 = vmatprep.subr.bf16.mxu0 0
    %808 = vmatpush1.bf16.msra.mxu0 %v81
    %809 = vmatprep.subr.bf16.mxu0 0
    %810 = vmatpush1.bf16.msra.mxu0 %v82
    %811 = vmatprep.subr.bf16.mxu0 0
    %812 = vmatpush1.bf16.msra.mxu0 0
    %813 = vmatprep.subr.bf16.mxu0 0
    %814 = vmatpush1.bf16.msra.mxu0 0
    %815 = vmatprep.subr.bf16.mxu0 0
    %816 = vmatpush1.bf16.msra.mxu0 0
    %817 = vmatprep.subr.bf16.mxu0 0
    %818 = vmatpush1.bf16.msra.mxu0 0
    %819 = vmatprep.subr.bf16.mxu0 0
    %820 = vmatpush1.bf16.msra.mxu0 0
    %821 = vmatprep.subr.bf16.mxu0 0
    %822 = vmatpush1.bf16.msra.mxu0 0
    %823 = vmatprep.subr.bf16.mxu0 0
    %824 = vmatpush1.bf16.msra.mxu0 0
    %825 = vmatprep.subr.bf16.mxu0 0
    %826 = vmatpush1.bf16.msra.mxu0 0
    %827 = vmatprep.mubr.bf16.mxu0 0
    %828 = vmatmul.mubr.bf16.gmra.mrb[0].mxu0 %v790
    %v829 = vpop.f32.mrb[0].mxu0
    %v830 = vadd.f32 0.0, %v829
    %v831 = vpop.f32.mrb[0].mxu0
    %v832 = vpop.f32.mrb[0].mxu0
    %v833 = vpop.f32.mrb[0].mxu0
    %834 = vdwg.mxu0
    %v835 = vadd.f32 %v794, %v830
    %v836 = vtanh.pop %v835
    %v837 = vpack.c.bf16 %v836, %v836
    %s838 = scalar_lea.vmem %s3, 60
    %839 = vst [vmem:[%s838] sm:$0xf] %v837
    %s840 = scalar_lea.vmem %s0, 128
    %v841 = vld [vmem:[%s840] sm:$0xff]
    %842 = vmatprep.subr.bf16.mxu0 0
    %843 = vmatpush1.bf16.msra.mxu0 %v75
    %844 = vmatprep.subr.bf16.mxu0 0
    %845 = vmatpush1.bf16.msra.mxu0 %v76
    %846 = vmatprep.subr.bf16.mxu0 0
    %847 = vmatpush1.bf16.msra.mxu0 %v77
    %848 = vmatprep.subr.bf16.mxu0 0
    %849 = vmatpush1.bf16.msra.mxu0 %v78
    %850 = vmatprep.subr.bf16.mxu0 0
    %851 = vmatpush1.bf16.msra.mxu0 %v79
    %852 = vmatprep.subr.bf16.mxu0 0
    %853 = vmatpush1.bf16.msra.mxu0 %v80
    %854 = vmatprep.subr.bf16.mxu0 0
    %855 = vmatpush1.bf16.msra.mxu0 %v81
    %856 = vmatprep.subr.bf16.mxu0 0
    %857 = vmatpush1.bf16.msra.mxu0 %v82
    %858 = vmatprep.subr.bf16.mxu0 0
    %859 = vmatpush1.bf16.msra.mxu0 0
    %860 = vmatprep.subr.bf16.mxu0 0
    %861 = vmatpush1.bf16.msra.mxu0 0
    %862 = vmatprep.subr.bf16.mxu0 0
    %863 = vmatpush1.bf16.msra.mxu0 0
    %864 = vmatprep.subr.bf16.mxu0 0
    %865 = vmatpush1.bf16.msra.mxu0 0
    %866 = vmatprep.subr.bf16.mxu0 0
    %867 = vmatpush1.bf16.msra.mxu0 0
    %868 = vmatprep.subr.bf16.mxu0 0
    %869 = vmatpush1.bf16.msra.mxu0 0
    %870 = vmatprep.subr.bf16.mxu0 0
    %871 = vmatpush1.bf16.msra.mxu0 0
    %872 = vmatprep.subr.bf16.mxu0 0
    %873 = vmatpush1.bf16.msra.mxu0 0
    %874 = vmatprep.mubr.bf16.mxu0 0
    %875 = vmatmul.mubr.bf16.gmra.mrb[0].mxu0 %v837
    %v876 = vpop.f32.mrb[0].mxu0
    %v877 = vadd.f32 0.0, %v876
    %v878 = vpop.f32.mrb[0].mxu0
    %v879 = vpop.f32.mrb[0].mxu0
    %v880 = vpop.f32.mrb[0].mxu0
    %881 = vdwg.mxu0
    %v882 = vadd.f32 %v841, %v877
    %v883 = vtanh.pop %v882
    %v884 = vpack.c.bf16 %v883, %v883
    %s885 = scalar_lea.vmem %s3, 64
    %886 = vst [vmem:[%s885] sm:$0xf] %v884
    %s887 = scalar_lea.vmem %s0, 136
    %v888 = vld [vmem:[%s887] sm:$0xff]
    %889 = vmatprep.subr.bf16.mxu0 0
    %890 = vmatpush1.bf16.msra.mxu0 %v75
    %891 = vmatprep.subr.bf16.mxu0 0
    %892 = vmatpush1.bf16.msra.mxu0 %v76
    %893 = vmatprep.subr.bf16.mxu0 0
    %894 = vmatpush1.bf16.msra.mxu0 %v77
    %895 = vmatprep.subr.bf16.mxu0 0
    %896 = vmatpush1.bf16.msra.mxu0 %v78
    %897 = vmatprep.subr.bf16.mxu0 0
    %898 = vmatpush1.bf16.msra.mxu0 %v79
    %899 = vmatprep.subr.bf16.mxu0 0
    %900 = vmatpush1.bf16.msra.mxu0 %v80
    %901 = vmatprep.subr.bf16.mxu0 0
    %902 = vmatpush1.bf16.msra.mxu0 %v81
    %903 = vmatprep.subr.bf16.mxu0 0
    %904 = vmatpush1.bf16.msra.mxu0 %v82
    %905 = vmatprep.subr.bf16.mxu0 0
    %906 = vmatpush1.bf16.msra.mxu0 0
    %907 = vmatprep.subr.bf16.mxu0 0
    %908 = vmatpush1.bf16.msra.mxu0 0
    %909 = vmatprep.subr.bf16.mxu0 0
    %910 = vmatpush1.bf16.msra.mxu0 0
    %911 = vmatprep.subr.bf16.mxu0 0
    %912 = vmatpush1.bf16.msra.mxu0 0
    %913 = vmatprep.subr.bf16.mxu0 0
    %914 = vmatpush1.bf16.msra.mxu0 0
    %915 = vmatprep.subr.bf16.mxu0 0
    %916 = vmatpush1.bf16.msra.mxu0 0
    %917 = vmatprep.subr.bf16.mxu0 0
    %918 = vmatpush1.bf16.msra.mxu0 0
    %919 = vmatprep.subr.bf16.mxu0 0
    %920 = vmatpush1.bf16.msra.mxu0 0
    %921 = vmatprep.mubr.bf16.mxu0 0
    %922 = vmatmul.mubr.bf16.gmra.mrb[0].mxu0 %v884
    %v923 = vpop.f32.mrb[0].mxu0
    %v924 = vadd.f32 0.0, %v923
    %v925 = vpop.f32.mrb[0].mxu0
    %v926 = vpop.f32.mrb[0].mxu0
    %v927 = vpop.f32.mrb[0].mxu0
    %928 = vdwg.mxu0
    %v929 = vadd.f32 %v888, %v924
    %v930 = vtanh.pop %v929
    %v931 = vpack.c.bf16 %v930, %v930
    %s932 = scalar_lea.vmem %s3, 68
    %933 = vst [vmem:[%s932] sm:$0xf] %v931
    %s934 = scalar_lea.vmem %s0, 144
    %v935 = vld [vmem:[%s934] sm:$0xff]
    %936 = vmatprep.subr.bf16.mxu0 0
    %937 = vmatpush1.bf16.msra.mxu0 %v75
    %938 = vmatprep.subr.bf16.mxu0 0
    %939 = vmatpush1.bf16.msra.mxu0 %v76
    %940 = vmatprep.subr.bf16.mxu0 0
    %941 = vmatpush1.bf16.msra.mxu0 %v77
    %942 = vmatprep.subr.bf16.mxu0 0
    %943 = vmatpush1.bf16.msra.mxu0 %v78
    %944 = vmatprep.subr.bf16.mxu0 0
    %945 = vmatpush1.bf16.msra.mxu0 %v79
    %946 = vmatprep.subr.bf16.mxu0 0
    %947 = vmatpush1.bf16.msra.mxu0 %v80
    %948 = vmatprep.subr.bf16.mxu0 0
    %949 = vmatpush1.bf16.msra.mxu0 %v81
    %950 = vmatprep.subr.bf16.mxu0 0
    %951 = vmatpush1.bf16.msra.mxu0 %v82
    %952 = vmatprep.subr.bf16.mxu0 0
    %953 = vmatpush1.bf16.msra.mxu0 0
    %954 = vmatprep.subr.bf16.mxu0 0
    %955 = vmatpush1.bf16.msra.mxu0 0
    %956 = vmatprep.subr.bf16.mxu0 0
    %957 = vmatpush1.bf16.msra.mxu0 0
    %958 = vmatprep.subr.bf16.mxu0 0
    %959 = vmatpush1.bf16.msra.mxu0 0
    %960 = vmatprep.subr.bf16.mxu0 0
    %961 = vmatpush1.bf16.msra.mxu0 0
    %962 = vmatprep.subr.bf16.mxu0 0
    %963 = vmatpush1.bf16.msra.mxu0 0
    %964 = vmatprep.subr.bf16.mxu0 0
    %965 = vmatpush1.bf16.msra.mxu0 0
    %966 = vmatprep.subr.bf16.mxu0 0
    %967 = vmatpush1.bf16.msra.mxu0 0
    %968 = vmatprep.mubr.bf16.mxu0 0
    %969 = vmatmul.mubr.bf16.gmra.mrb[0].mxu0 %v931
    %v970 = vpop.f32.mrb[0].mxu0
    %v971 = vadd.f32 0.0, %v970
    %v972 = vpop.f32.mrb[0].mxu0
    %v973 = vpop.f32.mrb[0].mxu0
    %v974 = vpop.f32.mrb[0].mxu0
    %975 = vdwg.mxu0
    %v976 = vadd.f32 %v935, %v971
    %v977 = vtanh.pop %v976
    %v978 = vpack.c.bf16 %v977, %v977
    %s979 = scalar_lea.vmem %s3, 72
    %980 = vst [vmem:[%s979] sm:$0xf] %v978
    %s981 = scalar_lea.vmem %s0, 152
    %v982 = vld [vmem:[%s981] sm:$0xff]
    %983 = vmatprep.subr.bf16.mxu0 0
    %984 = vmatpush1.bf16.msra.mxu0 %v75
    %985 = vmatprep.subr.bf16.mxu0 0
    %986 = vmatpush1.bf16.msra.mxu0 %v76
    %987 = vmatprep.subr.bf16.mxu0 0
    %988 = vmatpush1.bf16.msra.mxu0 %v77
    %989 = vmatprep.subr.bf16.mxu0 0
    %990 = vmatpush1.bf16.msra.mxu0 %v78
    %991 = vmatprep.subr.bf16.mxu0 0
    %992 = vmatpush1.bf16.msra.mxu0 %v79
    %993 = vmatprep.subr.bf16.mxu0 0
    %994 = vmatpush1.bf16.msra.mxu0 %v80
    %995 = vmatprep.subr.bf16.mxu0 0
    %996 = vmatpush1.bf16.msra.mxu0 %v81
    %997 = vmatprep.subr.bf16.mxu0 0
    %998 = vmatpush1.bf16.msra.mxu0 %v82
    %999 = vmatprep.subr.bf16.mxu0 0
    %1000 = vmatpush1.bf16.msra.mxu0 0
    %1001 = vmatprep.subr.bf16.mxu0 0
    %1002 = vmatpush1.bf16.msra.mxu0 0
    %1003 = vmatprep.subr.bf16.mxu0 0
    %1004 = vmatpush1.bf16.msra.mxu0 0
    %1005 = vmatprep.subr.bf16.mxu0 0
    %1006 = vmatpush1.bf16.msra.mxu0 0
    %1007 = vmatprep.subr.bf16.mxu0 0
    %1008 = vmatpush1.bf16.msra.mxu0 0
    %1009 = vmatprep.subr.bf16.mxu0 0
    %1010 = vmatpush1.bf16.msra.mxu0 0
    %1011 = vmatprep.subr.bf16.mxu0 0
    %1012 = vmatpush1.bf16.msra.mxu0 0
    %1013 = vmatprep.subr.bf16.mxu0 0
    %1014 = vmatpush1.bf16.msra.mxu0 0
    %1015 = vmatprep.mubr.bf16.mxu0 0
    %1016 = vmatmul.mubr.bf16.gmra.mrb[0].mxu0 %v978
    %v1017 = vpop.f32.mrb[0].mxu0
    %v1018 = vadd.f32 0.0, %v1017
    %v1019 = vpop.f32.mrb[0].mxu0
    %v1020 = vpop.f32.mrb[0].mxu0
    %v1021 = vpop.f32.mrb[0].mxu0
    %1022 = vdwg.mxu0
    %v1023 = vadd.f32 %v982, %v1018
    %v1024 = vtanh.pop %v1023
    %v1025 = vpack.c.bf16 %v1024, %v1024
    %s1026 = scalar_lea.vmem %s3, 76
    %1027 = vst [vmem:[%s1026] sm:$0xf] %v1025
    %s1028 = scalar_lea.vmem %s0, 160
    %v1029 = vld [vmem:[%s1028] sm:$0xff]
    %1030 = vmatprep.subr.bf16.mxu0 0
    %1031 = vmatpush1.bf16.msra.mxu0 %v75
    %1032 = vmatprep.subr.bf16.mxu0 0
    %1033 = vmatpush1.bf16.msra.mxu0 %v76
    %1034 = vmatprep.subr.bf16.mxu0 0
    %1035 = vmatpush1.bf16.msra.mxu0 %v77
    %1036 = vmatprep.subr.bf16.mxu0 0
    %1037 = vmatpush1.bf16.msra.mxu0 %v78
    %1038 = vmatprep.subr.bf16.mxu0 0
    %1039 = vmatpush1.bf16.msra.mxu0 %v79
    %1040 = vmatprep.subr.bf16.mxu0 0
    %1041 = vmatpush1.bf16.msra.mxu0 %v80
    %1042 = vmatprep.subr.bf16.mxu0 0
    %1043 = vmatpush1.bf16.msra.mxu0 %v81
    %1044 = vmatprep.subr.bf16.mxu0 0
    %1045 = vmatpush1.bf16.msra.mxu0 %v82
    %1046 = vmatprep.subr.bf16.mxu0 0
    %1047 = vmatpush1.bf16.msra.mxu0 0
    %1048 = vmatprep.subr.bf16.mxu0 0
    %1049 = vmatpush1.bf16.msra.mxu0 0
    %1050 = vmatprep.subr.bf16.mxu0 0
    %1051 = vmatpush1.bf16.msra.mxu0 0
    %1052 = vmatprep.subr.bf16.mxu0 0
    %1053 = vmatpush1.bf16.msra.mxu0 0
    %1054 = vmatprep.subr.bf16.mxu0 0
    %1055 = vmatpush1.bf16.msra.mxu0 0
    %1056 = vmatprep.subr.bf16.mxu0 0
    %1057 = vmatpush1.bf16.msra.mxu0 0
    %1058 = vmatprep.subr.bf16.mxu0 0
    %1059 = vmatpush1.bf16.msra.mxu0 0
    %1060 = vmatprep.subr.bf16.mxu0 0
    %1061 = vmatpush1.bf16.msra.mxu0 0
    %1062 = vmatprep.mubr.bf16.mxu0 0
    %1063 = vmatmul.mubr.bf16.gmra.mrb[0].mxu0 %v1025
    %v1064 = vpop.f32.mrb[0].mxu0
    %v1065 = vadd.f32 0.0, %v1064
    %v1066 = vpop.f32.mrb[0].mxu0
    %v1067 = vpop.f32.mrb[0].mxu0
    %v1068 = vpop.f32.mrb[0].mxu0
    %1069 = vdwg.mxu0
    %v1070 = vadd.f32 %v1029, %v1065
    %v1071 = vtanh.pop %v1070
    %v1072 = vpack.c.bf16 %v1071, %v1071
    %s1073 = scalar_lea.vmem %s3, 80
    %1074 = vst [vmem:[%s1073] sm:$0xf] %v1072
    %s1075 = scalar_lea.vmem %s0, 168
    %v1076 = vld [vmem:[%s1075] sm:$0xff]
    %1077 = vmatprep.subr.bf16.mxu0 0
    %1078 = vmatpush1.bf16.msra.mxu0 %v75
    %1079 = vmatprep.subr.bf16.mxu0 0
    %1080 = vmatpush1.bf16.msra.mxu0 %v76
    %1081 = vmatprep.subr.bf16.mxu0 0
    %1082 = vmatpush1.bf16.msra.mxu0 %v77
    %1083 = vmatprep.subr.bf16.mxu0 0
    %1084 = vmatpush1.bf16.msra.mxu0 %v78
    %1085 = vmatprep.subr.bf16.mxu0 0
    %1086 = vmatpush1.bf16.msra.mxu0 %v79
    %1087 = vmatprep.subr.bf16.mxu0 0
    %1088 = vmatpush1.bf16.msra.mxu0 %v80
    %1089 = vmatprep.subr.bf16.mxu0 0
    %1090 = vmatpush1.bf16.msra.mxu0 %v81
    %1091 = vmatprep.subr.bf16.mxu0 0
    %1092 = vmatpush1.bf16.msra.mxu0 %v82
    %1093 = vmatprep.subr.bf16.mxu0 0
    %1094 = vmatpush1.bf16.msra.mxu0 0
    %1095 = vmatprep.subr.bf16.mxu0 0
    %1096 = vmatpush1.bf16.msra.mxu0 0
    %1097 = vmatprep.subr.bf16.mxu0 0
    %1098 = vmatpush1.bf16.msra.mxu0 0
    %1099 = vmatprep.subr.bf16.mxu0 0
    %1100 = vmatpush1.bf16.msra.mxu0 0
    %1101 = vmatprep.subr.bf16.mxu0 0
    %1102 = vmatpush1.bf16.msra.mxu0 0
    %1103 = vmatprep.subr.bf16.mxu0 0
    %1104 = vmatpush1.bf16.msra.mxu0 0
    %1105 = vmatprep.subr.bf16.mxu0 0
    %1106 = vmatpush1.bf16.msra.mxu0 0
    %1107 = vmatprep.subr.bf16.mxu0 0
    %1108 = vmatpush1.bf16.msra.mxu0 0
    %1109 = vmatprep.mubr.bf16.mxu0 0
    %1110 = vmatmul.mubr.bf16.gmra.mrb[0].mxu0 %v1072
    %v1111 = vpop.f32.mrb[0].mxu0
    %v1112 = vadd.f32 0.0, %v1111
    %v1113 = vpop.f32.mrb[0].mxu0
    %v1114 = vpop.f32.mrb[0].mxu0
    %v1115 = vpop.f32.mrb[0].mxu0
    %1116 = vdwg.mxu0
    %v1117 = vadd.f32 %v1076, %v1112
    %v1118 = vtanh.pop %v1117
    %v1119 = vpack.c.bf16 %v1118, %v1118
    %s1120 = scalar_lea.vmem %s3, 84
    %1121 = vst [vmem:[%s1120] sm:$0xf] %v1119
    %s1122 = scalar_lea.vmem %s0, 176
    %v1123 = vld [vmem:[%s1122] sm:$0xff]
    %1124 = vmatprep.subr.bf16.mxu0 0
    %1125 = vmatpush1.bf16.msra.mxu0 %v75
    %1126 = vmatprep.subr.bf16.mxu0 0
    %1127 = vmatpush1.bf16.msra.mxu0 %v76
    %1128 = vmatprep.subr.bf16.mxu0 0
    %1129 = vmatpush1.bf16.msra.mxu0 %v77
    %1130 = vmatprep.subr.bf16.mxu0 0
    %1131 = vmatpush1.bf16.msra.mxu0 %v78
    %1132 = vmatprep.subr.bf16.mxu0 0
    %1133 = vmatpush1.bf16.msra.mxu0 %v79
    %1134 = vmatprep.subr.bf16.mxu0 0
    %1135 = vmatpush1.bf16.msra.mxu0 %v80
    %1136 = vmatprep.subr.bf16.mxu0 0
    %1137 = vmatpush1.bf16.msra.mxu0 %v81
    %1138 = vmatprep.subr.bf16.mxu0 0
    %1139 = vmatpush1.bf16.msra.mxu0 %v82
    %1140 = vmatprep.subr.bf16.mxu0 0
    %1141 = vmatpush1.bf16.msra.mxu0 0
    %1142 = vmatprep.subr.bf16.mxu0 0
    %1143 = vmatpush1.bf16.msra.mxu0 0
    %1144 = vmatprep.subr.bf16.mxu0 0
    %1145 = vmatpush1.bf16.msra.mxu0 0
    %1146 = vmatprep.subr.bf16.mxu0 0
    %1147 = vmatpush1.bf16.msra.mxu0 0
    %1148 = vmatprep.subr.bf16.mxu0 0
    %1149 = vmatpush1.bf16.msra.mxu0 0
    %1150 = vmatprep.subr.bf16.mxu0 0
    %1151 = vmatpush1.bf16.msra.mxu0 0
    %1152 = vmatprep.subr.bf16.mxu0 0
    %1153 = vmatpush1.bf16.msra.mxu0 0
    %1154 = vmatprep.subr.bf16.mxu0 0
    %1155 = vmatpush1.bf16.msra.mxu0 0
    %1156 = vmatprep.mubr.bf16.mxu0 0
    %1157 = vmatmul.mubr.bf16.gmra.mrb[0].mxu0 %v1119
    %v1158 = vpop.f32.mrb[0].mxu0
    %v1159 = vadd.f32 0.0, %v1158
    %v1160 = vpop.f32.mrb[0].mxu0
    %v1161 = vpop.f32.mrb[0].mxu0
    %v1162 = vpop.f32.mrb[0].mxu0
    %1163 = vdwg.mxu0
    %v1164 = vadd.f32 %v1123, %v1159
    %v1165 = vtanh.pop %v1164
    %v1166 = vpack.c.bf16 %v1165, %v1165
    %s1167 = scalar_lea.vmem %s3, 88
    %1168 = vst [vmem:[%s1167] sm:$0xf] %v1166
    %s1169 = scalar_lea.vmem %s0, 184
    %v1170 = vld [vmem:[%s1169] sm:$0xff]
    %1171 = vmatprep.subr.bf16.mxu0 0
    %1172 = vmatpush1.bf16.msra.mxu0 %v75
    %1173 = vmatprep.subr.bf16.mxu0 0
    %1174 = vmatpush1.bf16.msra.mxu0 %v76
    %1175 = vmatprep.subr.bf16.mxu0 0
    %1176 = vmatpush1.bf16.msra.mxu0 %v77
    %1177 = vmatprep.subr.bf16.mxu0 0
    %1178 = vmatpush1.bf16.msra.mxu0 %v78
    %1179 = vmatprep.subr.bf16.mxu0 0
    %1180 = vmatpush1.bf16.msra.mxu0 %v79
    %1181 = vmatprep.subr.bf16.mxu0 0
    %1182 = vmatpush1.bf16.msra.mxu0 %v80
    %1183 = vmatprep.subr.bf16.mxu0 0
    %1184 = vmatpush1.bf16.msra.mxu0 %v81
    %1185 = vmatprep.subr.bf16.mxu0 0
    %1186 = vmatpush1.bf16.msra.mxu0 %v82
    %1187 = vmatprep.subr.bf16.mxu0 0
    %1188 = vmatpush1.bf16.msra.mxu0 0
    %1189 = vmatprep.subr.bf16.mxu0 0
    %1190 = vmatpush1.bf16.msra.mxu0 0
    %1191 = vmatprep.subr.bf16.mxu0 0
    %1192 = vmatpush1.bf16.msra.mxu0 0
    %1193 = vmatprep.subr.bf16.mxu0 0
    %1194 = vmatpush1.bf16.msra.mxu0 0
    %1195 = vmatprep.subr.bf16.mxu0 0
    %1196 = vmatpush1.bf16.msra.mxu0 0
    %1197 = vmatprep.subr.bf16.mxu0 0
    %1198 = vmatpush1.bf16.msra.mxu0 0
    %1199 = vmatprep.subr.bf16.mxu0 0
    %1200 = vmatpush1.bf16.msra.mxu0 0
    %1201 = vmatprep.subr.bf16.mxu0 0
    %1202 = vmatpush1.bf16.msra.mxu0 0
    %1203 = vmatprep.mubr.bf16.mxu0 0
    %1204 = vmatmul.mubr.bf16.gmra.mrb[0].mxu0 %v1166
    %v1205 = vpop.f32.mrb[0].mxu0
    %v1206 = vadd.f32 0.0, %v1205
    %v1207 = vpop.f32.mrb[0].mxu0
    %v1208 = vpop.f32.mrb[0].mxu0
    %v1209 = vpop.f32.mrb[0].mxu0
    %1210 = vdwg.mxu0
    %v1211 = vadd.f32 %v1170, %v1206
    %v1212 = vtanh.pop %v1211
    %v1213 = vpack.c.bf16 %v1212, %v1212
    %s1214 = scalar_lea.vmem %s3, 92
    %1215 = vst [vmem:[%s1214] sm:$0xf] %v1213
    %s1216 = scalar_lea.vmem %s0, 192
    %v1217 = vld [vmem:[%s1216] sm:$0xff]
    %1218 = vmatprep.subr.bf16.mxu0 0
    %1219 = vmatpush1.bf16.msra.mxu0 %v75
    %1220 = vmatprep.subr.bf16.mxu0 0
    %1221 = vmatpush1.bf16.msra.mxu0 %v76
    %1222 = vmatprep.subr.bf16.mxu0 0
    %1223 = vmatpush1.bf16.msra.mxu0 %v77
    %1224 = vmatprep.subr.bf16.mxu0 0
    %1225 = vmatpush1.bf16.msra.mxu0 %v78
    %1226 = vmatprep.subr.bf16.mxu0 0
    %1227 = vmatpush1.bf16.msra.mxu0 %v79
    %1228 = vmatprep.subr.bf16.mxu0 0
    %1229 = vmatpush1.bf16.msra.mxu0 %v80
    %1230 = vmatprep.subr.bf16.mxu0 0
    %1231 = vmatpush1.bf16.msra.mxu0 %v81
    %1232 = vmatprep.subr.bf16.mxu0 0
    %1233 = vmatpush1.bf16.msra.mxu0 %v82
    %1234 = vmatprep.subr.bf16.mxu0 0
    %1235 = vmatpush1.bf16.msra.mxu0 0
    %1236 = vmatprep.subr.bf16.mxu0 0
    %1237 = vmatpush1.bf16.msra.mxu0 0
    %1238 = vmatprep.subr.bf16.mxu0 0
    %1239 = vmatpush1.bf16.msra.mxu0 0
    %1240 = vmatprep.subr.bf16.mxu0 0
    %1241 = vmatpush1.bf16.msra.mxu0 0
    %1242 = vmatprep.subr.bf16.mxu0 0
    %1243 = vmatpush1.bf16.msra.mxu0 0
    %1244 = vmatprep.subr.bf16.mxu0 0
    %1245 = vmatpush1.bf16.msra.mxu0 0
    %1246 = vmatprep.subr.bf16.mxu0 0
    %1247 = vmatpush1.bf16.msra.mxu0 0
    %1248 = vmatprep.subr.bf16.mxu0 0
    %1249 = vmatpush1.bf16.msra.mxu0 0
    %1250 = vmatprep.mubr.bf16.mxu0 0
    %1251 = vmatmul.mubr.bf16.gmra.mrb[0].mxu0 %v1213
    %v1252 = vpop.f32.mrb[0].mxu0
    %v1253 = vadd.f32 0.0, %v1252
    %v1254 = vpop.f32.mrb[0].mxu0
    %v1255 = vpop.f32.mrb[0].mxu0
    %v1256 = vpop.f32.mrb[0].mxu0
    %1257 = vdwg.mxu0
    %v1258 = vadd.f32 %v1217, %v1253
    %v1259 = vtanh.pop %v1258
    %v1260 = vpack.c.bf16 %v1259, %v1259
    %s1261 = scalar_lea.vmem %s3, 96
    %1262 = vst [vmem:[%s1261] sm:$0xf] %v1260
    %s1263 = scalar_lea.vmem %s0, 200
    %v1264 = vld [vmem:[%s1263] sm:$0xff]
    %1265 = vmatprep.subr.bf16.mxu0 0
    %1266 = vmatpush1.bf16.msra.mxu0 %v75
    %1267 = vmatprep.subr.bf16.mxu0 0
    %1268 = vmatpush1.bf16.msra.mxu0 %v76
    %1269 = vmatprep.subr.bf16.mxu0 0
    %1270 = vmatpush1.bf16.msra.mxu0 %v77
    %1271 = vmatprep.subr.bf16.mxu0 0
    %1272 = vmatpush1.bf16.msra.mxu0 %v78
    %1273 = vmatprep.subr.bf16.mxu0 0
    %1274 = vmatpush1.bf16.msra.mxu0 %v79
    %1275 = vmatprep.subr.bf16.mxu0 0
    %1276 = vmatpush1.bf16.msra.mxu0 %v80
    %1277 = vmatprep.subr.bf16.mxu0 0
    %1278 = vmatpush1.bf16.msra.mxu0 %v81
    %1279 = vmatprep.subr.bf16.mxu0 0
    %1280 = vmatpush1.bf16.msra.mxu0 %v82
    %1281 = vmatprep.subr.bf16.mxu0 0
    %1282 = vmatpush1.bf16.msra.mxu0 0
    %1283 = vmatprep.subr.bf16.mxu0 0
    %1284 = vmatpush1.bf16.msra.mxu0 0
    %1285 = vmatprep.subr.bf16.mxu0 0
    %1286 = vmatpush1.bf16.msra.mxu0 0
    %1287 = vmatprep.subr.bf16.mxu0 0
    %1288 = vmatpush1.bf16.msra.mxu0 0
    %1289 = vmatprep.subr.bf16.mxu0 0
    %1290 = vmatpush1.bf16.msra.mxu0 0
    %1291 = vmatprep.subr.bf16.mxu0 0
    %1292 = vmatpush1.bf16.msra.mxu0 0
    %1293 = vmatprep.subr.bf16.mxu0 0
    %1294 = vmatpush1.bf16.msra.mxu0 0
    %1295 = vmatprep.subr.bf16.mxu0 0
    %1296 = vmatpush1.bf16.msra.mxu0 0
    %1297 = vmatprep.mubr.bf16.mxu0 0
    %1298 = vmatmul.mubr.bf16.gmra.mrb[0].mxu0 %v1260
    %v1299 = vpop.f32.mrb[0].mxu0
    %v1300 = vadd.f32 0.0, %v1299
    %v1301 = vpop.f32.mrb[0].mxu0
    %v1302 = vpop.f32.mrb[0].mxu0
    %v1303 = vpop.f32.mrb[0].mxu0
    %1304 = vdwg.mxu0
    %v1305 = vadd.f32 %v1264, %v1300
    %v1306 = vtanh.pop %v1305
    %v1307 = vpack.c.bf16 %v1306, %v1306
    %s1308 = scalar_lea.vmem %s3, 100
    %1309 = vst [vmem:[%s1308] sm:$0xf] %v1307
    %s1310 = scalar_lea.vmem %s0, 208
    %v1311 = vld [vmem:[%s1310] sm:$0xff]
    %1312 = vmatprep.subr.bf16.mxu0 0
    %1313 = vmatpush1.bf16.msra.mxu0 %v75
    %1314 = vmatprep.subr.bf16.mxu0 0
    %1315 = vmatpush1.bf16.msra.mxu0 %v76
    %1316 = vmatprep.subr.bf16.mxu0 0
    %1317 = vmatpush1.bf16.msra.mxu0 %v77
    %1318 = vmatprep.subr.bf16.mxu0 0
    %1319 = vmatpush1.bf16.msra.mxu0 %v78
    %1320 = vmatprep.subr.bf16.mxu0 0
    %1321 = vmatpush1.bf16.msra.mxu0 %v79
    %1322 = vmatprep.subr.bf16.mxu0 0
    %1323 = vmatpush1.bf16.msra.mxu0 %v80
    %1324 = vmatprep.subr.bf16.mxu0 0
    %1325 = vmatpush1.bf16.msra.mxu0 %v81
    %1326 = vmatprep.subr.bf16.mxu0 0
    %1327 = vmatpush1.bf16.msra.mxu0 %v82
    %1328 = vmatprep.subr.bf16.mxu0 0
    %1329 = vmatpush1.bf16.msra.mxu0 0
    %1330 = vmatprep.subr.bf16.mxu0 0
    %1331 = vmatpush1.bf16.msra.mxu0 0
    %1332 = vmatprep.subr.bf16.mxu0 0
    %1333 = vmatpush1.bf16.msra.mxu0 0
    %1334 = vmatprep.subr.bf16.mxu0 0
    %1335 = vmatpush1.bf16.msra.mxu0 0
    %1336 = vmatprep.subr.bf16.mxu0 0
    %1337 = vmatpush1.bf16.msra.mxu0 0
    %1338 = vmatprep.subr.bf16.mxu0 0
    %1339 = vmatpush1.bf16.msra.mxu0 0
    %1340 = vmatprep.subr.bf16.mxu0 0
    %1341 = vmatpush1.bf16.msra.mxu0 0
    %1342 = vmatprep.subr.bf16.mxu0 0
    %1343 = vmatpush1.bf16.msra.mxu0 0
    %1344 = vmatprep.mubr.bf16.mxu0 0
    %1345 = vmatmul.mubr.bf16.gmra.mrb[0].mxu0 %v1307
    %v1346 = vpop.f32.mrb[0].mxu0
    %v1347 = vadd.f32 0.0, %v1346
    %v1348 = vpop.f32.mrb[0].mxu0
    %v1349 = vpop.f32.mrb[0].mxu0
    %v1350 = vpop.f32.mrb[0].mxu0
    %1351 = vdwg.mxu0
    %v1352 = vadd.f32 %v1311, %v1347
    %v1353 = vtanh.pop %v1352
    %v1354 = vpack.c.bf16 %v1353, %v1353
    %s1355 = scalar_lea.vmem %s3, 104
    %1356 = vst [vmem:[%s1355] sm:$0xf] %v1354
    %s1357 = scalar_lea.vmem %s0, 216
    %v1358 = vld [vmem:[%s1357] sm:$0xff]
    %1359 = vmatprep.subr.bf16.mxu0 0
    %1360 = vmatpush1.bf16.msra.mxu0 %v75
    %1361 = vmatprep.subr.bf16.mxu0 0
    %1362 = vmatpush1.bf16.msra.mxu0 %v76
    %1363 = vmatprep.subr.bf16.mxu0 0
    %1364 = vmatpush1.bf16.msra.mxu0 %v77
    %1365 = vmatprep.subr.bf16.mxu0 0
    %1366 = vmatpush1.bf16.msra.mxu0 %v78
    %1367 = vmatprep.subr.bf16.mxu0 0
    %1368 = vmatpush1.bf16.msra.mxu0 %v79
    %1369 = vmatprep.subr.bf16.mxu0 0
    %1370 = vmatpush1.bf16.msra.mxu0 %v80
    %1371 = vmatprep.subr.bf16.mxu0 0
    %1372 = vmatpush1.bf16.msra.mxu0 %v81
    %1373 = vmatprep.subr.bf16.mxu0 0
    %1374 = vmatpush1.bf16.msra.mxu0 %v82
    %1375 = vmatprep.subr.bf16.mxu0 0
    %1376 = vmatpush1.bf16.msra.mxu0 0
    %1377 = vmatprep.subr.bf16.mxu0 0
    %1378 = vmatpush1.bf16.msra.mxu0 0
    %1379 = vmatprep.subr.bf16.mxu0 0
    %1380 = vmatpush1.bf16.msra.mxu0 0
    %1381 = vmatprep.subr.bf16.mxu0 0
    %1382 = vmatpush1.bf16.msra.mxu0 0
    %1383 = vmatprep.subr.bf16.mxu0 0
    %1384 = vmatpush1.bf16.msra.mxu0 0
    %1385 = vmatprep.subr.bf16.mxu0 0
    %1386 = vmatpush1.bf16.msra.mxu0 0
    %1387 = vmatprep.subr.bf16.mxu0 0
    %1388 = vmatpush1.bf16.msra.mxu0 0
    %1389 = vmatprep.subr.bf16.mxu0 0
    %1390 = vmatpush1.bf16.msra.mxu0 0
    %1391 = vmatprep.mubr.bf16.mxu0 0
    %1392 = vmatmul.mubr.bf16.gmra.mrb[0].mxu0 %v1354
    %v1393 = vpop.f32.mrb[0].mxu0
    %v1394 = vadd.f32 0.0, %v1393
    %v1395 = vpop.f32.mrb[0].mxu0
    %v1396 = vpop.f32.mrb[0].mxu0
    %v1397 = vpop.f32.mrb[0].mxu0
    %1398 = vdwg.mxu0
    %v1399 = vadd.f32 %v1358, %v1394
    %v1400 = vtanh.pop %v1399
    %v1401 = vpack.c.bf16 %v1400, %v1400
    %s1402 = scalar_lea.vmem %s3, 108
    %1403 = vst [vmem:[%s1402] sm:$0xf] %v1401
    %s1404 = scalar_lea.vmem %s0, 224
    %v1405 = vld [vmem:[%s1404] sm:$0xff]
    %1406 = vmatprep.subr.bf16.mxu0 0
    %1407 = vmatpush1.bf16.msra.mxu0 %v75
    %1408 = vmatprep.subr.bf16.mxu0 0
    %1409 = vmatpush1.bf16.msra.mxu0 %v76
    %1410 = vmatprep.subr.bf16.mxu0 0
    %1411 = vmatpush1.bf16.msra.mxu0 %v77
    %1412 = vmatprep.subr.bf16.mxu0 0
    %1413 = vmatpush1.bf16.msra.mxu0 %v78
    %1414 = vmatprep.subr.bf16.mxu0 0
    %1415 = vmatpush1.bf16.msra.mxu0 %v79
    %1416 = vmatprep.subr.bf16.mxu0 0
    %1417 = vmatpush1.bf16.msra.mxu0 %v80
    %1418 = vmatprep.subr.bf16.mxu0 0
    %1419 = vmatpush1.bf16.msra.mxu0 %v81
    %1420 = vmatprep.subr.bf16.mxu0 0
    %1421 = vmatpush1.bf16.msra.mxu0 %v82
    %1422 = vmatprep.subr.bf16.mxu0 0
    %1423 = vmatpush1.bf16.msra.mxu0 0
    %1424 = vmatprep.subr.bf16.mxu0 0
    %1425 = vmatpush1.bf16.msra.mxu0 0
    %1426 = vmatprep.subr.bf16.mxu0 0
    %1427 = vmatpush1.bf16.msra.mxu0 0
    %1428 = vmatprep.subr.bf16.mxu0 0
    %1429 = vmatpush1.bf16.msra.mxu0 0
    %1430 = vmatprep.subr.bf16.mxu0 0
    %1431 = vmatpush1.bf16.msra.mxu0 0
    %1432 = vmatprep.subr.bf16.mxu0 0
    %1433 = vmatpush1.bf16.msra.mxu0 0
    %1434 = vmatprep.subr.bf16.mxu0 0
    %1435 = vmatpush1.bf16.msra.mxu0 0
    %1436 = vmatprep.subr.bf16.mxu0 0
    %1437 = vmatpush1.bf16.msra.mxu0 0
    %1438 = vmatprep.mubr.bf16.mxu0 0
    %1439 = vmatmul.mubr.bf16.gmra.mrb[0].mxu0 %v1401
    %v1440 = vpop.f32.mrb[0].mxu0
    %v1441 = vadd.f32 0.0, %v1440
    %v1442 = vpop.f32.mrb[0].mxu0
    %v1443 = vpop.f32.mrb[0].mxu0
    %v1444 = vpop.f32.mrb[0].mxu0
    %1445 = vdwg.mxu0
    %v1446 = vadd.f32 %v1405, %v1441
    %v1447 = vtanh.pop %v1446
    %v1448 = vpack.c.bf16 %v1447, %v1447
    %s1449 = scalar_lea.vmem %s3, 112
    %1450 = vst [vmem:[%s1449] sm:$0xf] %v1448
    %s1451 = scalar_lea.vmem %s0, 232
    %v1452 = vld [vmem:[%s1451] sm:$0xff]
    %1453 = vmatprep.subr.bf16.mxu0 0
    %1454 = vmatpush1.bf16.msra.mxu0 %v75
    %1455 = vmatprep.subr.bf16.mxu0 0
    %1456 = vmatpush1.bf16.msra.mxu0 %v76
    %1457 = vmatprep.subr.bf16.mxu0 0
    %1458 = vmatpush1.bf16.msra.mxu0 %v77
    %1459 = vmatprep.subr.bf16.mxu0 0
    %1460 = vmatpush1.bf16.msra.mxu0 %v78
    %1461 = vmatprep.subr.bf16.mxu0 0
    %1462 = vmatpush1.bf16.msra.mxu0 %v79
    %1463 = vmatprep.subr.bf16.mxu0 0
    %1464 = vmatpush1.bf16.msra.mxu0 %v80
    %1465 = vmatprep.subr.bf16.mxu0 0
    %1466 = vmatpush1.bf16.msra.mxu0 %v81
    %1467 = vmatprep.subr.bf16.mxu0 0
    %1468 = vmatpush1.bf16.msra.mxu0 %v82
    %1469 = vmatprep.subr.bf16.mxu0 0
    %1470 = vmatpush1.bf16.msra.mxu0 0
    %1471 = vmatprep.subr.bf16.mxu0 0
    %1472 = vmatpush1.bf16.msra.mxu0 0
    %1473 = vmatprep.subr.bf16.mxu0 0
    %1474 = vmatpush1.bf16.msra.mxu0 0
    %1475 = vmatprep.subr.bf16.mxu0 0
    %1476 = vmatpush1.bf16.msra.mxu0 0
    %1477 = vmatprep.subr.bf16.mxu0 0
    %1478 = vmatpush1.bf16.msra.mxu0 0
    %1479 = vmatprep.subr.bf16.mxu0 0
    %1480 = vmatpush1.bf16.msra.mxu0 0
    %1481 = vmatprep.subr.bf16.mxu0 0
    %1482 = vmatpush1.bf16.msra.mxu0 0
    %1483 = vmatprep.subr.bf16.mxu0 0
    %1484 = vmatpush1.bf16.msra.mxu0 0
    %1485 = vmatprep.mubr.bf16.mxu0 0
    %1486 = vmatmul.mubr.bf16.gmra.mrb[0].mxu0 %v1448
    %v1487 = vpop.f32.mrb[0].mxu0
    %v1488 = vadd.f32 0.0, %v1487
    %v1489 = vpop.f32.mrb[0].mxu0
    %v1490 = vpop.f32.mrb[0].mxu0
    %v1491 = vpop.f32.mrb[0].mxu0
    %1492 = vdwg.mxu0
    %v1493 = vadd.f32 %v1452, %v1488
    %v1494 = vtanh.pop %v1493
    %v1495 = vpack.c.bf16 %v1494, %v1494
    %s1496 = scalar_lea.vmem %s3, 116
    %1497 = vst [vmem:[%s1496] sm:$0xf] %v1495
    %s1498 = scalar_lea.vmem %s0, 240
    %v1499 = vld [vmem:[%s1498] sm:$0xff]
    %1500 = vmatprep.subr.bf16.mxu0 0
    %1501 = vmatpush1.bf16.msra.mxu0 %v75
    %1502 = vmatprep.subr.bf16.mxu0 0
    %1503 = vmatpush1.bf16.msra.mxu0 %v76
    %1504 = vmatprep.subr.bf16.mxu0 0
    %1505 = vmatpush1.bf16.msra.mxu0 %v77
    %1506 = vmatprep.subr.bf16.mxu0 0
    %1507 = vmatpush1.bf16.msra.mxu0 %v78
    %1508 = vmatprep.subr.bf16.mxu0 0
    %1509 = vmatpush1.bf16.msra.mxu0 %v79
    %1510 = vmatprep.subr.bf16.mxu0 0
    %1511 = vmatpush1.bf16.msra.mxu0 %v80
    %1512 = vmatprep.subr.bf16.mxu0 0
    %1513 = vmatpush1.bf16.msra.mxu0 %v81
    %1514 = vmatprep.subr.bf16.mxu0 0
    %1515 = vmatpush1.bf16.msra.mxu0 %v82
    %1516 = vmatprep.subr.bf16.mxu0 0
    %1517 = vmatpush1.bf16.msra.mxu0 0
    %1518 = vmatprep.subr.bf16.mxu0 0
    %1519 = vmatpush1.bf16.msra.mxu0 0
    %1520 = vmatprep.subr.bf16.mxu0 0
    %1521 = vmatpush1.bf16.msra.mxu0 0
    %1522 = vmatprep.subr.bf16.mxu0 0
    %1523 = vmatpush1.bf16.msra.mxu0 0
    %1524 = vmatprep.subr.bf16.mxu0 0
    %1525 = vmatpush1.bf16.msra.mxu0 0
    %1526 = vmatprep.subr.bf16.mxu0 0
    %1527 = vmatpush1.bf16.msra.mxu0 0
    %1528 = vmatprep.subr.bf16.mxu0 0
    %1529 = vmatpush1.bf16.msra.mxu0 0
    %1530 = vmatprep.subr.bf16.mxu0 0
    %1531 = vmatpush1.bf16.msra.mxu0 0
    %1532 = vmatprep.mubr.bf16.mxu0 0
    %1533 = vmatmul.mubr.bf16.gmra.mrb[0].mxu0 %v1495
    %v1534 = vpop.f32.mrb[0].mxu0
    %v1535 = vadd.f32 0.0, %v1534
    %v1536 = vpop.f32.mrb[0].mxu0
    %v1537 = vpop.f32.mrb[0].mxu0
    %v1538 = vpop.f32.mrb[0].mxu0
    %1539 = vdwg.mxu0
    %v1540 = vadd.f32 %v1499, %v1535
    %v1541 = vtanh.pop %v1540
    %v1542 = vpack.c.bf16 %v1541, %v1541
    %s1543 = scalar_lea.vmem %s3, 120
    %1544 = vst [vmem:[%s1543] sm:$0xf] %v1542
    %s1545 = scalar_lea.vmem %s0, 248
    %v1546 = vld [vmem:[%s1545] sm:$0xff]
    %1547 = vmatprep.subr.bf16.mxu0 0
    %1548 = vmatpush1.bf16.msra.mxu0 %v75
    %1549 = vmatprep.subr.bf16.mxu0 0
    %1550 = vmatpush1.bf16.msra.mxu0 %v76
    %1551 = vmatprep.subr.bf16.mxu0 0
    %1552 = vmatpush1.bf16.msra.mxu0 %v77
    %1553 = vmatprep.subr.bf16.mxu0 0
    %1554 = vmatpush1.bf16.msra.mxu0 %v78
    %1555 = vmatprep.subr.bf16.mxu0 0
    %1556 = vmatpush1.bf16.msra.mxu0 %v79
    %1557 = vmatprep.subr.bf16.mxu0 0
    %1558 = vmatpush1.bf16.msra.mxu0 %v80
    %1559 = vmatprep.subr.bf16.mxu0 0
    %1560 = vmatpush1.bf16.msra.mxu0 %v81
    %1561 = vmatprep.subr.bf16.mxu0 0
    %1562 = vmatpush1.bf16.msra.mxu0 %v82
    %1563 = vmatprep.subr.bf16.mxu0 0
    %1564 = vmatpush1.bf16.msra.mxu0 0
    %1565 = vmatprep.subr.bf16.mxu0 0
    %1566 = vmatpush1.bf16.msra.mxu0 0
    %1567 = vmatprep.subr.bf16.mxu0 0
    %1568 = vmatpush1.bf16.msra.mxu0 0
    %1569 = vmatprep.subr.bf16.mxu0 0
    %1570 = vmatpush1.bf16.msra.mxu0 0
    %1571 = vmatprep.subr.bf16.mxu0 0
    %1572 = vmatpush1.bf16.msra.mxu0 0
    %1573 = vmatprep.subr.bf16.mxu0 0
    %1574 = vmatpush1.bf16.msra.mxu0 0
    %1575 = vmatprep.subr.bf16.mxu0 0
    %1576 = vmatpush1.bf16.msra.mxu0 0
    %1577 = vmatprep.subr.bf16.mxu0 0
    %1578 = vmatpush1.bf16.msra.mxu0 0
    %1579 = vmatprep.mubr.bf16.mxu0 0
    %1580 = vmatmul.mubr.bf16.gmra.mrb[0].mxu0 %v1542
    %v1581 = vpop.f32.mrb[0].mxu0
    %v1582 = vadd.f32 0.0, %v1581
    %v1583 = vpop.f32.mrb[0].mxu0
    %v1584 = vpop.f32.mrb[0].mxu0
    %v1585 = vpop.f32.mrb[0].mxu0
    %1586 = vdwg.mxu0
    %v1587 = vadd.f32 %v1546, %v1582
    %v1588 = vtanh.pop %v1587
    %v1589 = vpack.c.bf16 %v1588, %v1588
    %s1590 = scalar_lea.vmem %s3, 124
    %1591 = vst [vmem:[%s1590] sm:$0xf] %v1589
    %1592 = vst [vmem:[#allocation2] sm:$0xff] %v1588
    // Predicated region
    $region18: #{rnn_model_forward.4} parent=1 // pred_check
      _
    $region19: #{rnn_model_forward.4} parent=1 // pred_check_branch
      %1594 = sbr.rel (0) target = $region21
    $region20: #{rnn_model_forward.4} parent=1 // pred_region
      _
    $region21: #{rnn_model_forward.4} parent=1 // pred_fallthru
      _
    // Predicated region
    $region22: #{rnn_model_forward.4} parent=1 // pred_check
      _
    $region23: #{rnn_model_forward.4} parent=1 // pred_check_branch
      %1596 = sbr.rel (0) target = $region25
    $region24: #{rnn_model_forward.4} parent=1 // pred_region
      %s1598 = ssub.s32 128, 128
      %1599 = vsyncadd [#allocation3], %s1598
      %s1601 = sshll.u32 [#allocation2], 4
      %s1602 = int_to_ptr.vmem [resolvable:$true] %s1601
      %1604 = dma.vmem_to_hbm [thread:$0]  %s1602, 128, %s4, [#allocation3]
    $region25: #{rnn_model_forward.4} parent=1 // pred_fallthru
      _
    // Predicated region
    $region26: #{rnn_model_forward.4} parent=1 // pred_check
      _
    $region27: #{rnn_model_forward.4} parent=1 // pred_check_branch
      %1606 = sbr.rel (0) target = $region29
    $region28: #{rnn_model_forward.4} parent=1 // pred_region
      _
    $region29: #{rnn_model_forward.4} parent=1 // pred_fallthru
      _
    // Predicated region
    $region30: #{rnn_model_forward.4} parent=1 // pred_check
      _
    $region31: #{rnn_model_forward.4} parent=1 // pred_check_branch
      %1608 = sbr.rel (0) target = $region33
    $region32: #{rnn_model_forward.4} parent=1 // pred_region
      %1609 = dma.done [#allocation3], 128
    $region33: #{rnn_model_forward.4} parent=1 // pred_fallthru
      _
    %1610 = vsyncpa [#allocation3], 1

</llo_original>
